<compile_context>
chip_gen: v7x
topology: tpu7x:2x2x1
jax: 0.10.0
libtpu: 0.0.40
codegen_flags: <defaults>
</compile_context>

<pallas_src>
import numpy as np
import jax
import jax.numpy as jnp
from jax import lax
from jax.experimental import pallas as pl
from jax.experimental.pallas import tpu as pltpu


# ----------------------------------------------------------------------------
# Host-built (trace-time numpy) constants.
# ----------------------------------------------------------------------------
def _conv_masks(n, h, w):
    """(9, n*h*w) f32 masks removing row/image wrap-around of each 3x3 tap."""
    r = np.arange(n * h * w)
    wi = r % w
    hi = (r // w) % h
    masks = np.zeros((9, n * h * w), np.float32)
    t = 0
    for oy in (-1, 0, 1):
        for ox in (-1, 0, 1):
            valid = (hi + oy >= 0) & (hi + oy < h) & (wi + ox >= 0) & (wi + ox < w)
            masks[t] = valid.astype(np.float32)
            t += 1
    return masks


def _pool_sel_per_image(h, w):
    """(h*w, h*w//4) one-hot picking the top-left lane of every 2x2 window."""
    hh, wh = h // 2, w // 2
    sel = np.zeros((h * w, hh * wh), np.float32)
    for ph in range(hh):
        for pw in range(wh):
            sel[(2 * ph) * w + 2 * pw, ph * wh + pw] = 1.0
    return sel


def _pool_sel_global(n, h, w):
    """(n*h*w, n*h*w//4) block-diagonal one-hot pooling compaction."""
    hh, wh = h // 2, w // 2
    sel = np.zeros((n * h * w, n * hh * wh), np.float32)
    for ni in range(n):
        for ph in range(hh):
            for pw in range(wh):
                sel[ni * h * w + (2 * ph) * w + 2 * pw,
                    ni * hh * wh + ph * wh + pw] = 1.0
    return sel


def _head_matrices(way, shot, n_query, sp):
    """B: emb @ B gives (query_q - mean_s support_{c,s}) for every (q, c) pair.
       SR: per-pair group-sum over the sp spatial positions."""
    n_support = way * shot
    n_total = n_support + n_query
    npair = n_query * way
    b_mat = np.zeros((n_total * sp, npair * sp), np.float32)
    sr = np.zeros((npair * sp, npair), np.float32)
    for qi in range(n_query):
        for c in range(way):
            p = qi * way + c
            for j in range(sp):
                b_mat[(n_support + qi) * sp + j, p * sp + j] += 1.0
                for s in range(shot):
                    b_mat[(c * shot + s) * sp + j, p * sp + j] -= 1.0 / shot
                sr[p * sp + j, p] = 1.0
    return b_mat, sr


# ----------------------------------------------------------------------------
# Fused forward
# ----------------------------------------------------------------------------
def prototypical_forward(support_images, query_images, params):
    # support_images: (way, shot, 3, H, W), query_images: (nq, 1, 3, H, W) NCHW
    way, shot = support_images.shape[0], support_images.shape[1]
    s = support_images.reshape((-1,) + support_images.shape[2:])
    q = query_images.reshape((-1,) + query_images.shape[2:])
    x = jnp.concatenate([s, q], axis=0).astype(jnp.float32)      # (N, 3, H, W)
    n_total, c_in, h0, w0 = x.shape
    n_query = q.shape[0]
    n_support = way * shot
    assert h0 % 8 == 0 and w0 % 8 == 0, "block3 backbone needs H, W divisible by 8"

    # (N, C, H, W) -> (C, N*H*W): channels on sublanes, flat spatial on lanes.
    x_flat = jnp.transpose(x, (1, 0, 2, 3)).reshape(c_in, n_total * h0 * w0)

    # Per-block static metadata + host-built constants.
    blocks, w_mats, gammas, betas, masks, sels = [], [], [], [], [], []
    scratch_shapes = []
    hh, ww, cin = h0, w0, c_in
    for bi, (w_conv, _b_conv, gamma, beta) in enumerate(params):
        cout = w_conv.shape[3]
        r = n_total * hh * ww
        pad = ww + 1
        blocks.append(dict(H=hh, W=ww, Cin=cin, Cout=cout, R=r, PAD=pad))
        # (3, 3, Cin, Cout) -> (Cout, 9*Cin); K index = tap*Cin + cin matches the
        # im2col staging row order in the kernel.
        w_mats.append(jnp.transpose(w_conv.reshape(9, cin, cout), (2, 0, 1))
                      .reshape(cout, 9 * cin))
        gammas.append(gamma.reshape(cout, 1).astype(jnp.float32))
        betas.append(beta.reshape(cout, 1).astype(jnp.float32))
        # NOTE: _b_conv (conv bias) is intentionally unused: training-mode BN
        # subtracts the per-channel batch mean, so the bias cancels exactly.
        masks.append(jnp.asarray(_conv_masks(n_total, hh, ww)))
        if bi == 0:
            sels.append(jnp.asarray(_pool_sel_per_image(hh, ww)))      # (HW, HW/4)
        else:
            sels.append(jnp.asarray(_pool_sel_global(n_total, hh, ww)))
        scratch_shapes.append(pltpu.VMEM((cin, r + 2 * pad), jnp.float32))  # xpad
        scratch_shapes.append(pltpu.VMEM((9 * cin, r), jnp.float32))        # im2col
        scratch_shapes.append(pltpu.VMEM((cout, r + pad), jnp.float32))     # ypad
        hh, ww, cin = hh // 2, ww // 2, cout

    nb = len(blocks)
    sp = hh * ww                     # spatial positions per image in the embedding
    npair = n_query * way
    hw1 = blocks[0]['H'] * blocks[0]['W']
    c1out = blocks[0]['Cout']
    # block-1 per-image pool compaction staging buffers
    scratch_shapes.append(pltpu.VMEM((n_total * c1out, hw1), jnp.float32))        # pstage
    scratch_shapes.append(pltpu.VMEM((c1out, n_total * (hw1 // 4)), jnp.float32))  # xnext

    head_b_np, head_sr_np = _head_matrices(way, shot, n_query, sp)
    head_b = jnp.asarray(head_b_np)
    head_sr = jnp.asarray(head_sr_np)

    def kernel(*refs):
        x_ref = refs[0]
        w_refs = refs[1:1 + nb]
        g_refs = refs[1 + nb:1 + 2 * nb]
        bt_refs = refs[1 + 2 * nb:1 + 3 * nb]
        m_refs = refs[1 + 3 * nb:1 + 4 * nb]
        s_refs = refs[1 + 4 * nb:1 + 5 * nb]
        hb_ref = refs[1 + 5 * nb]
        hr_ref = refs[2 + 5 * nb]
        out_ref = refs[3 + 5 * nb]
        scratch = refs[4 + 5 * nb:]
        pstage = scratch[3 * nb]
        xnext = scratch[3 * nb + 1]

        def conv_bn_relu(x_val, blk, xpad, col, w_ref, m_ref, g_ref, beta_ref):
            H, W = blk['H'], blk['W']
            Cin, Cout = blk['Cin'], blk['Cout']
            R, PAD = blk['R'], blk['PAD']

            # Zero-padded copy so every tap shift is a plain (unaligned) slice.
            xpad[:, :PAD] = jnp.zeros((Cin, PAD), jnp.float32)
            xpad[:, PAD:PAD + R] = x_val
            xpad[:, PAD + R:] = jnp.zeros((Cin, PAD), jnp.float32)

            # im2col staging: 9 shifted slices -> (9*Cin, R).  The wrap mask is
            # folded into the staging store (each slice touched exactly once);
            # the center tap (t=4) needs neither shift nor mask.
            t = 0
            for oy in (-1, 0, 1):
                for ox in (-1, 0, 1):
                    if oy == 0 and ox == 0:
                        col[t * Cin:(t + 1) * Cin, :] = x_val
                    else:
                        off = oy * W + ox
                        xs = xpad[:, PAD + off:PAD + off + R]       # (Cin, R)
                        col[t * Cin:(t + 1) * Cin, :] = xs * m_ref[t:t + 1, :]
                    t += 1
            # TODO(synk): if XLU relayouts from the 8 unaligned tap slices ever
            # dominate, share the +-1 lane rotates across row offsets (pltpu.roll).

            # Single MXU matmul per block, K = 9*Cin (no per-tap accumulation).
            acc = jnp.dot(w_ref[...], col[...],
                          preferred_element_type=jnp.float32)       # (Cout, R)

            # BatchNorm (training-mode batch stats, biased var) + ReLU.
            # `centered` is computed once and reused for variance + normalize.
            mean = jnp.sum(acc, axis=1, keepdims=True) * (1.0 / R)
            centered = acc - mean
            var = jnp.sum(centered * centered, axis=1, keepdims=True) * (1.0 / R)
            scale = g_ref[...] * lax.rsqrt(var + 1e-5)
            return jnp.maximum(centered * scale + beta_ref[...], 0.0)

        def pool_max(y, blk, ypad):
            W, R, PAD = blk['W'], blk['R'], blk['PAD']
            ypad[:, :R] = y
            ypad[:, R:] = jnp.zeros((y.shape[0], PAD), jnp.float32)
            return jnp.maximum(jnp.maximum(y, ypad[:, 1:1 + R]),
                               jnp.maximum(ypad[:, W:W + R],
                                           ypad[:, W + 1:W + 1 + R]))

        # ---- block 1: per-image pool compaction (tiny (HW, HW/4) one-hot) ----
        blk = blocks[0]
        y = conv_bn_relu(x_ref[...], blk, scratch[0], scratch[1],
                         w_refs[0], m_refs[0], g_refs[0], bt_refs[0])
        m = pool_max(y, blk, scratch[2])                            # (C1, N*HW)
        HW = blk['H'] * blk['W']
        HWq = HW // 4
        C1 = blk['Cout']
        for n in range(n_total):                                    # aligned copies
            pstage[n * C1:(n + 1) * C1, :] = m[:, n * HW:(n + 1) * HW]
        pooled = jnp.dot(pstage[...], s_refs[0][...],
                         preferred_element_type=jnp.float32)        # (N*C1, HW/4)
        for n in range(n_total):
            xnext[:, n * HWq:(n + 1) * HWq] = pooled[n * C1:(n + 1) * C1, :]
        x_val = xnext[...]                                          # (C1, N*HW/4)

        # ---- blocks 2..nb: global block-diagonal compaction (small matrices) --
        for i in range(1, nb):
            blk = blocks[i]
            y = conv_bn_relu(x_val, blk, scratch[3 * i], scratch[3 * i + 1],
                             w_refs[i], m_refs[i], g_refs[i], bt_refs[i])
            m = pool_max(y, blk, scratch[3 * i + 2])
            x_val = jnp.dot(m, s_refs[i][...],
                            preferred_element_type=jnp.float32)     # (Cout, R/4)

        # ---- prototype mean + euclidean distances (torch.cdist, p=2), ---------
        # ---- fully vectorized: 2 tiny matmuls + 1 reduce + 1 store ------------
        emb = x_val                                                 # (C, N*sp)
        diff = jnp.dot(emb, hb_ref[...],
                       preferred_element_type=jnp.float32)          # (C, nq*way*sp)
        sq = diff * diff
        d2 = jnp.sum(jnp.dot(sq, hr_ref[...],
                             preferred_element_type=jnp.float32),
                     axis=0, keepdims=True)                         # (1, nq*way)
        out_ref[...] = jnp.sqrt(d2)

    out = pl.pallas_call(
        kernel,
        out_shape=jax.ShapeDtypeStruct((1, npair), jnp.float32),
        scratch_shapes=scratch_shapes,
        compiler_params=pltpu.CompilerParams(
            vmem_limit_bytes=32 * 1024 * 1024),
    )(x_flat, *w_mats, *gammas, *betas, *masks, *sels, head_b, head_sr)

    # lane p = q*way + c  ->  (n_query, way), matching torch's distances.view(...)
    return out.reshape(n_query, way)


# ----------------------------------------------------------------------------
if __name__ == "__main__":
    key = jax.random.PRNGKey(0)
    way, shot, n_query = 2, 2, 3
    c_in, h, w = 3, 16, 16
    channel_size = 8          # params['embedding_extractor.channel_size']
    # backbone 'block3': three (Conv3x3 -> BN -> ReLU -> MaxPool2) blocks.

    keys = jax.random.split(key, 5)
    params = []
    cin = c_in
    for i in range(3):
        kw, kb = jax.random.split(keys[i])
        wgt = jax.random.normal(kw, (3, 3, cin, channel_size), jnp.float32) * 0.1
        bias = jax.random.normal(kb, (channel_size,), jnp.float32) * 0.05
        gamma = jnp.ones((channel_size,), jnp.float32)    # BatchNorm weight init
        beta = jnp.zeros((channel_size,), jnp.float32)    # BatchNorm bias init
        params.append((wgt, bias, gamma, beta))
        cin = channel_size

    support_images = jax.random.normal(
        keys[3], (way, shot, c_in, h, w), jnp.float32)
    query_images = jax.random.normal(
        keys[4], (n_query, 1, c_in, h, w), jnp.float32)

    fwd = jax.jit(prototypical_forward)
    dist = fwd(support_images, query_images, params)
    dist = jax.block_until_ready(dist)
    assert dist.shape == (n_query, way), dist.shape
    assert bool(jnp.all(jnp.isfinite(dist)))
    print("KERNEL_OK")
</pallas_src>

<mosaic_0001>
module attributes {stable_mosaic.version = 11 : i64} {
  func.func @kernel(%arg0: memref<3x1792xf32, #tpu.memory_space<vmem>>, %arg1: memref<8x27xf32, #tpu.memory_space<vmem>>, %arg2: memref<8x72xf32, #tpu.memory_space<vmem>>, %arg3: memref<8x72xf32, #tpu.memory_space<vmem>>, %arg4: memref<8x1xf32, #tpu.memory_space<vmem>>, %arg5: memref<8x1xf32, #tpu.memory_space<vmem>>, %arg6: memref<8x1xf32, #tpu.memory_space<vmem>>, %arg7: memref<8x1xf32, #tpu.memory_space<vmem>>, %arg8: memref<8x1xf32, #tpu.memory_space<vmem>>, %arg9: memref<8x1xf32, #tpu.memory_space<vmem>>, %arg10: memref<9x1792xf32, #tpu.memory_space<vmem>>, %arg11: memref<9x448xf32, #tpu.memory_space<vmem>>, %arg12: memref<9x112xf32, #tpu.memory_space<vmem>>, %arg13: memref<256x64xf32, #tpu.memory_space<vmem>>, %arg14: memref<448x112xf32, #tpu.memory_space<vmem>>, %arg15: memref<112x28xf32, #tpu.memory_space<vmem>>, %arg16: memref<28x24xf32, #tpu.memory_space<vmem>>, %arg17: memref<24x6xf32, #tpu.memory_space<vmem>>, %arg18: memref<1x6xf32, #tpu.memory_space<vmem>>, %arg19: memref<3x1826xf32, #tpu.memory_space<vmem>>, %arg20: memref<27x1792xf32, #tpu.memory_space<vmem>>, %arg21: memref<8x1809xf32, #tpu.memory_space<vmem>>, %arg22: memref<8x466xf32, #tpu.memory_space<vmem>>, %arg23: memref<72x448xf32, #tpu.memory_space<vmem>>, %arg24: memref<8x457xf32, #tpu.memory_space<vmem>>, %arg25: memref<8x122xf32, #tpu.memory_space<vmem>>, %arg26: memref<72x112xf32, #tpu.memory_space<vmem>>, %arg27: memref<8x117xf32, #tpu.memory_space<vmem>>, %arg28: memref<56x256xf32, #tpu.memory_space<vmem>>, %arg29: memref<8x448xf32, #tpu.memory_space<vmem>>) attributes {dimension_semantics = [], scalar_prefetch = 0 : i64, scratch_operands = 11 : i64, tpu.core_type = #tpu.core_type<tc>} {
    %c0 = arith.constant 0 : index
    %c0_0 = arith.constant 0 : index
    %0 = vector.load %arg0[%c0, %c0_0] : memref<3x1792xf32, #tpu.memory_space<vmem>>, vector<3x1792xf32>
    %cst = arith.constant 0.000000e+00 : f32
    %1 = vector.broadcast %cst : f32 to vector<3x17xf32>
    %c0_1 = arith.constant 0 : index
    %c0_2 = arith.constant 0 : index
    %2 = vector.load %arg19[%c0_1, %c0_2] : memref<3x1826xf32, #tpu.memory_space<vmem>>, vector<3x17xf32>
    tpu.vector_store %arg19[%c0_1, %c0_2], %1 {strides = array<i32>} : memref<3x1826xf32, #tpu.memory_space<vmem>>, vector<3x17xf32>,
    %c0_3 = arith.constant 0 : index
    %c17 = arith.constant 17 : index
    %3 = vector.load %arg19[%c0_3, %c17] : memref<3x1826xf32, #tpu.memory_space<vmem>>, vector<3x1792xf32>
    tpu.vector_store %arg19[%c0_3, %c17], %0 {strides = array<i32>} : memref<3x1826xf32, #tpu.memory_space<vmem>>, vector<3x1792xf32>,
    %cst_4 = arith.constant 0.000000e+00 : f32
    %4 = vector.broadcast %cst_4 : f32 to vector<3x17xf32>
    %c0_5 = arith.constant 0 : index
    %c1809 = arith.constant 1809 : index
    %5 = vector.load %arg19[%c0_5, %c1809] : memref<3x1826xf32, #tpu.memory_space<vmem>>, vector<3x17xf32>
    tpu.vector_store %arg19[%c0_5, %c1809], %4 {strides = array<i32>} : memref<3x1826xf32, #tpu.memory_space<vmem>>, vector<3x17xf32>,
    %c0_6 = arith.constant 0 : index
    %c0_7 = arith.constant 0 : index
    %6 = vector.load %arg19[%c0_6, %c0_7] : memref<3x1826xf32, #tpu.memory_space<vmem>>, vector<3x1792xf32>
    %c0_8 = arith.constant 0 : index
    %c0_9 = arith.constant 0 : index
    %7 = vector.load %arg10[%c0_8, %c0_9] : memref<9x1792xf32, #tpu.memory_space<vmem>>, vector<1x1792xf32>
    %8 = vector.broadcast %7 : vector<1x1792xf32> to vector<3x1792xf32>
    %9 = arith.mulf %6, %8 : vector<3x1792xf32>
    %c0_10 = arith.constant 0 : index
    %c0_11 = arith.constant 0 : index
    %10 = vector.load %arg20[%c0_10, %c0_11] : memref<27x1792xf32, #tpu.memory_space<vmem>>, vector<3x1792xf32>
    tpu.vector_store %arg20[%c0_10, %c0_11], %9 {strides = array<i32>} : memref<27x1792xf32, #tpu.memory_space<vmem>>, vector<3x1792xf32>,
    %c0_12 = arith.constant 0 : index
    %c1 = arith.constant 1 : index
    %11 = vector.load %arg19[%c0_12, %c1] : memref<3x1826xf32, #tpu.memory_space<vmem>>, vector<3x1792xf32>
    %c1_13 = arith.constant 1 : index
    %c0_14 = arith.constant 0 : index
    %12 = vector.load %arg10[%c1_13, %c0_14] : memref<9x1792xf32, #tpu.memory_space<vmem>>, vector<1x1792xf32>
    %13 = vector.broadcast %12 : vector<1x1792xf32> to vector<3x1792xf32>
    %14 = arith.mulf %11, %13 : vector<3x1792xf32>
    %c3 = arith.constant 3 : index
    %c0_15 = arith.constant 0 : index
    %15 = vector.load %arg20[%c3, %c0_15] : memref<27x1792xf32, #tpu.memory_space<vmem>>, vector<3x1792xf32>
    tpu.vector_store %arg20[%c3, %c0_15], %14 {strides = array<i32>} : memref<27x1792xf32, #tpu.memory_space<vmem>>, vector<3x1792xf32>,
    %c0_16 = arith.constant 0 : index
    %c2 = arith.constant 2 : index
    %16 = vector.load %arg19[%c0_16, %c2] : memref<3x1826xf32, #tpu.memory_space<vmem>>, vector<3x1792xf32>
    %c2_17 = arith.constant 2 : index
    %c0_18 = arith.constant 0 : index
    %17 = vector.load %arg10[%c2_17, %c0_18] : memref<9x1792xf32, #tpu.memory_space<vmem>>, vector<1x1792xf32>
    %18 = vector.broadcast %17 : vector<1x1792xf32> to vector<3x1792xf32>
    %19 = arith.mulf %16, %18 : vector<3x1792xf32>
    %c6 = arith.constant 6 : index
    %c0_19 = arith.constant 0 : index
    %20 = vector.load %arg20[%c6, %c0_19] : memref<27x1792xf32, #tpu.memory_space<vmem>>, vector<3x1792xf32>
    tpu.vector_store %arg20[%c6, %c0_19], %19 {strides = array<i32>} : memref<27x1792xf32, #tpu.memory_space<vmem>>, vector<3x1792xf32>,
    %c0_20 = arith.constant 0 : index
    %c16 = arith.constant 16 : index
    %21 = vector.load %arg19[%c0_20, %c16] : memref<3x1826xf32, #tpu.memory_space<vmem>>, vector<3x1792xf32>
    %c3_21 = arith.constant 3 : index
    %c0_22 = arith.constant 0 : index
    %22 = vector.load %arg10[%c3_21, %c0_22] : memref<9x1792xf32, #tpu.memory_space<vmem>>, vector<1x1792xf32>
    %23 = vector.broadcast %22 : vector<1x1792xf32> to vector<3x1792xf32>
    %24 = arith.mulf %21, %23 : vector<3x1792xf32>
    %c9 = arith.constant 9 : index
    %c0_23 = arith.constant 0 : index
    %25 = vector.load %arg20[%c9, %c0_23] : memref<27x1792xf32, #tpu.memory_space<vmem>>, vector<3x1792xf32>
    tpu.vector_store %arg20[%c9, %c0_23], %24 {strides = array<i32>} : memref<27x1792xf32, #tpu.memory_space<vmem>>, vector<3x1792xf32>,
    %c12 = arith.constant 12 : index
    %c0_24 = arith.constant 0 : index
    %26 = vector.load %arg20[%c12, %c0_24] : memref<27x1792xf32, #tpu.memory_space<vmem>>, vector<3x1792xf32>
    tpu.vector_store %arg20[%c12, %c0_24], %0 {strides = array<i32>} : memref<27x1792xf32, #tpu.memory_space<vmem>>, vector<3x1792xf32>,
    %c0_25 = arith.constant 0 : index
    %c18 = arith.constant 18 : index
    %27 = vector.load %arg19[%c0_25, %c18] : memref<3x1826xf32, #tpu.memory_space<vmem>>, vector<3x1792xf32>
    %c5 = arith.constant 5 : index
    %c0_26 = arith.constant 0 : index
    %28 = vector.load %arg10[%c5, %c0_26] : memref<9x1792xf32, #tpu.memory_space<vmem>>, vector<1x1792xf32>
    %29 = vector.broadcast %28 : vector<1x1792xf32> to vector<3x1792xf32>
    %30 = arith.mulf %27, %29 : vector<3x1792xf32>
    %c15 = arith.constant 15 : index
    %c0_27 = arith.constant 0 : index
    %31 = vector.load %arg20[%c15, %c0_27] : memref<27x1792xf32, #tpu.memory_space<vmem>>, vector<3x1792xf32>
    tpu.vector_store %arg20[%c15, %c0_27], %30 {strides = array<i32>} : memref<27x1792xf32, #tpu.memory_space<vmem>>, vector<3x1792xf32>,
    %c0_28 = arith.constant 0 : index
    %c32 = arith.constant 32 : index
    %32 = vector.load %arg19[%c0_28, %c32] : memref<3x1826xf32, #tpu.memory_space<vmem>>, vector<3x1792xf32>
    %c6_29 = arith.constant 6 : index
    %c0_30 = arith.constant 0 : index
    %33 = vector.load %arg10[%c6_29, %c0_30] : memref<9x1792xf32, #tpu.memory_space<vmem>>, vector<1x1792xf32>
    %34 = vector.broadcast %33 : vector<1x1792xf32> to vector<3x1792xf32>
    %35 = arith.mulf %32, %34 : vector<3x1792xf32>
    %c18_31 = arith.constant 18 : index
    %c0_32 = arith.constant 0 : index
    %36 = vector.load %arg20[%c18_31, %c0_32] : memref<27x1792xf32, #tpu.memory_space<vmem>>, vector<3x1792xf32>
    tpu.vector_store %arg20[%c18_31, %c0_32], %35 {strides = array<i32>} : memref<27x1792xf32, #tpu.memory_space<vmem>>, vector<3x1792xf32>,
    %c0_33 = arith.constant 0 : index
    %c33 = arith.constant 33 : index
    %37 = vector.load %arg19[%c0_33, %c33] : memref<3x1826xf32, #tpu.memory_space<vmem>>, vector<3x1792xf32>
    %c7 = arith.constant 7 : index
    %c0_34 = arith.constant 0 : index
    %38 = vector.load %arg10[%c7, %c0_34] : memref<9x1792xf32, #tpu.memory_space<vmem>>, vector<1x1792xf32>
    %39 = vector.broadcast %38 : vector<1x1792xf32> to vector<3x1792xf32>
    %40 = arith.mulf %37, %39 : vector<3x1792xf32>
    %c21 = arith.constant 21 : index
    %c0_35 = arith.constant 0 : index
    %41 = vector.load %arg20[%c21, %c0_35] : memref<27x1792xf32, #tpu.memory_space<vmem>>, vector<3x1792xf32>
    tpu.vector_store %arg20[%c21, %c0_35], %40 {strides = array<i32>} : memref<27x1792xf32, #tpu.memory_space<vmem>>, vector<3x1792xf32>,
    %c0_36 = arith.constant 0 : index
    %c34 = arith.constant 34 : index
    %42 = vector.load %arg19[%c0_36, %c34] : memref<3x1826xf32, #tpu.memory_space<vmem>>, vector<3x1792xf32>
    %c8 = arith.constant 8 : index
    %c0_37 = arith.constant 0 : index
    %43 = vector.load %arg10[%c8, %c0_37] : memref<9x1792xf32, #tpu.memory_space<vmem>>, vector<1x1792xf32>
    %44 = vector.broadcast %43 : vector<1x1792xf32> to vector<3x1792xf32>
    %45 = arith.mulf %42, %44 : vector<3x1792xf32>
    %c24 = arith.constant 24 : index
    %c0_38 = arith.constant 0 : index
    %46 = vector.load %arg20[%c24, %c0_38] : memref<27x1792xf32, #tpu.memory_space<vmem>>, vector<3x1792xf32>
    tpu.vector_store %arg20[%c24, %c0_38], %45 {strides = array<i32>} : memref<27x1792xf32, #tpu.memory_space<vmem>>, vector<3x1792xf32>,
    %c0_39 = arith.constant 0 : index
    %c0_40 = arith.constant 0 : index
    %47 = vector.load %arg1[%c0_39, %c0_40] : memref<8x27xf32, #tpu.memory_space<vmem>>, vector<8x27xf32>
    %c0_41 = arith.constant 0 : index
    %c0_42 = arith.constant 0 : index
    %48 = vector.load %arg20[%c0_41, %c0_42] : memref<27x1792xf32, #tpu.memory_space<vmem>>, vector<27x1792xf32>
    %cst_43 = arith.constant dense<0.000000e+00> : vector<8x1792xf32>
    %49 = tpu.matmul %47, %48, %cst_43 {dimension_numbers = #tpu.dot_dimension_numbers<[1], [0], [0], [1], [0, 0, 1, 1], [], []>} : vector<8x27xf32>, vector<27x1792xf32>, vector<8x1792xf32> -> vector<8x1792xf32>
    %cst_44 = arith.constant dense<0.000000e+00> : vector<8xf32>
    %50 = vector.multi_reduction <add>, %49, %cst_44 [1] : vector<8x1792xf32> to vector<8xf32>
    %51 = vector.shape_cast %50 : vector<8xf32> to vector<8x1xf32>
    %cst_45 = arith.constant 5.58035739E-4 : f32
    %52 = vector.broadcast %cst_45 : f32 to vector<8x1xf32>
    %53 = arith.mulf %51, %52 : vector<8x1xf32>
    %54 = vector.broadcast %53 : vector<8x1xf32> to vector<8x1792xf32>
    %55 = arith.subf %49, %54 : vector<8x1792xf32>
    %56 = arith.mulf %55, %55 : vector<8x1792xf32>
    %cst_46 = arith.constant dense<0.000000e+00> : vector<8xf32>
    %57 = vector.multi_reduction <add>, %56, %cst_46 [1] : vector<8x1792xf32> to vector<8xf32>
    %58 = vector.shape_cast %57 : vector<8xf32> to vector<8x1xf32>
    %cst_47 = arith.constant 5.58035739E-4 : f32
    %59 = vector.broadcast %cst_47 : f32 to vector<8x1xf32>
    %60 = arith.mulf %58, %59 : vector<8x1xf32>
    %c0_48 = arith.constant 0 : index
    %c0_49 = arith.constant 0 : index
    %61 = vector.load %arg4[%c0_48, %c0_49] : memref<8x1xf32, #tpu.memory_space<vmem>>, vector<8x1xf32>
    %cst_50 = arith.constant 9.99999974E-6 : f32
    %62 = vector.broadcast %cst_50 : f32 to vector<8x1xf32>
    %63 = arith.addf %60, %62 : vector<8x1xf32>
    %64 = math.rsqrt %63 : vector<8x1xf32>
    %65 = arith.mulf %61, %64 : vector<8x1xf32>
    %66 = vector.broadcast %65 : vector<8x1xf32> to vector<8x1792xf32>
    %67 = arith.mulf %55, %66 : vector<8x1792xf32>
    %c0_51 = arith.constant 0 : index
    %c0_52 = arith.constant 0 : index
    %68 = vector.load %arg7[%c0_51, %c0_52] : memref<8x1xf32, #tpu.memory_space<vmem>>, vector<8x1xf32>
    %69 = vector.broadcast %68 : vector<8x1xf32> to vector<8x1792xf32>
    %70 = arith.addf %67, %69 : vector<8x1792xf32>
    %cst_53 = arith.constant 0.000000e+00 : f32
    %71 = vector.broadcast %cst_53 : f32 to vector<8x1792xf32>
    %72 = arith.maximumf %70, %71 : vector<8x1792xf32>
    %c0_54 = arith.constant 0 : index
    %c0_55 = arith.constant 0 : index
    %73 = vector.load %arg21[%c0_54, %c0_55] : memref<8x1809xf32, #tpu.memory_space<vmem>>, vector<8x1792xf32>
    tpu.vector_store %arg21[%c0_54, %c0_55], %72 {strides = array<i32>} : memref<8x1809xf32, #tpu.memory_space<vmem>>, vector<8x1792xf32>,
    %cst_56 = arith.constant 0.000000e+00 : f32
    %74 = vector.broadcast %cst_56 : f32 to vector<8x17xf32>
    %c0_57 = arith.constant 0 : index
    %c1792 = arith.constant 1792 : index
    %75 = vector.load %arg21[%c0_57, %c1792] : memref<8x1809xf32, #tpu.memory_space<vmem>>, vector<8x17xf32>
    tpu.vector_store %arg21[%c0_57, %c1792], %74 {strides = array<i32>} : memref<8x1809xf32, #tpu.memory_space<vmem>>, vector<8x17xf32>,
    %c0_58 = arith.constant 0 : index
    %c1_59 = arith.constant 1 : index
    %76 = vector.load %arg21[%c0_58, %c1_59] : memref<8x1809xf32, #tpu.memory_space<vmem>>, vector<8x1792xf32>
    %77 = arith.maximumf %72, %76 : vector<8x1792xf32>
    %c0_60 = arith.constant 0 : index
    %c16_61 = arith.constant 16 : index
    %78 = vector.load %arg21[%c0_60, %c16_61] : memref<8x1809xf32, #tpu.memory_space<vmem>>, vector<8x1792xf32>
    %c0_62 = arith.constant 0 : index
    %c17_63 = arith.constant 17 : index
    %79 = vector.load %arg21[%c0_62, %c17_63] : memref<8x1809xf32, #tpu.memory_space<vmem>>, vector<8x1792xf32>
    %80 = arith.maximumf %78, %79 : vector<8x1792xf32>
    %81 = arith.maximumf %77, %80 : vector<8x1792xf32>
    %82 = vector.extract_strided_slice %81 {offsets = [0, 0], sizes = [8, 256], strides = [1, 1]} : vector<8x1792xf32> to vector<8x256xf32>
    %c0_64 = arith.constant 0 : index
    %c0_65 = arith.constant 0 : index
    %83 = vector.load %arg28[%c0_64, %c0_65] : memref<56x256xf32, #tpu.memory_space<vmem>>, vector<8x256xf32>
    tpu.vector_store %arg28[%c0_64, %c0_65], %82 {strides = array<i32>} : memref<56x256xf32, #tpu.memory_space<vmem>>, vector<8x256xf32>,
    %84 = vector.extract_strided_slice %81 {offsets = [0, 256], sizes = [8, 256], strides = [1, 1]} : vector<8x1792xf32> to vector<8x256xf32>
    %c8_66 = arith.constant 8 : index
    %c0_67 = arith.constant 0 : index
    %85 = vector.load %arg28[%c8_66, %c0_67] : memref<56x256xf32, #tpu.memory_space<vmem>>, vector<8x256xf32>
    tpu.vector_store %arg28[%c8_66, %c0_67], %84 {strides = array<i32>} : memref<56x256xf32, #tpu.memory_space<vmem>>, vector<8x256xf32>,
    %86 = vector.extract_strided_slice %81 {offsets = [0, 512], sizes = [8, 256], strides = [1, 1]} : vector<8x1792xf32> to vector<8x256xf32>
    %c16_68 = arith.constant 16 : index
    %c0_69 = arith.constant 0 : index
    %87 = vector.load %arg28[%c16_68, %c0_69] : memref<56x256xf32, #tpu.memory_space<vmem>>, vector<8x256xf32>
    tpu.vector_store %arg28[%c16_68, %c0_69], %86 {strides = array<i32>} : memref<56x256xf32, #tpu.memory_space<vmem>>, vector<8x256xf32>,
    %88 = vector.extract_strided_slice %81 {offsets = [0, 768], sizes = [8, 256], strides = [1, 1]} : vector<8x1792xf32> to vector<8x256xf32>
    %c24_70 = arith.constant 24 : index
    %c0_71 = arith.constant 0 : index
    %89 = vector.load %arg28[%c24_70, %c0_71] : memref<56x256xf32, #tpu.memory_space<vmem>>, vector<8x256xf32>
    tpu.vector_store %arg28[%c24_70, %c0_71], %88 {strides = array<i32>} : memref<56x256xf32, #tpu.memory_space<vmem>>, vector<8x256xf32>,
    %90 = vector.extract_strided_slice %81 {offsets = [0, 1024], sizes = [8, 256], strides = [1, 1]} : vector<8x1792xf32> to vector<8x256xf32>
    %c32_72 = arith.constant 32 : index
    %c0_73 = arith.constant 0 : index
    %91 = vector.load %arg28[%c32_72, %c0_73] : memref<56x256xf32, #tpu.memory_space<vmem>>, vector<8x256xf32>
    tpu.vector_store %arg28[%c32_72, %c0_73], %90 {strides = array<i32>} : memref<56x256xf32, #tpu.memory_space<vmem>>, vector<8x256xf32>,
    %92 = vector.extract_strided_slice %81 {offsets = [0, 1280], sizes = [8, 256], strides = [1, 1]} : vector<8x1792xf32> to vector<8x256xf32>
    %c40 = arith.constant 40 : index
    %c0_74 = arith.constant 0 : index
    %93 = vector.load %arg28[%c40, %c0_74] : memref<56x256xf32, #tpu.memory_space<vmem>>, vector<8x256xf32>
    tpu.vector_store %arg28[%c40, %c0_74], %92 {strides = array<i32>} : memref<56x256xf32, #tpu.memory_space<vmem>>, vector<8x256xf32>,
    %94 = vector.extract_strided_slice %81 {offsets = [0, 1536], sizes = [8, 256], strides = [1, 1]} : vector<8x1792xf32> to vector<8x256xf32>
    %c48 = arith.constant 48 : index
    %c0_75 = arith.constant 0 : index
    %95 = vector.load %arg28[%c48, %c0_75] : memref<56x256xf32, #tpu.memory_space<vmem>>, vector<8x256xf32>
    tpu.vector_store %arg28[%c48, %c0_75], %94 {strides = array<i32>} : memref<56x256xf32, #tpu.memory_space<vmem>>, vector<8x256xf32>,
    %c0_76 = arith.constant 0 : index
    %c0_77 = arith.constant 0 : index
    %96 = vector.load %arg28[%c0_76, %c0_77] : memref<56x256xf32, #tpu.memory_space<vmem>>, vector<56x256xf32>
    %c0_78 = arith.constant 0 : index
    %c0_79 = arith.constant 0 : index
    %97 = vector.load %arg13[%c0_78, %c0_79] : memref<256x64xf32, #tpu.memory_space<vmem>>, vector<256x64xf32>
    %cst_80 = arith.constant dense<0.000000e+00> : vector<56x64xf32>
    %98 = tpu.matmul %96, %97, %cst_80 {dimension_numbers = #tpu.dot_dimension_numbers<[1], [0], [0], [1], [0, 0, 1, 1], [], []>} : vector<56x256xf32>, vector<256x64xf32>, vector<56x64xf32> -> vector<56x64xf32>
    %99 = vector.extract_strided_slice %98 {offsets = [0, 0], sizes = [8, 64], strides = [1, 1]} : vector<56x64xf32> to vector<8x64xf32>
    %c0_81 = arith.constant 0 : index
    %c0_82 = arith.constant 0 : index
    %100 = vector.load %arg29[%c0_81, %c0_82] : memref<8x448xf32, #tpu.memory_space<vmem>>, vector<8x64xf32>
    tpu.vector_store %arg29[%c0_81, %c0_82], %99 {strides = array<i32>} : memref<8x448xf32, #tpu.memory_space<vmem>>, vector<8x64xf32>,
    %101 = vector.extract_strided_slice %98 {offsets = [8, 0], sizes = [8, 64], strides = [1, 1]} : vector<56x64xf32> to vector<8x64xf32>
    %c0_83 = arith.constant 0 : index
    %c64 = arith.constant 64 : index
    %102 = vector.load %arg29[%c0_83, %c64] : memref<8x448xf32, #tpu.memory_space<vmem>>, vector<8x64xf32>
    tpu.vector_store %arg29[%c0_83, %c64], %101 {strides = array<i32>} : memref<8x448xf32, #tpu.memory_space<vmem>>, vector<8x64xf32>,
    %103 = vector.extract_strided_slice %98 {offsets = [16, 0], sizes = [8, 64], strides = [1, 1]} : vector<56x64xf32> to vector<8x64xf32>
    %c0_84 = arith.constant 0 : index
    %c128 = arith.constant 128 : index
    %104 = vector.load %arg29[%c0_84, %c128] : memref<8x448xf32, #tpu.memory_space<vmem>>, vector<8x64xf32>
    tpu.vector_store %arg29[%c0_84, %c128], %103 {strides = array<i32>} : memref<8x448xf32, #tpu.memory_space<vmem>>, vector<8x64xf32>,
    %105 = vector.extract_strided_slice %98 {offsets = [24, 0], sizes = [8, 64], strides = [1, 1]} : vector<56x64xf32> to vector<8x64xf32>
    %c0_85 = arith.constant 0 : index
    %c192 = arith.constant 192 : index
    %106 = vector.load %arg29[%c0_85, %c192] : memref<8x448xf32, #tpu.memory_space<vmem>>, vector<8x64xf32>
    tpu.vector_store %arg29[%c0_85, %c192], %105 {strides = array<i32>} : memref<8x448xf32, #tpu.memory_space<vmem>>, vector<8x64xf32>,
    %107 = vector.extract_strided_slice %98 {offsets = [32, 0], sizes = [8, 64], strides = [1, 1]} : vector<56x64xf32> to vector<8x64xf32>
    %c0_86 = arith.constant 0 : index
    %c256 = arith.constant 256 : index
    %108 = vector.load %arg29[%c0_86, %c256] : memref<8x448xf32, #tpu.memory_space<vmem>>, vector<8x64xf32>
    tpu.vector_store %arg29[%c0_86, %c256], %107 {strides = array<i32>} : memref<8x448xf32, #tpu.memory_space<vmem>>, vector<8x64xf32>,
    %109 = vector.extract_strided_slice %98 {offsets = [40, 0], sizes = [8, 64], strides = [1, 1]} : vector<56x64xf32> to vector<8x64xf32>
    %c0_87 = arith.constant 0 : index
    %c320 = arith.constant 320 : index
    %110 = vector.load %arg29[%c0_87, %c320] : memref<8x448xf32, #tpu.memory_space<vmem>>, vector<8x64xf32>
    tpu.vector_store %arg29[%c0_87, %c320], %109 {strides = array<i32>} : memref<8x448xf32, #tpu.memory_space<vmem>>, vector<8x64xf32>,
    %111 = vector.extract_strided_slice %98 {offsets = [48, 0], sizes = [8, 64], strides = [1, 1]} : vector<56x64xf32> to vector<8x64xf32>
    %c0_88 = arith.constant 0 : index
    %c384 = arith.constant 384 : index
    %112 = vector.load %arg29[%c0_88, %c384] : memref<8x448xf32, #tpu.memory_space<vmem>>, vector<8x64xf32>
    tpu.vector_store %arg29[%c0_88, %c384], %111 {strides = array<i32>} : memref<8x448xf32, #tpu.memory_space<vmem>>, vector<8x64xf32>,
    %c0_89 = arith.constant 0 : index
    %c0_90 = arith.constant 0 : index
    %113 = vector.load %arg29[%c0_89, %c0_90] : memref<8x448xf32, #tpu.memory_space<vmem>>, vector<8x448xf32>
    %cst_91 = arith.constant 0.000000e+00 : f32
    %114 = vector.broadcast %cst_91 : f32 to vector<8x9xf32>
    %c0_92 = arith.constant 0 : index
    %c0_93 = arith.constant 0 : index
    %115 = vector.load %arg22[%c0_92, %c0_93] : memref<8x466xf32, #tpu.memory_space<vmem>>, vector<8x9xf32>
    tpu.vector_store %arg22[%c0_92, %c0_93], %114 {strides = array<i32>} : memref<8x466xf32, #tpu.memory_space<vmem>>, vector<8x9xf32>,
    %c0_94 = arith.constant 0 : index
    %c9_95 = arith.constant 9 : index
    %116 = vector.load %arg22[%c0_94, %c9_95] : memref<8x466xf32, #tpu.memory_space<vmem>>, vector<8x448xf32>
    tpu.vector_store %arg22[%c0_94, %c9_95], %113 {strides = array<i32>} : memref<8x466xf32, #tpu.memory_space<vmem>>, vector<8x448xf32>,
    %cst_96 = arith.constant 0.000000e+00 : f32
    %117 = vector.broadcast %cst_96 : f32 to vector<8x9xf32>
    %c0_97 = arith.constant 0 : index
    %c457 = arith.constant 457 : index
    %118 = vector.load %arg22[%c0_97, %c457] : memref<8x466xf32, #tpu.memory_space<vmem>>, vector<8x9xf32>
    tpu.vector_store %arg22[%c0_97, %c457], %117 {strides = array<i32>} : memref<8x466xf32, #tpu.memory_space<vmem>>, vector<8x9xf32>,
    %c0_98 = arith.constant 0 : index
    %c0_99 = arith.constant 0 : index
    %119 = vector.load %arg22[%c0_98, %c0_99] : memref<8x466xf32, #tpu.memory_space<vmem>>, vector<8x448xf32>
    %c0_100 = arith.constant 0 : index
    %c0_101 = arith.constant 0 : index
    %120 = vector.load %arg11[%c0_100, %c0_101] : memref<9x448xf32, #tpu.memory_space<vmem>>, vector<1x448xf32>
    %121 = vector.broadcast %120 : vector<1x448xf32> to vector<8x448xf32>
    %122 = arith.mulf %119, %121 : vector<8x448xf32>
    %c0_102 = arith.constant 0 : index
    %c0_103 = arith.constant 0 : index
    %123 = vector.load %arg23[%c0_102, %c0_103] : memref<72x448xf32, #tpu.memory_space<vmem>>, vector<8x448xf32>
    tpu.vector_store %arg23[%c0_102, %c0_103], %122 {strides = array<i32>} : memref<72x448xf32, #tpu.memory_space<vmem>>, vector<8x448xf32>,
    %c0_104 = arith.constant 0 : index
    %c1_105 = arith.constant 1 : index
    %124 = vector.load %arg22[%c0_104, %c1_105] : memref<8x466xf32, #tpu.memory_space<vmem>>, vector<8x448xf32>
    %c1_106 = arith.constant 1 : index
    %c0_107 = arith.constant 0 : index
    %125 = vector.load %arg11[%c1_106, %c0_107] : memref<9x448xf32, #tpu.memory_space<vmem>>, vector<1x448xf32>
    %126 = vector.broadcast %125 : vector<1x448xf32> to vector<8x448xf32>
    %127 = arith.mulf %124, %126 : vector<8x448xf32>
    %c8_108 = arith.constant 8 : index
    %c0_109 = arith.constant 0 : index
    %128 = vector.load %arg23[%c8_108, %c0_109] : memref<72x448xf32, #tpu.memory_space<vmem>>, vector<8x448xf32>
    tpu.vector_store %arg23[%c8_108, %c0_109], %127 {strides = array<i32>} : memref<72x448xf32, #tpu.memory_space<vmem>>, vector<8x448xf32>,
    %c0_110 = arith.constant 0 : index
    %c2_111 = arith.constant 2 : index
    %129 = vector.load %arg22[%c0_110, %c2_111] : memref<8x466xf32, #tpu.memory_space<vmem>>, vector<8x448xf32>
    %c2_112 = arith.constant 2 : index
    %c0_113 = arith.constant 0 : index
    %130 = vector.load %arg11[%c2_112, %c0_113] : memref<9x448xf32, #tpu.memory_space<vmem>>, vector<1x448xf32>
    %131 = vector.broadcast %130 : vector<1x448xf32> to vector<8x448xf32>
    %132 = arith.mulf %129, %131 : vector<8x448xf32>
    %c16_114 = arith.constant 16 : index
    %c0_115 = arith.constant 0 : index
    %133 = vector.load %arg23[%c16_114, %c0_115] : memref<72x448xf32, #tpu.memory_space<vmem>>, vector<8x448xf32>
    tpu.vector_store %arg23[%c16_114, %c0_115], %132 {strides = array<i32>} : memref<72x448xf32, #tpu.memory_space<vmem>>, vector<8x448xf32>,
    %c0_116 = arith.constant 0 : index
    %c8_117 = arith.constant 8 : index
    %134 = vector.load %arg22[%c0_116, %c8_117] : memref<8x466xf32, #tpu.memory_space<vmem>>, vector<8x448xf32>
    %c3_118 = arith.constant 3 : index
    %c0_119 = arith.constant 0 : index
    %135 = vector.load %arg11[%c3_118, %c0_119] : memref<9x448xf32, #tpu.memory_space<vmem>>, vector<1x448xf32>
    %136 = vector.broadcast %135 : vector<1x448xf32> to vector<8x448xf32>
    %137 = arith.mulf %134, %136 : vector<8x448xf32>
    %c24_120 = arith.constant 24 : index
    %c0_121 = arith.constant 0 : index
    %138 = vector.load %arg23[%c24_120, %c0_121] : memref<72x448xf32, #tpu.memory_space<vmem>>, vector<8x448xf32>
    tpu.vector_store %arg23[%c24_120, %c0_121], %137 {strides = array<i32>} : memref<72x448xf32, #tpu.memory_space<vmem>>, vector<8x448xf32>,
    %c32_122 = arith.constant 32 : index
    %c0_123 = arith.constant 0 : index
    %139 = vector.load %arg23[%c32_122, %c0_123] : memref<72x448xf32, #tpu.memory_space<vmem>>, vector<8x448xf32>
    tpu.vector_store %arg23[%c32_122, %c0_123], %113 {strides = array<i32>} : memref<72x448xf32, #tpu.memory_space<vmem>>, vector<8x448xf32>,
    %c0_124 = arith.constant 0 : index
    %c10 = arith.constant 10 : index
    %140 = vector.load %arg22[%c0_124, %c10] : memref<8x466xf32, #tpu.memory_space<vmem>>, vector<8x448xf32>
    %c5_125 = arith.constant 5 : index
    %c0_126 = arith.constant 0 : index
    %141 = vector.load %arg11[%c5_125, %c0_126] : memref<9x448xf32, #tpu.memory_space<vmem>>, vector<1x448xf32>
    %142 = vector.broadcast %141 : vector<1x448xf32> to vector<8x448xf32>
    %143 = arith.mulf %140, %142 : vector<8x448xf32>
    %c40_127 = arith.constant 40 : index
    %c0_128 = arith.constant 0 : index
    %144 = vector.load %arg23[%c40_127, %c0_128] : memref<72x448xf32, #tpu.memory_space<vmem>>, vector<8x448xf32>
    tpu.vector_store %arg23[%c40_127, %c0_128], %143 {strides = array<i32>} : memref<72x448xf32, #tpu.memory_space<vmem>>, vector<8x448xf32>,
    %c0_129 = arith.constant 0 : index
    %c16_130 = arith.constant 16 : index
    %145 = vector.load %arg22[%c0_129, %c16_130] : memref<8x466xf32, #tpu.memory_space<vmem>>, vector<8x448xf32>
    %c6_131 = arith.constant 6 : index
    %c0_132 = arith.constant 0 : index
    %146 = vector.load %arg11[%c6_131, %c0_132] : memref<9x448xf32, #tpu.memory_space<vmem>>, vector<1x448xf32>
    %147 = vector.broadcast %146 : vector<1x448xf32> to vector<8x448xf32>
    %148 = arith.mulf %145, %147 : vector<8x448xf32>
    %c48_133 = arith.constant 48 : index
    %c0_134 = arith.constant 0 : index
    %149 = vector.load %arg23[%c48_133, %c0_134] : memref<72x448xf32, #tpu.memory_space<vmem>>, vector<8x448xf32>
    tpu.vector_store %arg23[%c48_133, %c0_134], %148 {strides = array<i32>} : memref<72x448xf32, #tpu.memory_space<vmem>>, vector<8x448xf32>,
    %c0_135 = arith.constant 0 : index
    %c17_136 = arith.constant 17 : index
    %150 = vector.load %arg22[%c0_135, %c17_136] : memref<8x466xf32, #tpu.memory_space<vmem>>, vector<8x448xf32>
    %c7_137 = arith.constant 7 : index
    %c0_138 = arith.constant 0 : index
    %151 = vector.load %arg11[%c7_137, %c0_138] : memref<9x448xf32, #tpu.memory_space<vmem>>, vector<1x448xf32>
    %152 = vector.broadcast %151 : vector<1x448xf32> to vector<8x448xf32>
    %153 = arith.mulf %150, %152 : vector<8x448xf32>
    %c56 = arith.constant 56 : index
    %c0_139 = arith.constant 0 : index
    %154 = vector.load %arg23[%c56, %c0_139] : memref<72x448xf32, #tpu.memory_space<vmem>>, vector<8x448xf32>
    tpu.vector_store %arg23[%c56, %c0_139], %153 {strides = array<i32>} : memref<72x448xf32, #tpu.memory_space<vmem>>, vector<8x448xf32>,
    %c0_140 = arith.constant 0 : index
    %c18_141 = arith.constant 18 : index
    %155 = vector.load %arg22[%c0_140, %c18_141] : memref<8x466xf32, #tpu.memory_space<vmem>>, vector<8x448xf32>
    %c8_142 = arith.constant 8 : index
    %c0_143 = arith.constant 0 : index
    %156 = vector.load %arg11[%c8_142, %c0_143] : memref<9x448xf32, #tpu.memory_space<vmem>>, vector<1x448xf32>
    %157 = vector.broadcast %156 : vector<1x448xf32> to vector<8x448xf32>
    %158 = arith.mulf %155, %157 : vector<8x448xf32>
    %c64_144 = arith.constant 64 : index
    %c0_145 = arith.constant 0 : index
    %159 = vector.load %arg23[%c64_144, %c0_145] : memref<72x448xf32, #tpu.memory_space<vmem>>, vector<8x448xf32>
    tpu.vector_store %arg23[%c64_144, %c0_145], %158 {strides = array<i32>} : memref<72x448xf32, #tpu.memory_space<vmem>>, vector<8x448xf32>,
    %c0_146 = arith.constant 0 : index
    %c0_147 = arith.constant 0 : index
    %160 = vector.load %arg2[%c0_146, %c0_147] : memref<8x72xf32, #tpu.memory_space<vmem>>, vector<8x72xf32>
    %c0_148 = arith.constant 0 : index
    %c0_149 = arith.constant 0 : index
    %161 = vector.load %arg23[%c0_148, %c0_149] : memref<72x448xf32, #tpu.memory_space<vmem>>, vector<72x448xf32>
    %cst_150 = arith.constant dense<0.000000e+00> : vector<8x448xf32>
    %162 = tpu.matmul %160, %161, %cst_150 {dimension_numbers = #tpu.dot_dimension_numbers<[1], [0], [0], [1], [0, 0, 1, 1], [], []>} : vector<8x72xf32>, vector<72x448xf32>, vector<8x448xf32> -> vector<8x448xf32>
    %cst_151 = arith.constant dense<0.000000e+00> : vector<8xf32>
    %163 = vector.multi_reduction <add>, %162, %cst_151 [1] : vector<8x448xf32> to vector<8xf32>
    %164 = vector.shape_cast %163 : vector<8xf32> to vector<8x1xf32>
    %cst_152 = arith.constant 0.00223214296 : f32
    %165 = vector.broadcast %cst_152 : f32 to vector<8x1xf32>
    %166 = arith.mulf %164, %165 : vector<8x1xf32>
    %167 = vector.broadcast %166 : vector<8x1xf32> to vector<8x448xf32>
    %168 = arith.subf %162, %167 : vector<8x448xf32>
    %169 = arith.mulf %168, %168 : vector<8x448xf32>
    %cst_153 = arith.constant dense<0.000000e+00> : vector<8xf32>
    %170 = vector.multi_reduction <add>, %169, %cst_153 [1] : vector<8x448xf32> to vector<8xf32>
    %171 = vector.shape_cast %170 : vector<8xf32> to vector<8x1xf32>
    %cst_154 = arith.constant 0.00223214296 : f32
    %172 = vector.broadcast %cst_154 : f32 to vector<8x1xf32>
    %173 = arith.mulf %171, %172 : vector<8x1xf32>
    %c0_155 = arith.constant 0 : index
    %c0_156 = arith.constant 0 : index
    %174 = vector.load %arg5[%c0_155, %c0_156] : memref<8x1xf32, #tpu.memory_space<vmem>>, vector<8x1xf32>
    %cst_157 = arith.constant 9.99999974E-6 : f32
    %175 = vector.broadcast %cst_157 : f32 to vector<8x1xf32>
    %176 = arith.addf %173, %175 : vector<8x1xf32>
    %177 = math.rsqrt %176 : vector<8x1xf32>
    %178 = arith.mulf %174, %177 : vector<8x1xf32>
    %179 = vector.broadcast %178 : vector<8x1xf32> to vector<8x448xf32>
    %180 = arith.mulf %168, %179 : vector<8x448xf32>
    %c0_158 = arith.constant 0 : index
    %c0_159 = arith.constant 0 : index
    %181 = vector.load %arg8[%c0_158, %c0_159] : memref<8x1xf32, #tpu.memory_space<vmem>>, vector<8x1xf32>
    %182 = vector.broadcast %181 : vector<8x1xf32> to vector<8x448xf32>
    %183 = arith.addf %180, %182 : vector<8x448xf32>
    %cst_160 = arith.constant 0.000000e+00 : f32
    %184 = vector.broadcast %cst_160 : f32 to vector<8x448xf32>
    %185 = arith.maximumf %183, %184 : vector<8x448xf32>
    %c0_161 = arith.constant 0 : index
    %c0_162 = arith.constant 0 : index
    %186 = vector.load %arg24[%c0_161, %c0_162] : memref<8x457xf32, #tpu.memory_space<vmem>>, vector<8x448xf32>
    tpu.vector_store %arg24[%c0_161, %c0_162], %185 {strides = array<i32>} : memref<8x457xf32, #tpu.memory_space<vmem>>, vector<8x448xf32>,
    %cst_163 = arith.constant 0.000000e+00 : f32
    %187 = vector.broadcast %cst_163 : f32 to vector<8x9xf32>
    %c0_164 = arith.constant 0 : index
    %c448 = arith.constant 448 : index
    %188 = vector.load %arg24[%c0_164, %c448] : memref<8x457xf32, #tpu.memory_space<vmem>>, vector<8x9xf32>
    tpu.vector_store %arg24[%c0_164, %c448], %187 {strides = array<i32>} : memref<8x457xf32, #tpu.memory_space<vmem>>, vector<8x9xf32>,
    %c0_165 = arith.constant 0 : index
    %c1_166 = arith.constant 1 : index
    %189 = vector.load %arg24[%c0_165, %c1_166] : memref<8x457xf32, #tpu.memory_space<vmem>>, vector<8x448xf32>
    %190 = arith.maximumf %185, %189 : vector<8x448xf32>
    %c0_167 = arith.constant 0 : index
    %c8_168 = arith.constant 8 : index
    %191 = vector.load %arg24[%c0_167, %c8_168] : memref<8x457xf32, #tpu.memory_space<vmem>>, vector<8x448xf32>
    %c0_169 = arith.constant 0 : index
    %c9_170 = arith.constant 9 : index
    %192 = vector.load %arg24[%c0_169, %c9_170] : memref<8x457xf32, #tpu.memory_space<vmem>>, vector<8x448xf32>
    %193 = arith.maximumf %191, %192 : vector<8x448xf32>
    %194 = arith.maximumf %190, %193 : vector<8x448xf32>
    %c0_171 = arith.constant 0 : index
    %c0_172 = arith.constant 0 : index
    %195 = vector.load %arg14[%c0_171, %c0_172] : memref<448x112xf32, #tpu.memory_space<vmem>>, vector<448x112xf32>
    %cst_173 = arith.constant dense<0.000000e+00> : vector<8x112xf32>
    %196 = tpu.matmul %194, %195, %cst_173 {dimension_numbers = #tpu.dot_dimension_numbers<[1], [0], [0], [1], [0, 0, 1, 1], [], []>} : vector<8x448xf32>, vector<448x112xf32>, vector<8x112xf32> -> vector<8x112xf32>
    %cst_174 = arith.constant 0.000000e+00 : f32
    %197 = vector.broadcast %cst_174 : f32 to vector<8x5xf32>
    %c0_175 = arith.constant 0 : index
    %c0_176 = arith.constant 0 : index
    %198 = vector.load %arg25[%c0_175, %c0_176] : memref<8x122xf32, #tpu.memory_space<vmem>>, vector<8x5xf32>
    tpu.vector_store %arg25[%c0_175, %c0_176], %197 {strides = array<i32>} : memref<8x122xf32, #tpu.memory_space<vmem>>, vector<8x5xf32>,
    %c0_177 = arith.constant 0 : index
    %c5_178 = arith.constant 5 : index
    %199 = vector.load %arg25[%c0_177, %c5_178] : memref<8x122xf32, #tpu.memory_space<vmem>>, vector<8x112xf32>
    tpu.vector_store %arg25[%c0_177, %c5_178], %196 {strides = array<i32>} : memref<8x122xf32, #tpu.memory_space<vmem>>, vector<8x112xf32>,
    %cst_179 = arith.constant 0.000000e+00 : f32
    %200 = vector.broadcast %cst_179 : f32 to vector<8x5xf32>
    %c0_180 = arith.constant 0 : index
    %c117 = arith.constant 117 : index
    %201 = vector.load %arg25[%c0_180, %c117] : memref<8x122xf32, #tpu.memory_space<vmem>>, vector<8x5xf32>
    tpu.vector_store %arg25[%c0_180, %c117], %200 {strides = array<i32>} : memref<8x122xf32, #tpu.memory_space<vmem>>, vector<8x5xf32>,
    %c0_181 = arith.constant 0 : index
    %c0_182 = arith.constant 0 : index
    %202 = vector.load %arg25[%c0_181, %c0_182] : memref<8x122xf32, #tpu.memory_space<vmem>>, vector<8x112xf32>
    %c0_183 = arith.constant 0 : index
    %c0_184 = arith.constant 0 : index
    %203 = vector.load %arg12[%c0_183, %c0_184] : memref<9x112xf32, #tpu.memory_space<vmem>>, vector<1x112xf32>
    %204 = vector.broadcast %203 : vector<1x112xf32> to vector<8x112xf32>
    %205 = arith.mulf %202, %204 : vector<8x112xf32>
    %c0_185 = arith.constant 0 : index
    %c0_186 = arith.constant 0 : index
    %206 = vector.load %arg26[%c0_185, %c0_186] : memref<72x112xf32, #tpu.memory_space<vmem>>, vector<8x112xf32>
    tpu.vector_store %arg26[%c0_185, %c0_186], %205 {strides = array<i32>} : memref<72x112xf32, #tpu.memory_space<vmem>>, vector<8x112xf32>,
    %c0_187 = arith.constant 0 : index
    %c1_188 = arith.constant 1 : index
    %207 = vector.load %arg25[%c0_187, %c1_188] : memref<8x122xf32, #tpu.memory_space<vmem>>, vector<8x112xf32>
    %c1_189 = arith.constant 1 : index
    %c0_190 = arith.constant 0 : index
    %208 = vector.load %arg12[%c1_189, %c0_190] : memref<9x112xf32, #tpu.memory_space<vmem>>, vector<1x112xf32>
    %209 = vector.broadcast %208 : vector<1x112xf32> to vector<8x112xf32>
    %210 = arith.mulf %207, %209 : vector<8x112xf32>
    %c8_191 = arith.constant 8 : index
    %c0_192 = arith.constant 0 : index
    %211 = vector.load %arg26[%c8_191, %c0_192] : memref<72x112xf32, #tpu.memory_space<vmem>>, vector<8x112xf32>
    tpu.vector_store %arg26[%c8_191, %c0_192], %210 {strides = array<i32>} : memref<72x112xf32, #tpu.memory_space<vmem>>, vector<8x112xf32>,
    %c0_193 = arith.constant 0 : index
    %c2_194 = arith.constant 2 : index
    %212 = vector.load %arg25[%c0_193, %c2_194] : memref<8x122xf32, #tpu.memory_space<vmem>>, vector<8x112xf32>
    %c2_195 = arith.constant 2 : index
    %c0_196 = arith.constant 0 : index
    %213 = vector.load %arg12[%c2_195, %c0_196] : memref<9x112xf32, #tpu.memory_space<vmem>>, vector<1x112xf32>
    %214 = vector.broadcast %213 : vector<1x112xf32> to vector<8x112xf32>
    %215 = arith.mulf %212, %214 : vector<8x112xf32>
    %c16_197 = arith.constant 16 : index
    %c0_198 = arith.constant 0 : index
    %216 = vector.load %arg26[%c16_197, %c0_198] : memref<72x112xf32, #tpu.memory_space<vmem>>, vector<8x112xf32>
    tpu.vector_store %arg26[%c16_197, %c0_198], %215 {strides = array<i32>} : memref<72x112xf32, #tpu.memory_space<vmem>>, vector<8x112xf32>,
    %c0_199 = arith.constant 0 : index
    %c4 = arith.constant 4 : index
    %217 = vector.load %arg25[%c0_199, %c4] : memref<8x122xf32, #tpu.memory_space<vmem>>, vector<8x112xf32>
    %c3_200 = arith.constant 3 : index
    %c0_201 = arith.constant 0 : index
    %218 = vector.load %arg12[%c3_200, %c0_201] : memref<9x112xf32, #tpu.memory_space<vmem>>, vector<1x112xf32>
    %219 = vector.broadcast %218 : vector<1x112xf32> to vector<8x112xf32>
    %220 = arith.mulf %217, %219 : vector<8x112xf32>
    %c24_202 = arith.constant 24 : index
    %c0_203 = arith.constant 0 : index
    %221 = vector.load %arg26[%c24_202, %c0_203] : memref<72x112xf32, #tpu.memory_space<vmem>>, vector<8x112xf32>
    tpu.vector_store %arg26[%c24_202, %c0_203], %220 {strides = array<i32>} : memref<72x112xf32, #tpu.memory_space<vmem>>, vector<8x112xf32>,
    %c32_204 = arith.constant 32 : index
    %c0_205 = arith.constant 0 : index
    %222 = vector.load %arg26[%c32_204, %c0_205] : memref<72x112xf32, #tpu.memory_space<vmem>>, vector<8x112xf32>
    tpu.vector_store %arg26[%c32_204, %c0_205], %196 {strides = array<i32>} : memref<72x112xf32, #tpu.memory_space<vmem>>, vector<8x112xf32>,
    %c0_206 = arith.constant 0 : index
    %c6_207 = arith.constant 6 : index
    %223 = vector.load %arg25[%c0_206, %c6_207] : memref<8x122xf32, #tpu.memory_space<vmem>>, vector<8x112xf32>
    %c5_208 = arith.constant 5 : index
    %c0_209 = arith.constant 0 : index
    %224 = vector.load %arg12[%c5_208, %c0_209] : memref<9x112xf32, #tpu.memory_space<vmem>>, vector<1x112xf32>
    %225 = vector.broadcast %224 : vector<1x112xf32> to vector<8x112xf32>
    %226 = arith.mulf %223, %225 : vector<8x112xf32>
    %c40_210 = arith.constant 40 : index
    %c0_211 = arith.constant 0 : index
    %227 = vector.load %arg26[%c40_210, %c0_211] : memref<72x112xf32, #tpu.memory_space<vmem>>, vector<8x112xf32>
    tpu.vector_store %arg26[%c40_210, %c0_211], %226 {strides = array<i32>} : memref<72x112xf32, #tpu.memory_space<vmem>>, vector<8x112xf32>,
    %c0_212 = arith.constant 0 : index
    %c8_213 = arith.constant 8 : index
    %228 = vector.load %arg25[%c0_212, %c8_213] : memref<8x122xf32, #tpu.memory_space<vmem>>, vector<8x112xf32>
    %c6_214 = arith.constant 6 : index
    %c0_215 = arith.constant 0 : index
    %229 = vector.load %arg12[%c6_214, %c0_215] : memref<9x112xf32, #tpu.memory_space<vmem>>, vector<1x112xf32>
    %230 = vector.broadcast %229 : vector<1x112xf32> to vector<8x112xf32>
    %231 = arith.mulf %228, %230 : vector<8x112xf32>
    %c48_216 = arith.constant 48 : index
    %c0_217 = arith.constant 0 : index
    %232 = vector.load %arg26[%c48_216, %c0_217] : memref<72x112xf32, #tpu.memory_space<vmem>>, vector<8x112xf32>
    tpu.vector_store %arg26[%c48_216, %c0_217], %231 {strides = array<i32>} : memref<72x112xf32, #tpu.memory_space<vmem>>, vector<8x112xf32>,
    %c0_218 = arith.constant 0 : index
    %c9_219 = arith.constant 9 : index
    %233 = vector.load %arg25[%c0_218, %c9_219] : memref<8x122xf32, #tpu.memory_space<vmem>>, vector<8x112xf32>
    %c7_220 = arith.constant 7 : index
    %c0_221 = arith.constant 0 : index
    %234 = vector.load %arg12[%c7_220, %c0_221] : memref<9x112xf32, #tpu.memory_space<vmem>>, vector<1x112xf32>
    %235 = vector.broadcast %234 : vector<1x112xf32> to vector<8x112xf32>
    %236 = arith.mulf %233, %235 : vector<8x112xf32>
    %c56_222 = arith.constant 56 : index
    %c0_223 = arith.constant 0 : index
    %237 = vector.load %arg26[%c56_222, %c0_223] : memref<72x112xf32, #tpu.memory_space<vmem>>, vector<8x112xf32>
    tpu.vector_store %arg26[%c56_222, %c0_223], %236 {strides = array<i32>} : memref<72x112xf32, #tpu.memory_space<vmem>>, vector<8x112xf32>,
    %c0_224 = arith.constant 0 : index
    %c10_225 = arith.constant 10 : index
    %238 = vector.load %arg25[%c0_224, %c10_225] : memref<8x122xf32, #tpu.memory_space<vmem>>, vector<8x112xf32>
    %c8_226 = arith.constant 8 : index
    %c0_227 = arith.constant 0 : index
    %239 = vector.load %arg12[%c8_226, %c0_227] : memref<9x112xf32, #tpu.memory_space<vmem>>, vector<1x112xf32>
    %240 = vector.broadcast %239 : vector<1x112xf32> to vector<8x112xf32>
    %241 = arith.mulf %238, %240 : vector<8x112xf32>
    %c64_228 = arith.constant 64 : index
    %c0_229 = arith.constant 0 : index
    %242 = vector.load %arg26[%c64_228, %c0_229] : memref<72x112xf32, #tpu.memory_space<vmem>>, vector<8x112xf32>
    tpu.vector_store %arg26[%c64_228, %c0_229], %241 {strides = array<i32>} : memref<72x112xf32, #tpu.memory_space<vmem>>, vector<8x112xf32>,
    %c0_230 = arith.constant 0 : index
    %c0_231 = arith.constant 0 : index
    %243 = vector.load %arg3[%c0_230, %c0_231] : memref<8x72xf32, #tpu.memory_space<vmem>>, vector<8x72xf32>
    %c0_232 = arith.constant 0 : index
    %c0_233 = arith.constant 0 : index
    %244 = vector.load %arg26[%c0_232, %c0_233] : memref<72x112xf32, #tpu.memory_space<vmem>>, vector<72x112xf32>
    %cst_234 = arith.constant dense<0.000000e+00> : vector<8x112xf32>
    %245 = tpu.matmul %243, %244, %cst_234 {dimension_numbers = #tpu.dot_dimension_numbers<[1], [0], [0], [1], [0, 0, 1, 1], [], []>} : vector<8x72xf32>, vector<72x112xf32>, vector<8x112xf32> -> vector<8x112xf32>
    %cst_235 = arith.constant dense<0.000000e+00> : vector<8xf32>
    %246 = vector.multi_reduction <add>, %245, %cst_235 [1] : vector<8x112xf32> to vector<8xf32>
    %247 = vector.shape_cast %246 : vector<8xf32> to vector<8x1xf32>
    %cst_236 = arith.constant 0.00892857183 : f32
    %248 = vector.broadcast %cst_236 : f32 to vector<8x1xf32>
    %249 = arith.mulf %247, %248 : vector<8x1xf32>
    %250 = vector.broadcast %249 : vector<8x1xf32> to vector<8x112xf32>
    %251 = arith.subf %245, %250 : vector<8x112xf32>
    %252 = arith.mulf %251, %251 : vector<8x112xf32>
    %cst_237 = arith.constant dense<0.000000e+00> : vector<8xf32>
    %253 = vector.multi_reduction <add>, %252, %cst_237 [1] : vector<8x112xf32> to vector<8xf32>
    %254 = vector.shape_cast %253 : vector<8xf32> to vector<8x1xf32>
    %cst_238 = arith.constant 0.00892857183 : f32
    %255 = vector.broadcast %cst_238 : f32 to vector<8x1xf32>
    %256 = arith.mulf %254, %255 : vector<8x1xf32>
    %c0_239 = arith.constant 0 : index
    %c0_240 = arith.constant 0 : index
    %257 = vector.load %arg6[%c0_239, %c0_240] : memref<8x1xf32, #tpu.memory_space<vmem>>, vector<8x1xf32>
    %cst_241 = arith.constant 9.99999974E-6 : f32
    %258 = vector.broadcast %cst_241 : f32 to vector<8x1xf32>
    %259 = arith.addf %256, %258 : vector<8x1xf32>
    %260 = math.rsqrt %259 : vector<8x1xf32>
    %261 = arith.mulf %257, %260 : vector<8x1xf32>
    %262 = vector.broadcast %261 : vector<8x1xf32> to vector<8x112xf32>
    %263 = arith.mulf %251, %262 : vector<8x112xf32>
    %c0_242 = arith.constant 0 : index
    %c0_243 = arith.constant 0 : index
    %264 = vector.load %arg9[%c0_242, %c0_243] : memref<8x1xf32, #tpu.memory_space<vmem>>, vector<8x1xf32>
    %265 = vector.broadcast %264 : vector<8x1xf32> to vector<8x112xf32>
    %266 = arith.addf %263, %265 : vector<8x112xf32>
    %cst_244 = arith.constant 0.000000e+00 : f32
    %267 = vector.broadcast %cst_244 : f32 to vector<8x112xf32>
    %268 = arith.maximumf %266, %267 : vector<8x112xf32>
    %c0_245 = arith.constant 0 : index
    %c0_246 = arith.constant 0 : index
    %269 = vector.load %arg27[%c0_245, %c0_246] : memref<8x117xf32, #tpu.memory_space<vmem>>, vector<8x112xf32>
    tpu.vector_store %arg27[%c0_245, %c0_246], %268 {strides = array<i32>} : memref<8x117xf32, #tpu.memory_space<vmem>>, vector<8x112xf32>,
    %cst_247 = arith.constant 0.000000e+00 : f32
    %270 = vector.broadcast %cst_247 : f32 to vector<8x5xf32>
    %c0_248 = arith.constant 0 : index
    %c112 = arith.constant 112 : index
    %271 = vector.load %arg27[%c0_248, %c112] : memref<8x117xf32, #tpu.memory_space<vmem>>, vector<8x5xf32>
    tpu.vector_store %arg27[%c0_248, %c112], %270 {strides = array<i32>} : memref<8x117xf32, #tpu.memory_space<vmem>>, vector<8x5xf32>,
    %c0_249 = arith.constant 0 : index
    %c1_250 = arith.constant 1 : index
    %272 = vector.load %arg27[%c0_249, %c1_250] : memref<8x117xf32, #tpu.memory_space<vmem>>, vector<8x112xf32>
    %273 = arith.maximumf %268, %272 : vector<8x112xf32>
    %c0_251 = arith.constant 0 : index
    %c4_252 = arith.constant 4 : index
    %274 = vector.load %arg27[%c0_251, %c4_252] : memref<8x117xf32, #tpu.memory_space<vmem>>, vector<8x112xf32>
    %c0_253 = arith.constant 0 : index
    %c5_254 = arith.constant 5 : index
    %275 = vector.load %arg27[%c0_253, %c5_254] : memref<8x117xf32, #tpu.memory_space<vmem>>, vector<8x112xf32>
    %276 = arith.maximumf %274, %275 : vector<8x112xf32>
    %277 = arith.maximumf %273, %276 : vector<8x112xf32>
    %c0_255 = arith.constant 0 : index
    %c0_256 = arith.constant 0 : index
    %278 = vector.load %arg15[%c0_255, %c0_256] : memref<112x28xf32, #tpu.memory_space<vmem>>, vector<112x28xf32>
    %cst_257 = arith.constant dense<0.000000e+00> : vector<8x28xf32>
    %279 = tpu.matmul %277, %278, %cst_257 {dimension_numbers = #tpu.dot_dimension_numbers<[1], [0], [0], [1], [0, 0, 1, 1], [], []>} : vector<8x112xf32>, vector<112x28xf32>, vector<8x28xf32> -> vector<8x28xf32>
    %c0_258 = arith.constant 0 : index
    %c0_259 = arith.constant 0 : index
    %280 = vector.load %arg16[%c0_258, %c0_259] : memref<28x24xf32, #tpu.memory_space<vmem>>, vector<28x24xf32>
    %cst_260 = arith.constant dense<0.000000e+00> : vector<8x24xf32>
    %281 = tpu.matmul %279, %280, %cst_260 {dimension_numbers = #tpu.dot_dimension_numbers<[1], [0], [0], [1], [0, 0, 1, 1], [], []>} : vector<8x28xf32>, vector<28x24xf32>, vector<8x24xf32> -> vector<8x24xf32>
    %282 = arith.mulf %281, %281 : vector<8x24xf32>
    %c0_261 = arith.constant 0 : index
    %c0_262 = arith.constant 0 : index
    %283 = vector.load %arg17[%c0_261, %c0_262] : memref<24x6xf32, #tpu.memory_space<vmem>>, vector<24x6xf32>
    %cst_263 = arith.constant dense<0.000000e+00> : vector<8x6xf32>
    %284 = tpu.matmul %282, %283, %cst_263 {dimension_numbers = #tpu.dot_dimension_numbers<[1], [0], [0], [1], [0, 0, 1, 1], [], []>} : vector<8x24xf32>, vector<24x6xf32>, vector<8x6xf32> -> vector<8x6xf32>
    %cst_264 = arith.constant dense<0.000000e+00> : vector<6xf32>
    %285 = vector.multi_reduction <add>, %284, %cst_264 [0] : vector<8x6xf32> to vector<6xf32>
    %286 = vector.shape_cast %285 : vector<6xf32> to vector<1x6xf32>
    %287 = math.sqrt %286 : vector<1x6xf32>
    %c0_265 = arith.constant 0 : index
    %c0_266 = arith.constant 0 : index
    %288 = vector.load %arg18[%c0_265, %c0_266] : memref<1x6xf32, #tpu.memory_space<vmem>>, vector<1x6xf32>
    tpu.vector_store %arg18[%c0_265, %c0_266], %287 {strides = array<i32>} : memref<1x6xf32, #tpu.memory_space<vmem>>, vector<1x6xf32>,
    return
  }
}

</mosaic_0001>

<llo_original>
// kernel: prototypical_forward.1
$region0: #{prototypical_forward.1}
  #allocation0 [shape = 'u32[]', space=smem, size = 0x4, offset = 0x4, fixed_abs, tag = 'smem constant byte address 0x4 - core index']
  #allocation1 [shape = 'u32[144,128]{1,0:T(1,128)}', space=vmem, size = 0x12000, scoped, tag = 'internal scratch']
  #allocation2 [shape = 'f32[3,1826]{1,0:T(4,128)}', space=vmem, size = 0x7800, scoped, tag = 'scratch operand']
  #allocation3 [shape = 'f32[27,1792]{1,0:T(8,128)}', space=vmem, size = 0x38000, scoped, tag = 'scratch operand']
  #allocation4 [shape = 'f32[8,1809]{1,0:T(8,128)}', space=vmem, size = 0xf000, scoped, tag = 'scratch operand']
  #allocation5 [shape = 'f32[8,466]{1,0:T(8,128)}', space=vmem, size = 0x4000, scoped, tag = 'scratch operand']
  #allocation6 [shape = 'f32[72,448]{1,0:T(8,128)}', space=vmem, size = 0x24000, scoped, tag = 'scratch operand']
  #allocation7 [shape = 'f32[8,457]{1,0:T(8,128)}', space=vmem, size = 0x4000, scoped, tag = 'scratch operand']
  #allocation8 [shape = 'f32[8,122]{1,0:T(8,128)}', space=vmem, size = 0x1000, scoped, tag = 'scratch operand']
  #allocation9 [shape = 'f32[72,112]{1,0:T(8,128)}', space=vmem, size = 0x9000, scoped, tag = 'scratch operand']
  #allocation10 [shape = 'f32[8,117]{1,0:T(8,128)}', space=vmem, size = 0x1000, scoped, tag = 'scratch operand']
  #allocation11 [shape = 'f32[56,256]{1,0:T(8,128)}', space=vmem, size = 0xe000, scoped, tag = 'scratch operand']
  #allocation12 [shape = 'f32[8,448]{1,0:T(8,128)}', space=vmem, size = 0x4000, scoped, tag = 'scratch operand']
  %s0 = inlined_call_operand.vmem [shape: f32[3,1792], index: 0, kind: input, shape index: {}]
  %s1 = inlined_call_operand.vmem [shape: f32[8,27], index: 1, kind: input, shape index: {}]
  %s2 = inlined_call_operand.vmem [shape: f32[8,72], index: 2, kind: input, shape index: {}]
  %s3 = inlined_call_operand.vmem [shape: f32[8,72], index: 3, kind: input, shape index: {}]
  %s4 = inlined_call_operand.vmem [shape: f32[8,1], index: 4, kind: input, shape index: {}]
  %s5 = inlined_call_operand.vmem [shape: f32[8,1], index: 5, kind: input, shape index: {}]
  %s6 = inlined_call_operand.vmem [shape: f32[8,1], index: 6, kind: input, shape index: {}]
  %s7 = inlined_call_operand.vmem [shape: f32[8,1], index: 7, kind: input, shape index: {}]
  %s8 = inlined_call_operand.vmem [shape: f32[8,1], index: 8, kind: input, shape index: {}]
  %s9 = inlined_call_operand.vmem [shape: f32[8,1], index: 9, kind: input, shape index: {}]
  %s10 = inlined_call_operand.vmem [shape: f32[9,1792], index: 10, kind: input, shape index: {}]
  %s11 = inlined_call_operand.vmem [shape: f32[9,448], index: 11, kind: input, shape index: {}]
  %s12 = inlined_call_operand.vmem [shape: f32[9,112], index: 12, kind: input, shape index: {}]
  %s13 = inlined_call_operand.vmem [shape: f32[256,64], index: 13, kind: input, shape index: {}]
  %s14 = inlined_call_operand.vmem [shape: f32[448,112], index: 14, kind: input, shape index: {}]
  %s15 = inlined_call_operand.vmem [shape: f32[112,28], index: 15, kind: input, shape index: {}]
  %s16 = inlined_call_operand.vmem [shape: f32[28,24], index: 16, kind: input, shape index: {}]
  %s17 = inlined_call_operand.vmem [shape: f32[24,6], index: 17, kind: input, shape index: {}]
  %s18 = inlined_call_operand.vmem [shape: f32[1,6], index: 18, kind: output, shape index: {}]
  %s19 = sld [smem:[#allocation0]]
  $region82: #{prototypical_forward.1} parent=0
    _
  %s21 = ssub.s32 1, %s19
  %s22 = scalar_select 0, %s21, %s19
  // Predicated region
  $region2: #{prototypical_forward.1} parent=0 // pred_check
    _
  $region3: #{prototypical_forward.1} parent=0 // pred_check_branch
    %24 = sbr.rel (0) target = $region5
  $region4: #{prototypical_forward.1} parent=0 // pred_region
    _
  $region5: #{prototypical_forward.1} parent=0 // pred_fallthru
    _
  // Predicated region
  $region6: #{prototypical_forward.1} parent=0 // pred_check
    _
  $region7: #{prototypical_forward.1} parent=0 // pred_check_branch
    %26 = sbr.rel (0) target = $region9
  $region8: #{prototypical_forward.1} parent=0 // pred_region
    _
  $region9: #{prototypical_forward.1} parent=0 // pred_fallthru
    _
  // Predicated region
  $region10: #{prototypical_forward.1} parent=0 // pred_check
    _
  $region11: #{prototypical_forward.1} parent=0 // pred_check_branch
    %28 = sbr.rel (0) target = $region13
  $region12: #{prototypical_forward.1} parent=0 // pred_region
    _
  $region13: #{prototypical_forward.1} parent=0 // pred_fallthru
    _
  // Predicated region
  $region14: #{prototypical_forward.1} parent=0 // pred_check
    _
  $region15: #{prototypical_forward.1} parent=0 // pred_check_branch
    %30 = sbr.rel (0) target = $region17
  $region16: #{prototypical_forward.1} parent=0 // pred_region
    _
  $region17: #{prototypical_forward.1} parent=0 // pred_fallthru
    _
  // Predicated region
  $region18: #{prototypical_forward.1} parent=0 // pred_check
    _
  $region19: #{prototypical_forward.1} parent=0 // pred_check_branch
    %32 = sbr.rel (0) target = $region21
  $region20: #{prototypical_forward.1} parent=0 // pred_region
    _
  $region21: #{prototypical_forward.1} parent=0 // pred_fallthru
    _
  // Predicated region
  $region22: #{prototypical_forward.1} parent=0 // pred_check
    _
  $region23: #{prototypical_forward.1} parent=0 // pred_check_branch
    %34 = sbr.rel (0) target = $region25
  $region24: #{prototypical_forward.1} parent=0 // pred_region
    _
  $region25: #{prototypical_forward.1} parent=0 // pred_fallthru
    _
  // Predicated region
  $region26: #{prototypical_forward.1} parent=0 // pred_check
    _
  $region27: #{prototypical_forward.1} parent=0 // pred_check_branch
    %36 = sbr.rel (0) target = $region29
  $region28: #{prototypical_forward.1} parent=0 // pred_region
    _
  $region29: #{prototypical_forward.1} parent=0 // pred_fallthru
    _
  // Predicated region
  $region30: #{prototypical_forward.1} parent=0 // pred_check
    _
  $region31: #{prototypical_forward.1} parent=0 // pred_check_branch
    %38 = sbr.rel (0) target = $region33
  $region32: #{prototypical_forward.1} parent=0 // pred_region
    _
  $region33: #{prototypical_forward.1} parent=0 // pred_fallthru
    _
  // Predicated region
  $region34: #{prototypical_forward.1} parent=0 // pred_check
    _
  $region35: #{prototypical_forward.1} parent=0 // pred_check_branch
    %40 = sbr.rel (0) target = $region37
  $region36: #{prototypical_forward.1} parent=0 // pred_region
    _
  $region37: #{prototypical_forward.1} parent=0 // pred_fallthru
    _
  // Predicated region
  $region38: #{prototypical_forward.1} parent=0 // pred_check
    _
  $region39: #{prototypical_forward.1} parent=0 // pred_check_branch
    %42 = sbr.rel (0) target = $region41
  $region40: #{prototypical_forward.1} parent=0 // pred_region
    _
  $region41: #{prototypical_forward.1} parent=0 // pred_fallthru
    _
  // Predicated region
  $region42: #{prototypical_forward.1} parent=0 // pred_check
    _
  $region43: #{prototypical_forward.1} parent=0 // pred_check_branch
    %44 = sbr.rel (0) target = $region45
  $region44: #{prototypical_forward.1} parent=0 // pred_region
    _
  $region45: #{prototypical_forward.1} parent=0 // pred_fallthru
    _
  // Predicated region
  $region46: #{prototypical_forward.1} parent=0 // pred_check
    _
  $region47: #{prototypical_forward.1} parent=0 // pred_check_branch
    %46 = sbr.rel (0) target = $region49
  $region48: #{prototypical_forward.1} parent=0 // pred_region
    _
  $region49: #{prototypical_forward.1} parent=0 // pred_fallthru
    _
  // Predicated region
  $region50: #{prototypical_forward.1} parent=0 // pred_check
    _
  $region51: #{prototypical_forward.1} parent=0 // pred_check_branch
    %48 = sbr.rel (0) target = $region53
  $region52: #{prototypical_forward.1} parent=0 // pred_region
    _
  $region53: #{prototypical_forward.1} parent=0 // pred_fallthru
    _
  // Predicated region
  $region54: #{prototypical_forward.1} parent=0 // pred_check
    _
  $region55: #{prototypical_forward.1} parent=0 // pred_check_branch
    %50 = sbr.rel (0) target = $region57
  $region56: #{prototypical_forward.1} parent=0 // pred_region
    _
  $region57: #{prototypical_forward.1} parent=0 // pred_fallthru
    _
  // Predicated region
  $region58: #{prototypical_forward.1} parent=0 // pred_check
    _
  $region59: #{prototypical_forward.1} parent=0 // pred_check_branch
    %52 = sbr.rel (0) target = $region61
  $region60: #{prototypical_forward.1} parent=0 // pred_region
    _
  $region61: #{prototypical_forward.1} parent=0 // pred_fallthru
    _
  // Predicated region
  $region62: #{prototypical_forward.1} parent=0 // pred_check
    _
  $region63: #{prototypical_forward.1} parent=0 // pred_check_branch
    %54 = sbr.rel (0) target = $region65
  $region64: #{prototypical_forward.1} parent=0 // pred_region
    _
  $region65: #{prototypical_forward.1} parent=0 // pred_fallthru
    _
  // Predicated region
  $region66: #{prototypical_forward.1} parent=0 // pred_check
    _
  $region67: #{prototypical_forward.1} parent=0 // pred_check_branch
    %56 = sbr.rel (0) target = $region69
  $region68: #{prototypical_forward.1} parent=0 // pred_region
    _
  $region69: #{prototypical_forward.1} parent=0 // pred_fallthru
    _
  // Predicated region
  $region70: #{prototypical_forward.1} parent=0 // pred_check
    _
  $region71: #{prototypical_forward.1} parent=0 // pred_check_branch
    %58 = sbr.rel (0) target = $region73
  $region72: #{prototypical_forward.1} parent=0 // pred_region
    _
  $region73: #{prototypical_forward.1} parent=0 // pred_fallthru
    _
  %v59 = vld [vmem:[%s0] sm:$0x77]
  %v60 = vld [vmem:[%s0 + $0x8] sm:$0x77]
  %v61 = vld [vmem:[%s0 + $0x10] sm:$0x77]
  %v62 = vld [vmem:[%s0 + $0x18] sm:$0x77]
  %v63 = vld [vmem:[%s0 + $0x20] sm:$0x77]
  %v64 = vld [vmem:[%s0 + $0x28] sm:$0x77]
  %v65 = vld [vmem:[%s0 + $0x30] sm:$0x77]
  %vm66 = vcmask 133120
  %67 = vst.msk [vmem:[#allocation2] sm:$0x7] %vm66, 0.0
  %75 = vrot.lane.b32.xlu0 %v59, 17
  %v76 = vpop.permute.xlu0 %75
  %77 = vrot.lane.b32.xlu0 %v60, 17
  %v78 = vpop.permute.xlu0 %77
  %79 = vrot.lane.b32.xlu0 %v61, 17
  %v80 = vpop.permute.xlu0 %79
  %81 = vrot.lane.b32.xlu0 %v62, 17
  %v82 = vpop.permute.xlu0 %81
  %83 = vrot.lane.b32.xlu0 %v63, 17
  %v84 = vpop.permute.xlu0 %83
  %85 = vrot.lane.b32.xlu0 %v64, 17
  %v86 = vpop.permute.xlu0 %85
  %87 = vrot.lane.b32.xlu0 %v65, 17
  %v88 = vpop.permute.xlu0 %87
  %v89 = vrot.slane %v76, 4
  %v90 = vrot.slane %v78, 4
  %v91 = vrot.slane %v80, 4
  %v92 = vrot.slane %v82, 4
  %v93 = vrot.slane %v84, 4
  %v94 = vrot.slane %v86, 4
  %v95 = vrot.slane %v88, 4
  %vm96 = vcmask 138240
  %v97 = vsel %vm96, %v89, %v76
  %vm98 = vcmask 1043456
  %v99 = vsel %vm98, %v89, %v90
  %v100 = vsel %vm96, %v99, %v78
  %v101 = vsel %vm98, %v90, %v91
  %v102 = vsel %vm96, %v101, %v80
  %v103 = vsel %vm98, %v91, %v92
  %v104 = vsel %vm96, %v103, %v82
  %v105 = vsel %vm98, %v92, %v93
  %v106 = vsel %vm96, %v105, %v84
  %v107 = vsel %vm98, %v93, %v94
  %v108 = vsel %vm96, %v107, %v86
  %v109 = vsel %vm98, %v94, %v95
  %v110 = vsel %vm96, %v109, %v88
  %vm119 = vcmask 1042568
  %vm120 = vcmask 1046532
  %vm121 = vmor %vm120, %vm119
  %122 = vst.msk [vmem:[#allocation2] sm:$0x77] %vm121, %v97
  %123 = vst [vmem:[#allocation2 + $0x8] sm:$0x77] %v100
  %124 = vst [vmem:[#allocation2 + $0x10] sm:$0x77] %v102
  %125 = vst [vmem:[#allocation2 + $0x18] sm:$0x77] %v104
  %126 = vst [vmem:[#allocation2 + $0x20] sm:$0x77] %v106
  %127 = vst [vmem:[#allocation2 + $0x28] sm:$0x77] %v108
  %128 = vst [vmem:[#allocation2 + $0x30] sm:$0x77] %v110
  %129 = vst.msk [vmem:[#allocation2 + $0x38] sm:$0x7] %vm66, %v95
  %vm130 = vcmask 272520
  %131 = vst.msk [vmem:[#allocation2 + $0x38] sm:$0x7] %vm130, 0.0
  %v132 = vld [vmem:[#allocation2] sm:$0x77]
  %v133 = vld [vmem:[#allocation2 + $0x8] sm:$0x77]
  %v134 = vld [vmem:[#allocation2 + $0x10] sm:$0x77]
  %v135 = vld [vmem:[#allocation2 + $0x18] sm:$0x77]
  %v136 = vld [vmem:[#allocation2 + $0x20] sm:$0x77]
  %v137 = vld [vmem:[#allocation2 + $0x28] sm:$0x77]
  %v138 = vld [vmem:[#allocation2 + $0x30] sm:$0x77]
  %v139 = vld [vmem:[%s10] ss:$8 sm:$0xf]
  %v140 = vld [vmem:[%s10] ss:$8 sm:$0xf0]
  %v141 = vor.u32 %v139, %v140
  %s142 = scalar_lea.vmem %s10, 64
  %v143 = vld [vmem:[%s142] ss:$8 sm:$0xf]
  %v144 = vld [vmem:[%s142] ss:$8 sm:$0x30]
  %v145 = vor.u32 %v143, %v144
  %v148 = vlaneseq
  %v149 = vshrl.u32 %v148, 7
  %v150 = vsub.s32 0, %v149
  %v151 = vrot.slane %v141, %v150
  %v152 = vlaneseq
  %v153 = vshrl.u32 %v152, 7
  %v154 = vsub.s32 1, %v153
  %v155 = vrot.slane %v141, %v154
  %v156 = vlaneseq
  %v157 = vshrl.u32 %v156, 7
  %v158 = vsub.s32 2, %v157
  %v159 = vrot.slane %v141, %v158
  %v160 = vlaneseq
  %v161 = vshrl.u32 %v160, 7
  %v162 = vsub.s32 3, %v161
  %v163 = vrot.slane %v141, %v162
  %v164 = vlaneseq
  %v165 = vshrl.u32 %v164, 7
  %v166 = vsub.s32 4, %v165
  %v167 = vrot.slane %v141, %v166
  %v168 = vlaneseq
  %v169 = vshrl.u32 %v168, 7
  %v170 = vsub.s32 5, %v169
  %v171 = vrot.slane %v141, %v170
  %v172 = vlaneseq
  %v173 = vshrl.u32 %v172, 7
  %v174 = vsub.s32 6, %v173
  %v175 = vrot.slane %v141, %v174
  %v176 = vlaneseq
  %v177 = vshrl.u32 %v176, 7
  %v178 = vsub.s32 7, %v177
  %v179 = vrot.slane %v141, %v178
  %v180 = vlaneseq
  %v181 = vshrl.u32 %v180, 7
  %v182 = vsub.s32 0, %v181
  %v183 = vrot.slane %v145, %v182
  %v184 = vlaneseq
  %v185 = vshrl.u32 %v184, 7
  %v186 = vsub.s32 1, %v185
  %v187 = vrot.slane %v145, %v186
  %v188 = vlaneseq
  %v189 = vshrl.u32 %v188, 7
  %v190 = vsub.s32 2, %v189
  %v191 = vrot.slane %v145, %v190
  %v192 = vlaneseq
  %v193 = vshrl.u32 %v192, 7
  %v194 = vsub.s32 3, %v193
  %v195 = vrot.slane %v145, %v194
  %v196 = vlaneseq
  %v197 = vshrl.u32 %v196, 7
  %v198 = vsub.s32 4, %v197
  %v199 = vrot.slane %v145, %v198
  %v200 = vlaneseq
  %v201 = vshrl.u32 %v200, 7
  %v202 = vsub.s32 5, %v201
  %v203 = vrot.slane %v145, %v202
  %v204 = vcombine.low %v151, %v155
  %v205 = vcombine.low %v159, %v163
  %v206 = vcombine.low %v167, %v171
  %v207 = vcombine.low %v175, %v179
  %v208 = vcombine.low %v183, %v187
  %v209 = vcombine.low %v191, %v195
  %v210 = vcombine.low %v199, %v203
  %v218 = vmul.f32 %v132, %v204
  %v219 = vmul.f32 %v133, %v205
  %v220 = vmul.f32 %v134, %v206
  %v221 = vmul.f32 %v135, %v207
  %v222 = vmul.f32 %v136, %v208
  %v223 = vmul.f32 %v137, %v209
  %v224 = vmul.f32 %v138, %v210
  %v232 = vcombine.high %v218, %v218
  %v233 = vcombine.high %v219, %v219
  %v234 = vcombine.high %v220, %v220
  %v235 = vcombine.high %v221, %v221
  %v236 = vcombine.high %v222, %v222
  %v237 = vcombine.high %v223, %v223
  %v238 = vcombine.high %v224, %v224
  %246 = vst [vmem:[#allocation3] sm:$0x7] %v218
  %247 = vst [vmem:[#allocation3 + $0x8] sm:$0x7] %v232
  %248 = vst [vmem:[#allocation3 + $0x10] sm:$0x7] %v219
  %249 = vst [vmem:[#allocation3 + $0x18] sm:$0x7] %v233
  %250 = vst [vmem:[#allocation3 + $0x20] sm:$0x7] %v220
  %251 = vst [vmem:[#allocation3 + $0x28] sm:$0x7] %v234
  %252 = vst [vmem:[#allocation3 + $0x30] sm:$0x7] %v221
  %253 = vst [vmem:[#allocation3 + $0x38] sm:$0x7] %v235
  %254 = vst [vmem:[#allocation3 + $0x40] sm:$0x7] %v222
  %255 = vst [vmem:[#allocation3 + $0x48] sm:$0x7] %v236
  %256 = vst [vmem:[#allocation3 + $0x50] sm:$0x7] %v223
  %257 = vst [vmem:[#allocation3 + $0x58] sm:$0x7] %v237
  %258 = vst [vmem:[#allocation3 + $0x60] sm:$0x7] %v224
  %259 = vst [vmem:[#allocation3 + $0x68] sm:$0x7] %v238
  %v260 = vld [vmem:[#allocation2] sm:$0x77]
  %v261 = vld [vmem:[#allocation2 + $0x8] sm:$0x77]
  %v262 = vld [vmem:[#allocation2 + $0x10] sm:$0x77]
  %v263 = vld [vmem:[#allocation2 + $0x18] sm:$0x77]
  %v264 = vld [vmem:[#allocation2 + $0x20] sm:$0x77]
  %v265 = vld [vmem:[#allocation2 + $0x28] sm:$0x77]
  %v266 = vld [vmem:[#allocation2 + $0x30] sm:$0x77]
  %v267 = vld [vmem:[#allocation2 + $0x38] sm:$0x7]
  %s268 = scalar_lea.vmem %s10, 1
  %v269 = vld [vmem:[%s268] ss:$8 sm:$0xf]
  %v270 = vld [vmem:[%s268] ss:$8 sm:$0xf0]
  %v271 = vor.u32 %v269, %v270
  %s272 = scalar_lea.vmem %s10, 65
  %v273 = vld [vmem:[%s272] ss:$8 sm:$0xf]
  %v274 = vld [vmem:[%s272] ss:$8 sm:$0x30]
  %v275 = vor.u32 %v273, %v274
  %v278 = vlaneseq
  %v279 = vshrl.u32 %v278, 7
  %v280 = vsub.s32 0, %v279
  %v281 = vrot.slane %v271, %v280
  %v282 = vlaneseq
  %v283 = vshrl.u32 %v282, 7
  %v284 = vsub.s32 1, %v283
  %v285 = vrot.slane %v271, %v284
  %v286 = vlaneseq
  %v287 = vshrl.u32 %v286, 7
  %v288 = vsub.s32 2, %v287
  %v289 = vrot.slane %v271, %v288
  %v290 = vlaneseq
  %v291 = vshrl.u32 %v290, 7
  %v292 = vsub.s32 3, %v291
  %v293 = vrot.slane %v271, %v292
  %v294 = vlaneseq
  %v295 = vshrl.u32 %v294, 7
  %v296 = vsub.s32 4, %v295
  %v297 = vrot.slane %v271, %v296
  %v298 = vlaneseq
  %v299 = vshrl.u32 %v298, 7
  %v300 = vsub.s32 5, %v299
  %v301 = vrot.slane %v271, %v300
  %v302 = vlaneseq
  %v303 = vshrl.u32 %v302, 7
  %v304 = vsub.s32 6, %v303
  %v305 = vrot.slane %v271, %v304
  %v306 = vlaneseq
  %v307 = vshrl.u32 %v306, 7
  %v308 = vsub.s32 7, %v307
  %v309 = vrot.slane %v271, %v308
  %v310 = vlaneseq
  %v311 = vshrl.u32 %v310, 7
  %v312 = vsub.s32 0, %v311
  %v313 = vrot.slane %v275, %v312
  %v314 = vlaneseq
  %v315 = vshrl.u32 %v314, 7
  %v316 = vsub.s32 1, %v315
  %v317 = vrot.slane %v275, %v316
  %v318 = vlaneseq
  %v319 = vshrl.u32 %v318, 7
  %v320 = vsub.s32 2, %v319
  %v321 = vrot.slane %v275, %v320
  %v322 = vlaneseq
  %v323 = vshrl.u32 %v322, 7
  %v324 = vsub.s32 3, %v323
  %v325 = vrot.slane %v275, %v324
  %v326 = vlaneseq
  %v327 = vshrl.u32 %v326, 7
  %v328 = vsub.s32 4, %v327
  %v329 = vrot.slane %v275, %v328
  %v330 = vlaneseq
  %v331 = vshrl.u32 %v330, 7
  %v332 = vsub.s32 5, %v331
  %v333 = vrot.slane %v275, %v332
  %v334 = vcombine.low %v281, %v285
  %v335 = vcombine.low %v289, %v293
  %v336 = vcombine.low %v297, %v301
  %v337 = vcombine.low %v305, %v309
  %v338 = vcombine.low %v313, %v317
  %v339 = vcombine.low %v321, %v325
  %v340 = vcombine.low %v329, %v333
  %341 = vrot.lane.b32.xlu0 %v334, 1
  %v342 = vpop.permute.xlu0 %341
  %343 = vrot.lane.b32.xlu0 %v335, 1
  %v344 = vpop.permute.xlu0 %343
  %345 = vrot.lane.b32.xlu0 %v336, 1
  %v346 = vpop.permute.xlu0 %345
  %347 = vrot.lane.b32.xlu0 %v337, 1
  %v348 = vpop.permute.xlu0 %347
  %349 = vrot.lane.b32.xlu0 %v338, 1
  %v350 = vpop.permute.xlu0 %349
  %351 = vrot.lane.b32.xlu0 %v339, 1
  %v352 = vpop.permute.xlu0 %351
  %353 = vrot.lane.b32.xlu0 %v340, 1
  %v354 = vpop.permute.xlu0 %353
  %v355 = vrot.slane %v342, 4
  %v356 = vrot.slane %v344, 4
  %v357 = vrot.slane %v346, 4
  %v358 = vrot.slane %v348, 4
  %v359 = vrot.slane %v350, 4
  %v360 = vrot.slane %v352, 4
  %v361 = vrot.slane %v354, 4
  %vm362 = vcmask 7168
  %v363 = vsel %vm362, %v355, %v342
  %v364 = vsel %vm98, %v355, %v356
  %v365 = vsel %vm362, %v364, %v344
  %v366 = vsel %vm98, %v356, %v357
  %v367 = vsel %vm362, %v366, %v346
  %v368 = vsel %vm98, %v357, %v358
  %v369 = vsel %vm362, %v368, %v348
  %v370 = vsel %vm98, %v358, %v359
  %v371 = vsel %vm362, %v370, %v350
  %v372 = vsel %vm98, %v359, %v360
  %v373 = vsel %vm362, %v372, %v352
  %v374 = vsel %vm98, %v360, %v361
  %v375 = vsel %vm362, %v374, %v354
  %v384 = vmul.f32 %v260, %v363
  %v385 = vmul.f32 %v261, %v365
  %v386 = vmul.f32 %v262, %v367
  %v387 = vmul.f32 %v263, %v369
  %v388 = vmul.f32 %v264, %v371
  %v389 = vmul.f32 %v265, %v373
  %v390 = vmul.f32 %v266, %v375
  %v391 = vmul.f32 %v267, %v361
  %v400 = vcombine.high %v384, %v384
  %v401 = vcombine.high %v385, %v385
  %v402 = vcombine.high %v386, %v386
  %v403 = vcombine.high %v387, %v387
  %v404 = vcombine.high %v388, %v388
  %v405 = vcombine.high %v389, %v389
  %v406 = vcombine.high %v390, %v390
  %v407 = vrot.slane %v384, 5
  %v408 = vrot.slane %v400, 5
  %v409 = vrot.slane %v385, 5
  %v410 = vrot.slane %v401, 5
  %v411 = vrot.slane %v386, 5
  %v412 = vrot.slane %v402, 5
  %v413 = vrot.slane %v387, 5
  %v414 = vrot.slane %v403, 5
  %v415 = vrot.slane %v388, 5
  %v416 = vrot.slane %v404, 5
  %v417 = vrot.slane %v389, 5
  %v418 = vrot.slane %v405, 5
  %v419 = vrot.slane %v390, 5
  %v420 = vrot.slane %v406, 5
  %v421 = vrot.slane %v391, 5
  %422 = vrot.lane.b32.xlu0 %v407, 127
  %v423 = vpop.permute.xlu0 %422
  %424 = vrot.lane.b32.xlu0 %v408, 127
  %v425 = vpop.permute.xlu0 %424
  %426 = vrot.lane.b32.xlu0 %v409, 127
  %v427 = vpop.permute.xlu0 %426
  %428 = vrot.lane.b32.xlu0 %v410, 127
  %v429 = vpop.permute.xlu0 %428
  %430 = vrot.lane.b32.xlu0 %v411, 127
  %v431 = vpop.permute.xlu0 %430
  %432 = vrot.lane.b32.xlu0 %v412, 127
  %v433 = vpop.permute.xlu0 %432
  %434 = vrot.lane.b32.xlu0 %v413, 127
  %v435 = vpop.permute.xlu0 %434
  %436 = vrot.lane.b32.xlu0 %v414, 127
  %v437 = vpop.permute.xlu0 %436
  %438 = vrot.lane.b32.xlu0 %v415, 127
  %v439 = vpop.permute.xlu0 %438
  %440 = vrot.lane.b32.xlu0 %v416, 127
  %v441 = vpop.permute.xlu0 %440
  %442 = vrot.lane.b32.xlu0 %v417, 127
  %v443 = vpop.permute.xlu0 %442
  %444 = vrot.lane.b32.xlu0 %v418, 127
  %v445 = vpop.permute.xlu0 %444
  %446 = vrot.lane.b32.xlu0 %v419, 127
  %v447 = vpop.permute.xlu0 %446
  %448 = vrot.lane.b32.xlu0 %v420, 127
  %v449 = vpop.permute.xlu0 %448
  %450 = vrot.lane.b32.xlu0 %v421, 127
  %v451 = vpop.permute.xlu0 %450
  %vm452 = vcmask 1039360
  %v453 = vsel %vm452, %v423, %v425
  %v454 = vsel %vm452, %v425, %v427
  %v455 = vsel %vm452, %v427, %v429
  %v456 = vsel %vm452, %v429, %v431
  %v457 = vsel %vm452, %v431, %v433
  %v458 = vsel %vm452, %v433, %v435
  %v459 = vsel %vm452, %v435, %v437
  %v460 = vsel %vm452, %v437, %v439
  %v461 = vsel %vm452, %v439, %v441
  %v462 = vsel %vm452, %v441, %v443
  %v463 = vsel %vm452, %v443, %v445
  %v464 = vsel %vm452, %v445, %v447
  %v465 = vsel %vm452, %v447, %v449
  %v466 = vsel %vm452, %v449, %v451
  %481 = vst [vmem:[#allocation3] sm:$0x38] %v453
  %482 = vst [vmem:[#allocation3 + $0x8] sm:$0x38] %v454
  %483 = vst [vmem:[#allocation3 + $0x10] sm:$0x38] %v455
  %484 = vst [vmem:[#allocation3 + $0x18] sm:$0x38] %v456
  %485 = vst [vmem:[#allocation3 + $0x20] sm:$0x38] %v457
  %486 = vst [vmem:[#allocation3 + $0x28] sm:$0x38] %v458
  %487 = vst [vmem:[#allocation3 + $0x30] sm:$0x38] %v459
  %488 = vst [vmem:[#allocation3 + $0x38] sm:$0x38] %v460
  %489 = vst [vmem:[#allocation3 + $0x40] sm:$0x38] %v461
  %490 = vst [vmem:[#allocation3 + $0x48] sm:$0x38] %v462
  %491 = vst [vmem:[#allocation3 + $0x50] sm:$0x38] %v463
  %492 = vst [vmem:[#allocation3 + $0x58] sm:$0x38] %v464
  %493 = vst [vmem:[#allocation3 + $0x60] sm:$0x38] %v465
  %494 = vst [vmem:[#allocation3 + $0x68] sm:$0x38] %v466
  %v495 = vld [vmem:[#allocation2] sm:$0x77]
  %v496 = vld [vmem:[#allocation2 + $0x8] sm:$0x77]
  %v497 = vld [vmem:[#allocation2 + $0x10] sm:$0x77]
  %v498 = vld [vmem:[#allocation2 + $0x18] sm:$0x77]
  %v499 = vld [vmem:[#allocation2 + $0x20] sm:$0x77]
  %v500 = vld [vmem:[#allocation2 + $0x28] sm:$0x77]
  %v501 = vld [vmem:[#allocation2 + $0x30] sm:$0x77]
  %v502 = vld [vmem:[#allocation2 + $0x38] sm:$0x7]
  %s503 = scalar_lea.vmem %s10, 2
  %v504 = vld [vmem:[%s503] ss:$8 sm:$0xf]
  %v505 = vld [vmem:[%s503] ss:$8 sm:$0xf0]
  %v506 = vor.u32 %v504, %v505
  %s507 = scalar_lea.vmem %s10, 66
  %v508 = vld [vmem:[%s507] ss:$8 sm:$0xf]
  %v509 = vld [vmem:[%s507] ss:$8 sm:$0x30]
  %v510 = vor.u32 %v508, %v509
  %v513 = vlaneseq
  %v514 = vshrl.u32 %v513, 7
  %v515 = vsub.s32 0, %v514
  %v516 = vrot.slane %v506, %v515
  %v517 = vlaneseq
  %v518 = vshrl.u32 %v517, 7
  %v519 = vsub.s32 1, %v518
  %v520 = vrot.slane %v506, %v519
  %v521 = vlaneseq
  %v522 = vshrl.u32 %v521, 7
  %v523 = vsub.s32 2, %v522
  %v524 = vrot.slane %v506, %v523
  %v525 = vlaneseq
  %v526 = vshrl.u32 %v525, 7
  %v527 = vsub.s32 3, %v526
  %v528 = vrot.slane %v506, %v527
  %v529 = vlaneseq
  %v530 = vshrl.u32 %v529, 7
  %v531 = vsub.s32 4, %v530
  %v532 = vrot.slane %v506, %v531
  %v533 = vlaneseq
  %v534 = vshrl.u32 %v533, 7
  %v535 = vsub.s32 5, %v534
  %v536 = vrot.slane %v506, %v535
  %v537 = vlaneseq
  %v538 = vshrl.u32 %v537, 7
  %v539 = vsub.s32 6, %v538
  %v540 = vrot.slane %v506, %v539
  %v541 = vlaneseq
  %v542 = vshrl.u32 %v541, 7
  %v543 = vsub.s32 7, %v542
  %v544 = vrot.slane %v506, %v543
  %v545 = vlaneseq
  %v546 = vshrl.u32 %v545, 7
  %v547 = vsub.s32 0, %v546
  %v548 = vrot.slane %v510, %v547
  %v549 = vlaneseq
  %v550 = vshrl.u32 %v549, 7
  %v551 = vsub.s32 1, %v550
  %v552 = vrot.slane %v510, %v551
  %v553 = vlaneseq
  %v554 = vshrl.u32 %v553, 7
  %v555 = vsub.s32 2, %v554
  %v556 = vrot.slane %v510, %v555
  %v557 = vlaneseq
  %v558 = vshrl.u32 %v557, 7
  %v559 = vsub.s32 3, %v558
  %v560 = vrot.slane %v510, %v559
  %v561 = vlaneseq
  %v562 = vshrl.u32 %v561, 7
  %v563 = vsub.s32 4, %v562
  %v564 = vrot.slane %v510, %v563
  %v565 = vlaneseq
  %v566 = vshrl.u32 %v565, 7
  %v567 = vsub.s32 5, %v566
  %v568 = vrot.slane %v510, %v567
  %v569 = vcombine.low %v516, %v520
  %v570 = vcombine.low %v524, %v528
  %v571 = vcombine.low %v532, %v536
  %v572 = vcombine.low %v540, %v544
  %v573 = vcombine.low %v548, %v552
  %v574 = vcombine.low %v556, %v560
  %v575 = vcombine.low %v564, %v568
  %576 = vrot.lane.b32.xlu0 %v569, 2
  %v577 = vpop.permute.xlu0 %576
  %578 = vrot.lane.b32.xlu0 %v570, 2
  %v579 = vpop.permute.xlu0 %578
  %580 = vrot.lane.b32.xlu0 %v571, 2
  %v581 = vpop.permute.xlu0 %580
  %582 = vrot.lane.b32.xlu0 %v572, 2
  %v583 = vpop.permute.xlu0 %582
  %584 = vrot.lane.b32.xlu0 %v573, 2
  %v585 = vpop.permute.xlu0 %584
  %586 = vrot.lane.b32.xlu0 %v574, 2
  %v587 = vpop.permute.xlu0 %586
  %588 = vrot.lane.b32.xlu0 %v575, 2
  %v589 = vpop.permute.xlu0 %588
  %v590 = vrot.slane %v577, 4
  %v591 = vrot.slane %v579, 4
  %v592 = vrot.slane %v581, 4
  %v593 = vrot.slane %v583, 4
  %v594 = vrot.slane %v585, 4
  %v595 = vrot.slane %v587, 4
  %v596 = vrot.slane %v589, 4
  %vm597 = vcmask 15360
  %v598 = vsel %vm597, %v590, %v577
  %v599 = vsel %vm98, %v590, %v591
  %v600 = vsel %vm597, %v599, %v579
  %v601 = vsel %vm98, %v591, %v592
  %v602 = vsel %vm597, %v601, %v581
  %v603 = vsel %vm98, %v592, %v593
  %v604 = vsel %vm597, %v603, %v583
  %v605 = vsel %vm98, %v593, %v594
  %v606 = vsel %vm597, %v605, %v585
  %v607 = vsel %vm98, %v594, %v595
  %v608 = vsel %vm597, %v607, %v587
  %v609 = vsel %vm98, %v595, %v596
  %v610 = vsel %vm597, %v609, %v589
  %v619 = vmul.f32 %v495, %v598
  %v620 = vmul.f32 %v496, %v600
  %v621 = vmul.f32 %v497, %v602
  %v622 = vmul.f32 %v498, %v604
  %v623 = vmul.f32 %v499, %v606
  %v624 = vmul.f32 %v500, %v608
  %v625 = vmul.f32 %v501, %v610
  %v626 = vmul.f32 %v502, %v596
  %v635 = vcombine.high %v619, %v619
  %v636 = vcombine.high %v620, %v620
  %v637 = vcombine.high %v621, %v621
  %v638 = vcombine.high %v622, %v622
  %v639 = vcombine.high %v623, %v623
  %v640 = vcombine.high %v624, %v624
  %v641 = vcombine.high %v625, %v625
  %v642 = vrot.slane %v619, 2
  %v643 = vrot.slane %v635, 2
  %v644 = vrot.slane %v620, 2
  %v645 = vrot.slane %v636, 2
  %v646 = vrot.slane %v621, 2
  %v647 = vrot.slane %v637, 2
  %v648 = vrot.slane %v622, 2
  %v649 = vrot.slane %v638, 2
  %v650 = vrot.slane %v623, 2
  %v651 = vrot.slane %v639, 2
  %v652 = vrot.slane %v624, 2
  %v653 = vrot.slane %v640, 2
  %v654 = vrot.slane %v625, 2
  %v655 = vrot.slane %v641, 2
  %v656 = vrot.slane %v626, 2
  %657 = vrot.lane.b32.xlu0 %v642, 126
  %v658 = vpop.permute.xlu0 %657
  %659 = vrot.lane.b32.xlu0 %v643, 126
  %v660 = vpop.permute.xlu0 %659
  %661 = vrot.lane.b32.xlu0 %v644, 126
  %v662 = vpop.permute.xlu0 %661
  %663 = vrot.lane.b32.xlu0 %v645, 126
  %v664 = vpop.permute.xlu0 %663
  %665 = vrot.lane.b32.xlu0 %v646, 126
  %v666 = vpop.permute.xlu0 %665
  %667 = vrot.lane.b32.xlu0 %v647, 126
  %v668 = vpop.permute.xlu0 %667
  %669 = vrot.lane.b32.xlu0 %v648, 126
  %v670 = vpop.permute.xlu0 %669
  %671 = vrot.lane.b32.xlu0 %v649, 126
  %v672 = vpop.permute.xlu0 %671
  %673 = vrot.lane.b32.xlu0 %v650, 126
  %v674 = vpop.permute.xlu0 %673
  %675 = vrot.lane.b32.xlu0 %v651, 126
  %v676 = vpop.permute.xlu0 %675
  %677 = vrot.lane.b32.xlu0 %v652, 126
  %v678 = vpop.permute.xlu0 %677
  %679 = vrot.lane.b32.xlu0 %v653, 126
  %v680 = vpop.permute.xlu0 %679
  %681 = vrot.lane.b32.xlu0 %v654, 126
  %v682 = vpop.permute.xlu0 %681
  %683 = vrot.lane.b32.xlu0 %v655, 126
  %v684 = vpop.permute.xlu0 %683
  %685 = vrot.lane.b32.xlu0 %v656, 126
  %v686 = vpop.permute.xlu0 %685
  %vm687 = vcmask 1031168
  %v688 = vsel %vm687, %v658, %v660
  %v689 = vsel %vm687, %v660, %v662
  %v690 = vsel %vm687, %v662, %v664
  %v691 = vsel %vm687, %v664, %v666
  %v692 = vsel %vm687, %v666, %v668
  %v693 = vsel %vm687, %v668, %v670
  %v694 = vsel %vm687, %v670, %v672
  %v695 = vsel %vm687, %v672, %v674
  %v696 = vsel %vm687, %v674, %v676
  %v697 = vsel %vm687, %v676, %v678
  %v698 = vsel %vm687, %v678, %v680
  %v699 = vsel %vm687, %v680, %v682
  %v700 = vsel %vm687, %v682, %v684
  %v701 = vsel %vm687, %v684, %v686
  %716 = vst [vmem:[#allocation3] sm:$0xc0] %v688
  %717 = vst [vmem:[#allocation3 + $0x8] sm:$0xc0] %v689
  %718 = vst [vmem:[#allocation3 + $0x10] sm:$0xc0] %v690
  %719 = vst [vmem:[#allocation3 + $0x18] sm:$0xc0] %v691
  %720 = vst [vmem:[#allocation3 + $0x20] sm:$0xc0] %v692
  %721 = vst [vmem:[#allocation3 + $0x28] sm:$0xc0] %v693
  %722 = vst [vmem:[#allocation3 + $0x30] sm:$0xc0] %v694
  %723 = vst [vmem:[#allocation3 + $0x38] sm:$0xc0] %v695
  %724 = vst [vmem:[#allocation3 + $0x40] sm:$0xc0] %v696
  %725 = vst [vmem:[#allocation3 + $0x48] sm:$0xc0] %v697
  %726 = vst [vmem:[#allocation3 + $0x50] sm:$0xc0] %v698
  %727 = vst [vmem:[#allocation3 + $0x58] sm:$0xc0] %v699
  %728 = vst [vmem:[#allocation3 + $0x60] sm:$0xc0] %v700
  %729 = vst [vmem:[#allocation3 + $0x68] sm:$0xc0] %v701
  %730 = vst [vmem:[#allocation3 + $0x70] sm:$0x1] %v688
  %731 = vst [vmem:[#allocation3 + $0x78] sm:$0x1] %v689
  %732 = vst [vmem:[#allocation3 + $0x80] sm:$0x1] %v690
  %733 = vst [vmem:[#allocation3 + $0x88] sm:$0x1] %v691
  %734 = vst [vmem:[#allocation3 + $0x90] sm:$0x1] %v692
  %735 = vst [vmem:[#allocation3 + $0x98] sm:$0x1] %v693
  %736 = vst [vmem:[#allocation3 + $0xa0] sm:$0x1] %v694
  %737 = vst [vmem:[#allocation3 + $0xa8] sm:$0x1] %v695
  %738 = vst [vmem:[#allocation3 + $0xb0] sm:$0x1] %v696
  %739 = vst [vmem:[#allocation3 + $0xb8] sm:$0x1] %v697
  %740 = vst [vmem:[#allocation3 + $0xc0] sm:$0x1] %v698
  %741 = vst [vmem:[#allocation3 + $0xc8] sm:$0x1] %v699
  %742 = vst [vmem:[#allocation3 + $0xd0] sm:$0x1] %v700
  %743 = vst [vmem:[#allocation3 + $0xd8] sm:$0x1] %v701
  %v744 = vld [vmem:[#allocation2] sm:$0x77]
  %v745 = vld [vmem:[#allocation2 + $0x8] sm:$0x77]
  %v746 = vld [vmem:[#allocation2 + $0x10] sm:$0x77]
  %v747 = vld [vmem:[#allocation2 + $0x18] sm:$0x77]
  %v748 = vld [vmem:[#allocation2 + $0x20] sm:$0x77]
  %v749 = vld [vmem:[#allocation2 + $0x28] sm:$0x77]
  %v750 = vld [vmem:[#allocation2 + $0x30] sm:$0x77]
  %v751 = vld [vmem:[#allocation2 + $0x38] sm:$0x7]
  %s752 = scalar_lea.vmem %s10, 3
  %v753 = vld [vmem:[%s752] ss:$8 sm:$0xf]
  %v754 = vld [vmem:[%s752] ss:$8 sm:$0xf0]
  %v755 = vor.u32 %v753, %v754
  %s756 = scalar_lea.vmem %s10, 67
  %v757 = vld [vmem:[%s756] ss:$8 sm:$0xf]
  %v758 = vld [vmem:[%s756] ss:$8 sm:$0x30]
  %v759 = vor.u32 %v757, %v758
  %v762 = vlaneseq
  %v763 = vshrl.u32 %v762, 7
  %v764 = vsub.s32 0, %v763
  %v765 = vrot.slane %v755, %v764
  %v766 = vlaneseq
  %v767 = vshrl.u32 %v766, 7
  %v768 = vsub.s32 1, %v767
  %v769 = vrot.slane %v755, %v768
  %v770 = vlaneseq
  %v771 = vshrl.u32 %v770, 7
  %v772 = vsub.s32 2, %v771
  %v773 = vrot.slane %v755, %v772
  %v774 = vlaneseq
  %v775 = vshrl.u32 %v774, 7
  %v776 = vsub.s32 3, %v775
  %v777 = vrot.slane %v755, %v776
  %v778 = vlaneseq
  %v779 = vshrl.u32 %v778, 7
  %v780 = vsub.s32 4, %v779
  %v781 = vrot.slane %v755, %v780
  %v782 = vlaneseq
  %v783 = vshrl.u32 %v782, 7
  %v784 = vsub.s32 5, %v783
  %v785 = vrot.slane %v755, %v784
  %v786 = vlaneseq
  %v787 = vshrl.u32 %v786, 7
  %v788 = vsub.s32 6, %v787
  %v789 = vrot.slane %v755, %v788
  %v790 = vlaneseq
  %v791 = vshrl.u32 %v790, 7
  %v792 = vsub.s32 7, %v791
  %v793 = vrot.slane %v755, %v792
  %v794 = vlaneseq
  %v795 = vshrl.u32 %v794, 7
  %v796 = vsub.s32 0, %v795
  %v797 = vrot.slane %v759, %v796
  %v798 = vlaneseq
  %v799 = vshrl.u32 %v798, 7
  %v800 = vsub.s32 1, %v799
  %v801 = vrot.slane %v759, %v800
  %v802 = vlaneseq
  %v803 = vshrl.u32 %v802, 7
  %v804 = vsub.s32 2, %v803
  %v805 = vrot.slane %v759, %v804
  %v806 = vlaneseq
  %v807 = vshrl.u32 %v806, 7
  %v808 = vsub.s32 3, %v807
  %v809 = vrot.slane %v759, %v808
  %v810 = vlaneseq
  %v811 = vshrl.u32 %v810, 7
  %v812 = vsub.s32 4, %v811
  %v813 = vrot.slane %v759, %v812
  %v814 = vlaneseq
  %v815 = vshrl.u32 %v814, 7
  %v816 = vsub.s32 5, %v815
  %v817 = vrot.slane %v759, %v816
  %v818 = vcombine.low %v765, %v769
  %v819 = vcombine.low %v773, %v777
  %v820 = vcombine.low %v781, %v785
  %v821 = vcombine.low %v789, %v793
  %v822 = vcombine.low %v797, %v801
  %v823 = vcombine.low %v805, %v809
  %v824 = vcombine.low %v813, %v817
  %825 = vrot.lane.b32.xlu0 %v818, 16
  %v826 = vpop.permute.xlu0 %825
  %827 = vrot.lane.b32.xlu0 %v819, 16
  %v828 = vpop.permute.xlu0 %827
  %829 = vrot.lane.b32.xlu0 %v820, 16
  %v830 = vpop.permute.xlu0 %829
  %831 = vrot.lane.b32.xlu0 %v821, 16
  %v832 = vpop.permute.xlu0 %831
  %833 = vrot.lane.b32.xlu0 %v822, 16
  %v834 = vpop.permute.xlu0 %833
  %835 = vrot.lane.b32.xlu0 %v823, 16
  %v836 = vpop.permute.xlu0 %835
  %837 = vrot.lane.b32.xlu0 %v824, 16
  %v838 = vpop.permute.xlu0 %837
  %v839 = vrot.slane %v826, 4
  %v840 = vrot.slane %v828, 4
  %v841 = vrot.slane %v830, 4
  %v842 = vrot.slane %v832, 4
  %v843 = vrot.slane %v834, 4
  %v844 = vrot.slane %v836, 4
  %v845 = vrot.slane %v838, 4
  %vm846 = vcmask 130048
  %v847 = vsel %vm846, %v839, %v826
  %v848 = vsel %vm98, %v839, %v840
  %v849 = vsel %vm846, %v848, %v828
  %v850 = vsel %vm98, %v840, %v841
  %v851 = vsel %vm846, %v850, %v830
  %v852 = vsel %vm98, %v841, %v842
  %v853 = vsel %vm846, %v852, %v832
  %v854 = vsel %vm98, %v842, %v843
  %v855 = vsel %vm846, %v854, %v834
  %v856 = vsel %vm98, %v843, %v844
  %v857 = vsel %vm846, %v856, %v836
  %v858 = vsel %vm98, %v844, %v845
  %v859 = vsel %vm846, %v858, %v838
  %v868 = vmul.f32 %v744, %v847
  %v869 = vmul.f32 %v745, %v849
  %v870 = vmul.f32 %v746, %v851
  %v871 = vmul.f32 %v747, %v853
  %v872 = vmul.f32 %v748, %v855
  %v873 = vmul.f32 %v749, %v857
  %v874 = vmul.f32 %v750, %v859
  %v875 = vmul.f32 %v751, %v845
  %v884 = vcombine.high %v868, %v868
  %v885 = vcombine.high %v869, %v869
  %v886 = vcombine.high %v870, %v870
  %v887 = vcombine.high %v871, %v871
  %v888 = vcombine.high %v872, %v872
  %v889 = vcombine.high %v873, %v873
  %v890 = vcombine.high %v874, %v874
  %v891 = vrot.slane %v868, 7
  %v892 = vrot.slane %v884, 7
  %v893 = vrot.slane %v869, 7
  %v894 = vrot.slane %v885, 7
  %v895 = vrot.slane %v870, 7
  %v896 = vrot.slane %v886, 7
  %v897 = vrot.slane %v871, 7
  %v898 = vrot.slane %v887, 7
  %v899 = vrot.slane %v872, 7
  %v900 = vrot.slane %v888, 7
  %v901 = vrot.slane %v873, 7
  %v902 = vrot.slane %v889, 7
  %v903 = vrot.slane %v874, 7
  %v904 = vrot.slane %v890, 7
  %v905 = vrot.slane %v875, 7
  %906 = vrot.lane.b32.xlu0 %v891, 112
  %v907 = vpop.permute.xlu0 %906
  %908 = vrot.lane.b32.xlu0 %v892, 112
  %v909 = vpop.permute.xlu0 %908
  %910 = vrot.lane.b32.xlu0 %v893, 112
  %v911 = vpop.permute.xlu0 %910
  %912 = vrot.lane.b32.xlu0 %v894, 112
  %v913 = vpop.permute.xlu0 %912
  %914 = vrot.lane.b32.xlu0 %v895, 112
  %v915 = vpop.permute.xlu0 %914
  %916 = vrot.lane.b32.xlu0 %v896, 112
  %v917 = vpop.permute.xlu0 %916
  %918 = vrot.lane.b32.xlu0 %v897, 112
  %v919 = vpop.permute.xlu0 %918
  %920 = vrot.lane.b32.xlu0 %v898, 112
  %v921 = vpop.permute.xlu0 %920
  %922 = vrot.lane.b32.xlu0 %v899, 112
  %v923 = vpop.permute.xlu0 %922
  %924 = vrot.lane.b32.xlu0 %v900, 112
  %v925 = vpop.permute.xlu0 %924
  %926 = vrot.lane.b32.xlu0 %v901, 112
  %v927 = vpop.permute.xlu0 %926
  %928 = vrot.lane.b32.xlu0 %v902, 112
  %v929 = vpop.permute.xlu0 %928
  %930 = vrot.lane.b32.xlu0 %v903, 112
  %v931 = vpop.permute.xlu0 %930
  %932 = vrot.lane.b32.xlu0 %v904, 112
  %v933 = vpop.permute.xlu0 %932
  %934 = vrot.lane.b32.xlu0 %v905, 112
  %v935 = vpop.permute.xlu0 %934
  %vm936 = vcmask 916480
  %v937 = vsel %vm936, %v907, %v909
  %v938 = vsel %vm936, %v909, %v911
  %v939 = vsel %vm936, %v911, %v913
  %v940 = vsel %vm936, %v913, %v915
  %v941 = vsel %vm936, %v915, %v917
  %v942 = vsel %vm936, %v917, %v919
  %v943 = vsel %vm936, %v919, %v921
  %v944 = vsel %vm936, %v921, %v923
  %v945 = vsel %vm936, %v923, %v925
  %v946 = vsel %vm936, %v925, %v927
  %v947 = vsel %vm936, %v927, %v929
  %v948 = vsel %vm936, %v929, %v931
  %v949 = vsel %vm936, %v931, %v933
  %v950 = vsel %vm936, %v933, %v935
  %965 = vst [vmem:[#allocation3 + $0x70] sm:$0xe] %v937
  %966 = vst [vmem:[#allocation3 + $0x78] sm:$0xe] %v938
  %967 = vst [vmem:[#allocation3 + $0x80] sm:$0xe] %v939
  %968 = vst [vmem:[#allocation3 + $0x88] sm:$0xe] %v940
  %969 = vst [vmem:[#allocation3 + $0x90] sm:$0xe] %v941
  %970 = vst [vmem:[#allocation3 + $0x98] sm:$0xe] %v942
  %971 = vst [vmem:[#allocation3 + $0xa0] sm:$0xe] %v943
  %972 = vst [vmem:[#allocation3 + $0xa8] sm:$0xe] %v944
  %973 = vst [vmem:[#allocation3 + $0xb0] sm:$0xe] %v945
  %974 = vst [vmem:[#allocation3 + $0xb8] sm:$0xe] %v946
  %975 = vst [vmem:[#allocation3 + $0xc0] sm:$0xe] %v947
  %976 = vst [vmem:[#allocation3 + $0xc8] sm:$0xe] %v948
  %977 = vst [vmem:[#allocation3 + $0xd0] sm:$0xe] %v949
  %978 = vst [vmem:[#allocation3 + $0xd8] sm:$0xe] %v950
  %v979 = vcombine.low %v59, %v59
  %v980 = vcombine.low %v60, %v60
  %v981 = vcombine.low %v61, %v61
  %v982 = vcombine.low %v62, %v62
  %v983 = vcombine.low %v63, %v63
  %v984 = vcombine.low %v64, %v64
  %v985 = vcombine.low %v65, %v65
  %993 = vst [vmem:[#allocation3 + $0x70] sm:$0x70] %v979
  %994 = vst [vmem:[#allocation3 + $0x78] sm:$0x70] %v59
  %995 = vst [vmem:[#allocation3 + $0x80] sm:$0x70] %v980
  %996 = vst [vmem:[#allocation3 + $0x88] sm:$0x70] %v60
  %997 = vst [vmem:[#allocation3 + $0x90] sm:$0x70] %v981
  %998 = vst [vmem:[#allocation3 + $0x98] sm:$0x70] %v61
  %999 = vst [vmem:[#allocation3 + $0xa0] sm:$0x70] %v982
  %1000 = vst [vmem:[#allocation3 + $0xa8] sm:$0x70] %v62
  %1001 = vst [vmem:[#allocation3 + $0xb0] sm:$0x70] %v983
  %1002 = vst [vmem:[#allocation3 + $0xb8] sm:$0x70] %v63
  %1003 = vst [vmem:[#allocation3 + $0xc0] sm:$0x70] %v984
  %1004 = vst [vmem:[#allocation3 + $0xc8] sm:$0x70] %v64
  %1005 = vst [vmem:[#allocation3 + $0xd0] sm:$0x70] %v985
  %1006 = vst [vmem:[#allocation3 + $0xd8] sm:$0x70] %v65
  %v1007 = vld [vmem:[#allocation2] sm:$0x77]
  %v1008 = vld [vmem:[#allocation2 + $0x8] sm:$0x77]
  %v1009 = vld [vmem:[#allocation2 + $0x10] sm:$0x77]
  %v1010 = vld [vmem:[#allocation2 + $0x18] sm:$0x77]
  %v1011 = vld [vmem:[#allocation2 + $0x20] sm:$0x77]
  %v1012 = vld [vmem:[#allocation2 + $0x28] sm:$0x77]
  %v1013 = vld [vmem:[#allocation2 + $0x30] sm:$0x77]
  %v1014 = vld [vmem:[#allocation2 + $0x38] sm:$0x7]
  %s1015 = scalar_lea.vmem %s10, 5
  %v1016 = vld [vmem:[%s1015] ss:$8 sm:$0xf]
  %v1017 = vld [vmem:[%s1015] ss:$8 sm:$0xf0]
  %v1018 = vor.u32 %v1016, %v1017
  %s1019 = scalar_lea.vmem %s10, 69
  %v1020 = vld [vmem:[%s1019] ss:$8 sm:$0xf]
  %v1021 = vld [vmem:[%s1019] ss:$8 sm:$0x30]
  %v1022 = vor.u32 %v1020, %v1021
  %v1025 = vlaneseq
  %v1026 = vshrl.u32 %v1025, 7
  %v1027 = vsub.s32 0, %v1026
  %v1028 = vrot.slane %v1018, %v1027
  %v1029 = vlaneseq
  %v1030 = vshrl.u32 %v1029, 7
  %v1031 = vsub.s32 1, %v1030
  %v1032 = vrot.slane %v1018, %v1031
  %v1033 = vlaneseq
  %v1034 = vshrl.u32 %v1033, 7
  %v1035 = vsub.s32 2, %v1034
  %v1036 = vrot.slane %v1018, %v1035
  %v1037 = vlaneseq
  %v1038 = vshrl.u32 %v1037, 7
  %v1039 = vsub.s32 3, %v1038
  %v1040 = vrot.slane %v1018, %v1039
  %v1041 = vlaneseq
  %v1042 = vshrl.u32 %v1041, 7
  %v1043 = vsub.s32 4, %v1042
  %v1044 = vrot.slane %v1018, %v1043
  %v1045 = vlaneseq
  %v1046 = vshrl.u32 %v1045, 7
  %v1047 = vsub.s32 5, %v1046
  %v1048 = vrot.slane %v1018, %v1047
  %v1049 = vlaneseq
  %v1050 = vshrl.u32 %v1049, 7
  %v1051 = vsub.s32 6, %v1050
  %v1052 = vrot.slane %v1018, %v1051
  %v1053 = vlaneseq
  %v1054 = vshrl.u32 %v1053, 7
  %v1055 = vsub.s32 7, %v1054
  %v1056 = vrot.slane %v1018, %v1055
  %v1057 = vlaneseq
  %v1058 = vshrl.u32 %v1057, 7
  %v1059 = vsub.s32 0, %v1058
  %v1060 = vrot.slane %v1022, %v1059
  %v1061 = vlaneseq
  %v1062 = vshrl.u32 %v1061, 7
  %v1063 = vsub.s32 1, %v1062
  %v1064 = vrot.slane %v1022, %v1063
  %v1065 = vlaneseq
  %v1066 = vshrl.u32 %v1065, 7
  %v1067 = vsub.s32 2, %v1066
  %v1068 = vrot.slane %v1022, %v1067
  %v1069 = vlaneseq
  %v1070 = vshrl.u32 %v1069, 7
  %v1071 = vsub.s32 3, %v1070
  %v1072 = vrot.slane %v1022, %v1071
  %v1073 = vlaneseq
  %v1074 = vshrl.u32 %v1073, 7
  %v1075 = vsub.s32 4, %v1074
  %v1076 = vrot.slane %v1022, %v1075
  %v1077 = vlaneseq
  %v1078 = vshrl.u32 %v1077, 7
  %v1079 = vsub.s32 5, %v1078
  %v1080 = vrot.slane %v1022, %v1079
  %v1081 = vcombine.low %v1028, %v1032
  %v1082 = vcombine.low %v1036, %v1040
  %v1083 = vcombine.low %v1044, %v1048
  %v1084 = vcombine.low %v1052, %v1056
  %v1085 = vcombine.low %v1060, %v1064
  %v1086 = vcombine.low %v1068, %v1072
  %v1087 = vcombine.low %v1076, %v1080
  %1088 = vrot.lane.b32.xlu0 %v1081, 18
  %v1089 = vpop.permute.xlu0 %1088
  %1090 = vrot.lane.b32.xlu0 %v1082, 18
  %v1091 = vpop.permute.xlu0 %1090
  %1092 = vrot.lane.b32.xlu0 %v1083, 18
  %v1093 = vpop.permute.xlu0 %1092
  %1094 = vrot.lane.b32.xlu0 %v1084, 18
  %v1095 = vpop.permute.xlu0 %1094
  %1096 = vrot.lane.b32.xlu0 %v1085, 18
  %v1097 = vpop.permute.xlu0 %1096
  %1098 = vrot.lane.b32.xlu0 %v1086, 18
  %v1099 = vpop.permute.xlu0 %1098
  %1100 = vrot.lane.b32.xlu0 %v1087, 18
  %v1101 = vpop.permute.xlu0 %1100
  %v1102 = vrot.slane %v1089, 4
  %v1103 = vrot.slane %v1091, 4
  %v1104 = vrot.slane %v1093, 4
  %v1105 = vrot.slane %v1095, 4
  %v1106 = vrot.slane %v1097, 4
  %v1107 = vrot.slane %v1099, 4
  %v1108 = vrot.slane %v1101, 4
  %vm1109 = vcmask 146432
  %v1110 = vsel %vm1109, %v1102, %v1089
  %v1111 = vsel %vm98, %v1102, %v1103
  %v1112 = vsel %vm1109, %v1111, %v1091
  %v1113 = vsel %vm98, %v1103, %v1104
  %v1114 = vsel %vm1109, %v1113, %v1093
  %v1115 = vsel %vm98, %v1104, %v1105
  %v1116 = vsel %vm1109, %v1115, %v1095
  %v1117 = vsel %vm98, %v1105, %v1106
  %v1118 = vsel %vm1109, %v1117, %v1097
  %v1119 = vsel %vm98, %v1106, %v1107
  %v1120 = vsel %vm1109, %v1119, %v1099
  %v1121 = vsel %vm98, %v1107, %v1108
  %v1122 = vsel %vm1109, %v1121, %v1101
  %v1131 = vmul.f32 %v1007, %v1110
  %v1132 = vmul.f32 %v1008, %v1112
  %v1133 = vmul.f32 %v1009, %v1114
  %v1134 = vmul.f32 %v1010, %v1116
  %v1135 = vmul.f32 %v1011, %v1118
  %v1136 = vmul.f32 %v1012, %v1120
  %v1137 = vmul.f32 %v1013, %v1122
  %v1138 = vmul.f32 %v1014, %v1108
  %v1147 = vcombine.high %v1131, %v1131
  %v1148 = vcombine.high %v1132, %v1132
  %v1149 = vcombine.high %v1133, %v1133
  %v1150 = vcombine.high %v1134, %v1134
  %v1151 = vcombine.high %v1135, %v1135
  %v1152 = vcombine.high %v1136, %v1136
  %v1153 = vcombine.high %v1137, %v1137
  %v1154 = vrot.slane %v1131, 1
  %v1155 = vrot.slane %v1147, 1
  %v1156 = vrot.slane %v1132, 1
  %v1157 = vrot.slane %v1148, 1
  %v1158 = vrot.slane %v1133, 1
  %v1159 = vrot.slane %v1149, 1
  %v1160 = vrot.slane %v1134, 1
  %v1161 = vrot.slane %v1150, 1
  %v1162 = vrot.slane %v1135, 1
  %v1163 = vrot.slane %v1151, 1
  %v1164 = vrot.slane %v1136, 1
  %v1165 = vrot.slane %v1152, 1
  %v1166 = vrot.slane %v1137, 1
  %v1167 = vrot.slane %v1153, 1
  %v1168 = vrot.slane %v1138, 1
  %1169 = vrot.lane.b32.xlu0 %v1154, 110
  %v1170 = vpop.permute.xlu0 %1169
  %1171 = vrot.lane.b32.xlu0 %v1155, 110
  %v1172 = vpop.permute.xlu0 %1171
  %1173 = vrot.lane.b32.xlu0 %v1156, 110
  %v1174 = vpop.permute.xlu0 %1173
  %1175 = vrot.lane.b32.xlu0 %v1157, 110
  %v1176 = vpop.permute.xlu0 %1175
  %1177 = vrot.lane.b32.xlu0 %v1158, 110
  %v1178 = vpop.permute.xlu0 %1177
  %1179 = vrot.lane.b32.xlu0 %v1159, 110
  %v1180 = vpop.permute.xlu0 %1179
  %1181 = vrot.lane.b32.xlu0 %v1160, 110
  %v1182 = vpop.permute.xlu0 %1181
  %1183 = vrot.lane.b32.xlu0 %v1161, 110
  %v1184 = vpop.permute.xlu0 %1183
  %1185 = vrot.lane.b32.xlu0 %v1162, 110
  %v1186 = vpop.permute.xlu0 %1185
  %1187 = vrot.lane.b32.xlu0 %v1163, 110
  %v1188 = vpop.permute.xlu0 %1187
  %1189 = vrot.lane.b32.xlu0 %v1164, 110
  %v1190 = vpop.permute.xlu0 %1189
  %1191 = vrot.lane.b32.xlu0 %v1165, 110
  %v1192 = vpop.permute.xlu0 %1191
  %1193 = vrot.lane.b32.xlu0 %v1166, 110
  %v1194 = vpop.permute.xlu0 %1193
  %1195 = vrot.lane.b32.xlu0 %v1167, 110
  %v1196 = vpop.permute.xlu0 %1195
  %1197 = vrot.lane.b32.xlu0 %v1168, 110
  %v1198 = vpop.permute.xlu0 %1197
  %vm1199 = vcmask 900096
  %v1200 = vsel %vm1199, %v1170, %v1172
  %v1201 = vsel %vm1199, %v1172, %v1174
  %v1202 = vsel %vm1199, %v1174, %v1176
  %v1203 = vsel %vm1199, %v1176, %v1178
  %v1204 = vsel %vm1199, %v1178, %v1180
  %v1205 = vsel %vm1199, %v1180, %v1182
  %v1206 = vsel %vm1199, %v1182, %v1184
  %v1207 = vsel %vm1199, %v1184, %v1186
  %v1208 = vsel %vm1199, %v1186, %v1188
  %v1209 = vsel %vm1199, %v1188, %v1190
  %v1210 = vsel %vm1199, %v1190, %v1192
  %v1211 = vsel %vm1199, %v1192, %v1194
  %v1212 = vsel %vm1199, %v1194, %v1196
  %v1213 = vsel %vm1199, %v1196, %v1198
  %1228 = vst [vmem:[#allocation3 + $0x70] sm:$0x80] %v1200
  %1229 = vst [vmem:[#allocation3 + $0x78] sm:$0x80] %v1201
  %1230 = vst [vmem:[#allocation3 + $0x80] sm:$0x80] %v1202
  %1231 = vst [vmem:[#allocation3 + $0x88] sm:$0x80] %v1203
  %1232 = vst [vmem:[#allocation3 + $0x90] sm:$0x80] %v1204
  %1233 = vst [vmem:[#allocation3 + $0x98] sm:$0x80] %v1205
  %1234 = vst [vmem:[#allocation3 + $0xa0] sm:$0x80] %v1206
  %1235 = vst [vmem:[#allocation3 + $0xa8] sm:$0x80] %v1207
  %1236 = vst [vmem:[#allocation3 + $0xb0] sm:$0x80] %v1208
  %1237 = vst [vmem:[#allocation3 + $0xb8] sm:$0x80] %v1209
  %1238 = vst [vmem:[#allocation3 + $0xc0] sm:$0x80] %v1210
  %1239 = vst [vmem:[#allocation3 + $0xc8] sm:$0x80] %v1211
  %1240 = vst [vmem:[#allocation3 + $0xd0] sm:$0x80] %v1212
  %1241 = vst [vmem:[#allocation3 + $0xd8] sm:$0x80] %v1213
  %1242 = vst [vmem:[#allocation3 + $0xe0] sm:$0x3] %v1200
  %1243 = vst [vmem:[#allocation3 + $0xe8] sm:$0x3] %v1201
  %1244 = vst [vmem:[#allocation3 + $0xf0] sm:$0x3] %v1202
  %1245 = vst [vmem:[#allocation3 + $0xf8] sm:$0x3] %v1203
  %1246 = vst [vmem:[#allocation3 + $0x100] sm:$0x3] %v1204
  %1247 = vst [vmem:[#allocation3 + $0x108] sm:$0x3] %v1205
  %1248 = vst [vmem:[#allocation3 + $0x110] sm:$0x3] %v1206
  %1249 = vst [vmem:[#allocation3 + $0x118] sm:$0x3] %v1207
  %1250 = vst [vmem:[#allocation3 + $0x120] sm:$0x3] %v1208
  %1251 = vst [vmem:[#allocation3 + $0x128] sm:$0x3] %v1209
  %1252 = vst [vmem:[#allocation3 + $0x130] sm:$0x3] %v1210
  %1253 = vst [vmem:[#allocation3 + $0x138] sm:$0x3] %v1211
  %1254 = vst [vmem:[#allocation3 + $0x140] sm:$0x3] %v1212
  %1255 = vst [vmem:[#allocation3 + $0x148] sm:$0x3] %v1213
  %v1256 = vld [vmem:[#allocation2] sm:$0x77]
  %v1257 = vld [vmem:[#allocation2 + $0x8] sm:$0x77]
  %v1258 = vld [vmem:[#allocation2 + $0x10] sm:$0x77]
  %v1259 = vld [vmem:[#allocation2 + $0x18] sm:$0x77]
  %v1260 = vld [vmem:[#allocation2 + $0x20] sm:$0x77]
  %v1261 = vld [vmem:[#allocation2 + $0x28] sm:$0x77]
  %v1262 = vld [vmem:[#allocation2 + $0x30] sm:$0x77]
  %v1263 = vld [vmem:[#allocation2 + $0x38] sm:$0x7]
  %s1264 = scalar_lea.vmem %s10, 6
  %v1265 = vld [vmem:[%s1264] ss:$8 sm:$0xf]
  %v1266 = vld [vmem:[%s1264] ss:$8 sm:$0xf0]
  %v1267 = vor.u32 %v1265, %v1266
  %s1268 = scalar_lea.vmem %s10, 70
  %v1269 = vld [vmem:[%s1268] ss:$8 sm:$0xf]
  %v1270 = vld [vmem:[%s1268] ss:$8 sm:$0x30]
  %v1271 = vor.u32 %v1269, %v1270
  %v1274 = vlaneseq
  %v1275 = vshrl.u32 %v1274, 7
  %v1276 = vsub.s32 0, %v1275
  %v1277 = vrot.slane %v1267, %v1276
  %v1278 = vlaneseq
  %v1279 = vshrl.u32 %v1278, 7
  %v1280 = vsub.s32 1, %v1279
  %v1281 = vrot.slane %v1267, %v1280
  %v1282 = vlaneseq
  %v1283 = vshrl.u32 %v1282, 7
  %v1284 = vsub.s32 2, %v1283
  %v1285 = vrot.slane %v1267, %v1284
  %v1286 = vlaneseq
  %v1287 = vshrl.u32 %v1286, 7
  %v1288 = vsub.s32 3, %v1287
  %v1289 = vrot.slane %v1267, %v1288
  %v1290 = vlaneseq
  %v1291 = vshrl.u32 %v1290, 7
  %v1292 = vsub.s32 4, %v1291
  %v1293 = vrot.slane %v1267, %v1292
  %v1294 = vlaneseq
  %v1295 = vshrl.u32 %v1294, 7
  %v1296 = vsub.s32 5, %v1295
  %v1297 = vrot.slane %v1267, %v1296
  %v1298 = vlaneseq
  %v1299 = vshrl.u32 %v1298, 7
  %v1300 = vsub.s32 6, %v1299
  %v1301 = vrot.slane %v1267, %v1300
  %v1302 = vlaneseq
  %v1303 = vshrl.u32 %v1302, 7
  %v1304 = vsub.s32 7, %v1303
  %v1305 = vrot.slane %v1267, %v1304
  %v1306 = vlaneseq
  %v1307 = vshrl.u32 %v1306, 7
  %v1308 = vsub.s32 0, %v1307
  %v1309 = vrot.slane %v1271, %v1308
  %v1310 = vlaneseq
  %v1311 = vshrl.u32 %v1310, 7
  %v1312 = vsub.s32 1, %v1311
  %v1313 = vrot.slane %v1271, %v1312
  %v1314 = vlaneseq
  %v1315 = vshrl.u32 %v1314, 7
  %v1316 = vsub.s32 2, %v1315
  %v1317 = vrot.slane %v1271, %v1316
  %v1318 = vlaneseq
  %v1319 = vshrl.u32 %v1318, 7
  %v1320 = vsub.s32 3, %v1319
  %v1321 = vrot.slane %v1271, %v1320
  %v1322 = vlaneseq
  %v1323 = vshrl.u32 %v1322, 7
  %v1324 = vsub.s32 4, %v1323
  %v1325 = vrot.slane %v1271, %v1324
  %v1326 = vlaneseq
  %v1327 = vshrl.u32 %v1326, 7
  %v1328 = vsub.s32 5, %v1327
  %v1329 = vrot.slane %v1271, %v1328
  %v1330 = vcombine.low %v1277, %v1281
  %v1331 = vcombine.low %v1285, %v1289
  %v1332 = vcombine.low %v1293, %v1297
  %v1333 = vcombine.low %v1301, %v1305
  %v1334 = vcombine.low %v1309, %v1313
  %v1335 = vcombine.low %v1317, %v1321
  %v1336 = vcombine.low %v1325, %v1329
  %1337 = vrot.lane.b32.xlu0 %v1330, 32
  %v1338 = vpop.permute.xlu0 %1337
  %1339 = vrot.lane.b32.xlu0 %v1331, 32
  %v1340 = vpop.permute.xlu0 %1339
  %1341 = vrot.lane.b32.xlu0 %v1332, 32
  %v1342 = vpop.permute.xlu0 %1341
  %1343 = vrot.lane.b32.xlu0 %v1333, 32
  %v1344 = vpop.permute.xlu0 %1343
  %1345 = vrot.lane.b32.xlu0 %v1334, 32
  %v1346 = vpop.permute.xlu0 %1345
  %1347 = vrot.lane.b32.xlu0 %v1335, 32
  %v1348 = vpop.permute.xlu0 %1347
  %1349 = vrot.lane.b32.xlu0 %v1336, 32
  %v1350 = vpop.permute.xlu0 %1349
  %v1351 = vrot.slane %v1338, 4
  %v1352 = vrot.slane %v1340, 4
  %v1353 = vrot.slane %v1342, 4
  %v1354 = vrot.slane %v1344, 4
  %v1355 = vrot.slane %v1346, 4
  %v1356 = vrot.slane %v1348, 4
  %v1357 = vrot.slane %v1350, 4
  %vm1358 = vcmask 261120
  %v1359 = vsel %vm1358, %v1351, %v1338
  %v1360 = vsel %vm98, %v1351, %v1352
  %v1361 = vsel %vm1358, %v1360, %v1340
  %v1362 = vsel %vm98, %v1352, %v1353
  %v1363 = vsel %vm1358, %v1362, %v1342
  %v1364 = vsel %vm98, %v1353, %v1354
  %v1365 = vsel %vm1358, %v1364, %v1344
  %v1366 = vsel %vm98, %v1354, %v1355
  %v1367 = vsel %vm1358, %v1366, %v1346
  %v1368 = vsel %vm98, %v1355, %v1356
  %v1369 = vsel %vm1358, %v1368, %v1348
  %v1370 = vsel %vm98, %v1356, %v1357
  %v1371 = vsel %vm1358, %v1370, %v1350
  %v1380 = vmul.f32 %v1256, %v1359
  %v1381 = vmul.f32 %v1257, %v1361
  %v1382 = vmul.f32 %v1258, %v1363
  %v1383 = vmul.f32 %v1259, %v1365
  %v1384 = vmul.f32 %v1260, %v1367
  %v1385 = vmul.f32 %v1261, %v1369
  %v1386 = vmul.f32 %v1262, %v1371
  %v1387 = vmul.f32 %v1263, %v1357
  %v1396 = vcombine.high %v1380, %v1380
  %v1397 = vcombine.high %v1381, %v1381
  %v1398 = vcombine.high %v1382, %v1382
  %v1399 = vcombine.high %v1383, %v1383
  %v1400 = vcombine.high %v1384, %v1384
  %v1401 = vcombine.high %v1385, %v1385
  %v1402 = vcombine.high %v1386, %v1386
  %v1403 = vrot.slane %v1380, 6
  %v1404 = vrot.slane %v1396, 6
  %v1405 = vrot.slane %v1381, 6
  %v1406 = vrot.slane %v1397, 6
  %v1407 = vrot.slane %v1382, 6
  %v1408 = vrot.slane %v1398, 6
  %v1409 = vrot.slane %v1383, 6
  %v1410 = vrot.slane %v1399, 6
  %v1411 = vrot.slane %v1384, 6
  %v1412 = vrot.slane %v1400, 6
  %v1413 = vrot.slane %v1385, 6
  %v1414 = vrot.slane %v1401, 6
  %v1415 = vrot.slane %v1386, 6
  %v1416 = vrot.slane %v1402, 6
  %v1417 = vrot.slane %v1387, 6
  %1418 = vrot.lane.b32.xlu0 %v1403, 96
  %v1419 = vpop.permute.xlu0 %1418
  %1420 = vrot.lane.b32.xlu0 %v1404, 96
  %v1421 = vpop.permute.xlu0 %1420
  %1422 = vrot.lane.b32.xlu0 %v1405, 96
  %v1423 = vpop.permute.xlu0 %1422
  %1424 = vrot.lane.b32.xlu0 %v1406, 96
  %v1425 = vpop.permute.xlu0 %1424
  %1426 = vrot.lane.b32.xlu0 %v1407, 96
  %v1427 = vpop.permute.xlu0 %1426
  %1428 = vrot.lane.b32.xlu0 %v1408, 96
  %v1429 = vpop.permute.xlu0 %1428
  %1430 = vrot.lane.b32.xlu0 %v1409, 96
  %v1431 = vpop.permute.xlu0 %1430
  %1432 = vrot.lane.b32.xlu0 %v1410, 96
  %v1433 = vpop.permute.xlu0 %1432
  %1434 = vrot.lane.b32.xlu0 %v1411, 96
  %v1435 = vpop.permute.xlu0 %1434
  %1436 = vrot.lane.b32.xlu0 %v1412, 96
  %v1437 = vpop.permute.xlu0 %1436
  %1438 = vrot.lane.b32.xlu0 %v1413, 96
  %v1439 = vpop.permute.xlu0 %1438
  %1440 = vrot.lane.b32.xlu0 %v1414, 96
  %v1441 = vpop.permute.xlu0 %1440
  %1442 = vrot.lane.b32.xlu0 %v1415, 96
  %v1443 = vpop.permute.xlu0 %1442
  %1444 = vrot.lane.b32.xlu0 %v1416, 96
  %v1445 = vpop.permute.xlu0 %1444
  %1446 = vrot.lane.b32.xlu0 %v1417, 96
  %v1447 = vpop.permute.xlu0 %1446
  %vm1448 = vcmask 785408
  %v1449 = vsel %vm1448, %v1419, %v1421
  %v1450 = vsel %vm1448, %v1421, %v1423
  %v1451 = vsel %vm1448, %v1423, %v1425
  %v1452 = vsel %vm1448, %v1425, %v1427
  %v1453 = vsel %vm1448, %v1427, %v1429
  %v1454 = vsel %vm1448, %v1429, %v1431
  %v1455 = vsel %vm1448, %v1431, %v1433
  %v1456 = vsel %vm1448, %v1433, %v1435
  %v1457 = vsel %vm1448, %v1435, %v1437
  %v1458 = vsel %vm1448, %v1437, %v1439
  %v1459 = vsel %vm1448, %v1439, %v1441
  %v1460 = vsel %vm1448, %v1441, %v1443
  %v1461 = vsel %vm1448, %v1443, %v1445
  %v1462 = vsel %vm1448, %v1445, %v1447
  %1477 = vst [vmem:[#allocation3 + $0xe0] sm:$0x1c] %v1449
  %1478 = vst [vmem:[#allocation3 + $0xe8] sm:$0x1c] %v1450
  %1479 = vst [vmem:[#allocation3 + $0xf0] sm:$0x1c] %v1451
  %1480 = vst [vmem:[#allocation3 + $0xf8] sm:$0x1c] %v1452
  %1481 = vst [vmem:[#allocation3 + $0x100] sm:$0x1c] %v1453
  %1482 = vst [vmem:[#allocation3 + $0x108] sm:$0x1c] %v1454
  %1483 = vst [vmem:[#allocation3 + $0x110] sm:$0x1c] %v1455
  %1484 = vst [vmem:[#allocation3 + $0x118] sm:$0x1c] %v1456
  %1485 = vst [vmem:[#allocation3 + $0x120] sm:$0x1c] %v1457
  %1486 = vst [vmem:[#allocation3 + $0x128] sm:$0x1c] %v1458
  %1487 = vst [vmem:[#allocation3 + $0x130] sm:$0x1c] %v1459
  %1488 = vst [vmem:[#allocation3 + $0x138] sm:$0x1c] %v1460
  %1489 = vst [vmem:[#allocation3 + $0x140] sm:$0x1c] %v1461
  %1490 = vst [vmem:[#allocation3 + $0x148] sm:$0x1c] %v1462
  %v1491 = vld [vmem:[#allocation2] sm:$0x77]
  %v1492 = vld [vmem:[#allocation2 + $0x8] sm:$0x77]
  %v1493 = vld [vmem:[#allocation2 + $0x10] sm:$0x77]
  %v1494 = vld [vmem:[#allocation2 + $0x18] sm:$0x77]
  %v1495 = vld [vmem:[#allocation2 + $0x20] sm:$0x77]
  %v1496 = vld [vmem:[#allocation2 + $0x28] sm:$0x77]
  %v1497 = vld [vmem:[#allocation2 + $0x30] sm:$0x77]
  %v1498 = vld [vmem:[#allocation2 + $0x38] sm:$0x7]
  %s1499 = scalar_lea.vmem %s10, 7
  %v1500 = vld [vmem:[%s1499] ss:$8 sm:$0xf]
  %v1501 = vld [vmem:[%s1499] ss:$8 sm:$0xf0]
  %v1502 = vor.u32 %v1500, %v1501
  %s1503 = scalar_lea.vmem %s10, 71
  %v1504 = vld [vmem:[%s1503] ss:$8 sm:$0xf]
  %v1505 = vld [vmem:[%s1503] ss:$8 sm:$0x30]
  %v1506 = vor.u32 %v1504, %v1505
  %v1509 = vlaneseq
  %v1510 = vshrl.u32 %v1509, 7
  %v1511 = vsub.s32 0, %v1510
  %v1512 = vrot.slane %v1502, %v1511
  %v1513 = vlaneseq
  %v1514 = vshrl.u32 %v1513, 7
  %v1515 = vsub.s32 1, %v1514
  %v1516 = vrot.slane %v1502, %v1515
  %v1517 = vlaneseq
  %v1518 = vshrl.u32 %v1517, 7
  %v1519 = vsub.s32 2, %v1518
  %v1520 = vrot.slane %v1502, %v1519
  %v1521 = vlaneseq
  %v1522 = vshrl.u32 %v1521, 7
  %v1523 = vsub.s32 3, %v1522
  %v1524 = vrot.slane %v1502, %v1523
  %v1525 = vlaneseq
  %v1526 = vshrl.u32 %v1525, 7
  %v1527 = vsub.s32 4, %v1526
  %v1528 = vrot.slane %v1502, %v1527
  %v1529 = vlaneseq
  %v1530 = vshrl.u32 %v1529, 7
  %v1531 = vsub.s32 5, %v1530
  %v1532 = vrot.slane %v1502, %v1531
  %v1533 = vlaneseq
  %v1534 = vshrl.u32 %v1533, 7
  %v1535 = vsub.s32 6, %v1534
  %v1536 = vrot.slane %v1502, %v1535
  %v1537 = vlaneseq
  %v1538 = vshrl.u32 %v1537, 7
  %v1539 = vsub.s32 7, %v1538
  %v1540 = vrot.slane %v1502, %v1539
  %v1541 = vlaneseq
  %v1542 = vshrl.u32 %v1541, 7
  %v1543 = vsub.s32 0, %v1542
  %v1544 = vrot.slane %v1506, %v1543
  %v1545 = vlaneseq
  %v1546 = vshrl.u32 %v1545, 7
  %v1547 = vsub.s32 1, %v1546
  %v1548 = vrot.slane %v1506, %v1547
  %v1549 = vlaneseq
  %v1550 = vshrl.u32 %v1549, 7
  %v1551 = vsub.s32 2, %v1550
  %v1552 = vrot.slane %v1506, %v1551
  %v1553 = vlaneseq
  %v1554 = vshrl.u32 %v1553, 7
  %v1555 = vsub.s32 3, %v1554
  %v1556 = vrot.slane %v1506, %v1555
  %v1557 = vlaneseq
  %v1558 = vshrl.u32 %v1557, 7
  %v1559 = vsub.s32 4, %v1558
  %v1560 = vrot.slane %v1506, %v1559
  %v1561 = vlaneseq
  %v1562 = vshrl.u32 %v1561, 7
  %v1563 = vsub.s32 5, %v1562
  %v1564 = vrot.slane %v1506, %v1563
  %v1565 = vcombine.low %v1512, %v1516
  %v1566 = vcombine.low %v1520, %v1524
  %v1567 = vcombine.low %v1528, %v1532
  %v1568 = vcombine.low %v1536, %v1540
  %v1569 = vcombine.low %v1544, %v1548
  %v1570 = vcombine.low %v1552, %v1556
  %v1571 = vcombine.low %v1560, %v1564
  %1572 = vrot.lane.b32.xlu0 %v1565, 33
  %v1573 = vpop.permute.xlu0 %1572
  %1574 = vrot.lane.b32.xlu0 %v1566, 33
  %v1575 = vpop.permute.xlu0 %1574
  %1576 = vrot.lane.b32.xlu0 %v1567, 33
  %v1577 = vpop.permute.xlu0 %1576
  %1578 = vrot.lane.b32.xlu0 %v1568, 33
  %v1579 = vpop.permute.xlu0 %1578
  %1580 = vrot.lane.b32.xlu0 %v1569, 33
  %v1581 = vpop.permute.xlu0 %1580
  %1582 = vrot.lane.b32.xlu0 %v1570, 33
  %v1583 = vpop.permute.xlu0 %1582
  %1584 = vrot.lane.b32.xlu0 %v1571, 33
  %v1585 = vpop.permute.xlu0 %1584
  %v1586 = vrot.slane %v1573, 4
  %v1587 = vrot.slane %v1575, 4
  %v1588 = vrot.slane %v1577, 4
  %v1589 = vrot.slane %v1579, 4
  %v1590 = vrot.slane %v1581, 4
  %v1591 = vrot.slane %v1583, 4
  %v1592 = vrot.slane %v1585, 4
  %vm1593 = vcmask 269312
  %v1594 = vsel %vm1593, %v1586, %v1573
  %v1595 = vsel %vm98, %v1586, %v1587
  %v1596 = vsel %vm1593, %v1595, %v1575
  %v1597 = vsel %vm98, %v1587, %v1588
  %v1598 = vsel %vm1593, %v1597, %v1577
  %v1599 = vsel %vm98, %v1588, %v1589
  %v1600 = vsel %vm1593, %v1599, %v1579
  %v1601 = vsel %vm98, %v1589, %v1590
  %v1602 = vsel %vm1593, %v1601, %v1581
  %v1603 = vsel %vm98, %v1590, %v1591
  %v1604 = vsel %vm1593, %v1603, %v1583
  %v1605 = vsel %vm98, %v1591, %v1592
  %v1606 = vsel %vm1593, %v1605, %v1585
  %v1615 = vmul.f32 %v1491, %v1594
  %v1616 = vmul.f32 %v1492, %v1596
  %v1617 = vmul.f32 %v1493, %v1598
  %v1618 = vmul.f32 %v1494, %v1600
  %v1619 = vmul.f32 %v1495, %v1602
  %v1620 = vmul.f32 %v1496, %v1604
  %v1621 = vmul.f32 %v1497, %v1606
  %v1622 = vmul.f32 %v1498, %v1592
  %v1631 = vcombine.high %v1615, %v1615
  %v1632 = vcombine.high %v1616, %v1616
  %v1633 = vcombine.high %v1617, %v1617
  %v1634 = vcombine.high %v1618, %v1618
  %v1635 = vcombine.high %v1619, %v1619
  %v1636 = vcombine.high %v1620, %v1620
  %v1637 = vcombine.high %v1621, %v1621
  %v1638 = vrot.slane %v1615, 3
  %v1639 = vrot.slane %v1631, 3
  %v1640 = vrot.slane %v1616, 3
  %v1641 = vrot.slane %v1632, 3
  %v1642 = vrot.slane %v1617, 3
  %v1643 = vrot.slane %v1633, 3
  %v1644 = vrot.slane %v1618, 3
  %v1645 = vrot.slane %v1634, 3
  %v1646 = vrot.slane %v1619, 3
  %v1647 = vrot.slane %v1635, 3
  %v1648 = vrot.slane %v1620, 3
  %v1649 = vrot.slane %v1636, 3
  %v1650 = vrot.slane %v1621, 3
  %v1651 = vrot.slane %v1637, 3
  %v1652 = vrot.slane %v1622, 3
  %1653 = vrot.lane.b32.xlu0 %v1638, 95
  %v1654 = vpop.permute.xlu0 %1653
  %1655 = vrot.lane.b32.xlu0 %v1639, 95
  %v1656 = vpop.permute.xlu0 %1655
  %1657 = vrot.lane.b32.xlu0 %v1640, 95
  %v1658 = vpop.permute.xlu0 %1657
  %1659 = vrot.lane.b32.xlu0 %v1641, 95
  %v1660 = vpop.permute.xlu0 %1659
  %1661 = vrot.lane.b32.xlu0 %v1642, 95
  %v1662 = vpop.permute.xlu0 %1661
  %1663 = vrot.lane.b32.xlu0 %v1643, 95
  %v1664 = vpop.permute.xlu0 %1663
  %1665 = vrot.lane.b32.xlu0 %v1644, 95
  %v1666 = vpop.permute.xlu0 %1665
  %1667 = vrot.lane.b32.xlu0 %v1645, 95
  %v1668 = vpop.permute.xlu0 %1667
  %1669 = vrot.lane.b32.xlu0 %v1646, 95
  %v1670 = vpop.permute.xlu0 %1669
  %1671 = vrot.lane.b32.xlu0 %v1647, 95
  %v1672 = vpop.permute.xlu0 %1671
  %1673 = vrot.lane.b32.xlu0 %v1648, 95
  %v1674 = vpop.permute.xlu0 %1673
  %1675 = vrot.lane.b32.xlu0 %v1649, 95
  %v1676 = vpop.permute.xlu0 %1675
  %1677 = vrot.lane.b32.xlu0 %v1650, 95
  %v1678 = vpop.permute.xlu0 %1677
  %1679 = vrot.lane.b32.xlu0 %v1651, 95
  %v1680 = vpop.permute.xlu0 %1679
  %1681 = vrot.lane.b32.xlu0 %v1652, 95
  %v1682 = vpop.permute.xlu0 %1681
  %vm1683 = vcmask 777216
  %v1684 = vsel %vm1683, %v1654, %v1656
  %v1685 = vsel %vm1683, %v1656, %v1658
  %v1686 = vsel %vm1683, %v1658, %v1660
  %v1687 = vsel %vm1683, %v1660, %v1662
  %v1688 = vsel %vm1683, %v1662, %v1664
  %v1689 = vsel %vm1683, %v1664, %v1666
  %v1690 = vsel %vm1683, %v1666, %v1668
  %v1691 = vsel %vm1683, %v1668, %v1670
  %v1692 = vsel %vm1683, %v1670, %v1672
  %v1693 = vsel %vm1683, %v1672, %v1674
  %v1694 = vsel %vm1683, %v1674, %v1676
  %v1695 = vsel %vm1683, %v1676, %v1678
  %v1696 = vsel %vm1683, %v1678, %v1680
  %v1697 = vsel %vm1683, %v1680, %v1682
  %1712 = vst [vmem:[#allocation3 + $0xe0] sm:$0xe0] %v1684
  %1713 = vst [vmem:[#allocation3 + $0xe8] sm:$0xe0] %v1685
  %1714 = vst [vmem:[#allocation3 + $0xf0] sm:$0xe0] %v1686
  %1715 = vst [vmem:[#allocation3 + $0xf8] sm:$0xe0] %v1687
  %1716 = vst [vmem:[#allocation3 + $0x100] sm:$0xe0] %v1688
  %1717 = vst [vmem:[#allocation3 + $0x108] sm:$0xe0] %v1689
  %1718 = vst [vmem:[#allocation3 + $0x110] sm:$0xe0] %v1690
  %1719 = vst [vmem:[#allocation3 + $0x118] sm:$0xe0] %v1691
  %1720 = vst [vmem:[#allocation3 + $0x120] sm:$0xe0] %v1692
  %1721 = vst [vmem:[#allocation3 + $0x128] sm:$0xe0] %v1693
  %1722 = vst [vmem:[#allocation3 + $0x130] sm:$0xe0] %v1694
  %1723 = vst [vmem:[#allocation3 + $0x138] sm:$0xe0] %v1695
  %1724 = vst [vmem:[#allocation3 + $0x140] sm:$0xe0] %v1696
  %1725 = vst [vmem:[#allocation3 + $0x148] sm:$0xe0] %v1697
  %v1726 = vld [vmem:[#allocation2] sm:$0x77]
  %v1727 = vld [vmem:[#allocation2 + $0x8] sm:$0x77]
  %v1728 = vld [vmem:[#allocation2 + $0x10] sm:$0x77]
  %v1729 = vld [vmem:[#allocation2 + $0x18] sm:$0x77]
  %v1730 = vld [vmem:[#allocation2 + $0x20] sm:$0x77]
  %v1731 = vld [vmem:[#allocation2 + $0x28] sm:$0x77]
  %v1732 = vld [vmem:[#allocation2 + $0x30] sm:$0x77]
  %v1733 = vld [vmem:[#allocation2 + $0x38] sm:$0x7]
  %s1734 = scalar_lea.vmem %s10, 112
  %v1735 = vld [vmem:[%s1734] ss:$8 sm:$0xf]
  %v1736 = vld [vmem:[%s1734] ss:$8 sm:$0xf0]
  %v1737 = vor.u32 %v1735, %v1736
  %s1738 = scalar_lea.vmem %s10, 176
  %v1739 = vld [vmem:[%s1738] ss:$8 sm:$0xf]
  %v1740 = vld [vmem:[%s1738] ss:$8 sm:$0x30]
  %v1741 = vor.u32 %v1739, %v1740
  %v1744 = vlaneseq
  %v1745 = vshrl.u32 %v1744, 7
  %v1746 = vsub.s32 0, %v1745
  %v1747 = vrot.slane %v1737, %v1746
  %v1748 = vlaneseq
  %v1749 = vshrl.u32 %v1748, 7
  %v1750 = vsub.s32 1, %v1749
  %v1751 = vrot.slane %v1737, %v1750
  %v1752 = vlaneseq
  %v1753 = vshrl.u32 %v1752, 7
  %v1754 = vsub.s32 2, %v1753
  %v1755 = vrot.slane %v1737, %v1754
  %v1756 = vlaneseq
  %v1757 = vshrl.u32 %v1756, 7
  %v1758 = vsub.s32 3, %v1757
  %v1759 = vrot.slane %v1737, %v1758
  %v1760 = vlaneseq
  %v1761 = vshrl.u32 %v1760, 7
  %v1762 = vsub.s32 4, %v1761
  %v1763 = vrot.slane %v1737, %v1762
  %v1764 = vlaneseq
  %v1765 = vshrl.u32 %v1764, 7
  %v1766 = vsub.s32 5, %v1765
  %v1767 = vrot.slane %v1737, %v1766
  %v1768 = vlaneseq
  %v1769 = vshrl.u32 %v1768, 7
  %v1770 = vsub.s32 6, %v1769
  %v1771 = vrot.slane %v1737, %v1770
  %v1772 = vlaneseq
  %v1773 = vshrl.u32 %v1772, 7
  %v1774 = vsub.s32 7, %v1773
  %v1775 = vrot.slane %v1737, %v1774
  %v1776 = vlaneseq
  %v1777 = vshrl.u32 %v1776, 7
  %v1778 = vsub.s32 0, %v1777
  %v1779 = vrot.slane %v1741, %v1778
  %v1780 = vlaneseq
  %v1781 = vshrl.u32 %v1780, 7
  %v1782 = vsub.s32 1, %v1781
  %v1783 = vrot.slane %v1741, %v1782
  %v1784 = vlaneseq
  %v1785 = vshrl.u32 %v1784, 7
  %v1786 = vsub.s32 2, %v1785
  %v1787 = vrot.slane %v1741, %v1786
  %v1788 = vlaneseq
  %v1789 = vshrl.u32 %v1788, 7
  %v1790 = vsub.s32 3, %v1789
  %v1791 = vrot.slane %v1741, %v1790
  %v1792 = vlaneseq
  %v1793 = vshrl.u32 %v1792, 7
  %v1794 = vsub.s32 4, %v1793
  %v1795 = vrot.slane %v1741, %v1794
  %v1796 = vlaneseq
  %v1797 = vshrl.u32 %v1796, 7
  %v1798 = vsub.s32 5, %v1797
  %v1799 = vrot.slane %v1741, %v1798
  %v1800 = vcombine.low %v1747, %v1751
  %v1801 = vcombine.low %v1755, %v1759
  %v1802 = vcombine.low %v1763, %v1767
  %v1803 = vcombine.low %v1771, %v1775
  %v1804 = vcombine.low %v1779, %v1783
  %v1805 = vcombine.low %v1787, %v1791
  %v1806 = vcombine.low %v1795, %v1799
  %1807 = vrot.lane.b32.xlu0 %v1800, 34
  %v1808 = vpop.permute.xlu0 %1807
  %1809 = vrot.lane.b32.xlu0 %v1801, 34
  %v1810 = vpop.permute.xlu0 %1809
  %1811 = vrot.lane.b32.xlu0 %v1802, 34
  %v1812 = vpop.permute.xlu0 %1811
  %1813 = vrot.lane.b32.xlu0 %v1803, 34
  %v1814 = vpop.permute.xlu0 %1813
  %1815 = vrot.lane.b32.xlu0 %v1804, 34
  %v1816 = vpop.permute.xlu0 %1815
  %1817 = vrot.lane.b32.xlu0 %v1805, 34
  %v1818 = vpop.permute.xlu0 %1817
  %1819 = vrot.lane.b32.xlu0 %v1806, 34
  %v1820 = vpop.permute.xlu0 %1819
  %v1821 = vrot.slane %v1808, 4
  %v1822 = vrot.slane %v1810, 4
  %v1823 = vrot.slane %v1812, 4
  %v1824 = vrot.slane %v1814, 4
  %v1825 = vrot.slane %v1816, 4
  %v1826 = vrot.slane %v1818, 4
  %v1827 = vrot.slane %v1820, 4
  %vm1828 = vcmask 277504
  %v1829 = vsel %vm1828, %v1821, %v1808
  %v1830 = vsel %vm98, %v1821, %v1822
  %v1831 = vsel %vm1828, %v1830, %v1810
  %v1832 = vsel %vm98, %v1822, %v1823
  %v1833 = vsel %vm1828, %v1832, %v1812
  %v1834 = vsel %vm98, %v1823, %v1824
  %v1835 = vsel %vm1828, %v1834, %v1814
  %v1836 = vsel %vm98, %v1824, %v1825
  %v1837 = vsel %vm1828, %v1836, %v1816
  %v1838 = vsel %vm98, %v1825, %v1826
  %v1839 = vsel %vm1828, %v1838, %v1818
  %v1840 = vsel %vm98, %v1826, %v1827
  %v1841 = vsel %vm1828, %v1840, %v1820
  %v1850 = vmul.f32 %v1726, %v1829
  %v1851 = vmul.f32 %v1727, %v1831
  %v1852 = vmul.f32 %v1728, %v1833
  %v1853 = vmul.f32 %v1729, %v1835
  %v1854 = vmul.f32 %v1730, %v1837
  %v1855 = vmul.f32 %v1731, %v1839
  %v1856 = vmul.f32 %v1732, %v1841
  %v1857 = vmul.f32 %v1733, %v1827
  %v1866 = vcombine.high %v1850, %v1850
  %v1867 = vcombine.high %v1851, %v1851
  %v1868 = vcombine.high %v1852, %v1852
  %v1869 = vcombine.high %v1853, %v1853
  %v1870 = vcombine.high %v1854, %v1854
  %v1871 = vcombine.high %v1855, %v1855
  %v1872 = vcombine.high %v1856, %v1856
  %1873 = vrot.lane.b32.xlu0 %v1850, 94
  %v1874 = vpop.permute.xlu0 %1873
  %1875 = vrot.lane.b32.xlu0 %v1866, 94
  %v1876 = vpop.permute.xlu0 %1875
  %1877 = vrot.lane.b32.xlu0 %v1851, 94
  %v1878 = vpop.permute.xlu0 %1877
  %1879 = vrot.lane.b32.xlu0 %v1867, 94
  %v1880 = vpop.permute.xlu0 %1879
  %1881 = vrot.lane.b32.xlu0 %v1852, 94
  %v1882 = vpop.permute.xlu0 %1881
  %1883 = vrot.lane.b32.xlu0 %v1868, 94
  %v1884 = vpop.permute.xlu0 %1883
  %1885 = vrot.lane.b32.xlu0 %v1853, 94
  %v1886 = vpop.permute.xlu0 %1885
  %1887 = vrot.lane.b32.xlu0 %v1869, 94
  %v1888 = vpop.permute.xlu0 %1887
  %1889 = vrot.lane.b32.xlu0 %v1854, 94
  %v1890 = vpop.permute.xlu0 %1889
  %1891 = vrot.lane.b32.xlu0 %v1870, 94
  %v1892 = vpop.permute.xlu0 %1891
  %1893 = vrot.lane.b32.xlu0 %v1855, 94
  %v1894 = vpop.permute.xlu0 %1893
  %1895 = vrot.lane.b32.xlu0 %v1871, 94
  %v1896 = vpop.permute.xlu0 %1895
  %1897 = vrot.lane.b32.xlu0 %v1856, 94
  %v1898 = vpop.permute.xlu0 %1897
  %1899 = vrot.lane.b32.xlu0 %v1872, 94
  %v1900 = vpop.permute.xlu0 %1899
  %1901 = vrot.lane.b32.xlu0 %v1857, 94
  %v1902 = vpop.permute.xlu0 %1901
  %vm1903 = vcmask 769024
  %v1904 = vsel %vm1903, %v1874, %v1876
  %v1905 = vsel %vm1903, %v1876, %v1878
  %v1906 = vsel %vm1903, %v1878, %v1880
  %v1907 = vsel %vm1903, %v1880, %v1882
  %v1908 = vsel %vm1903, %v1882, %v1884
  %v1909 = vsel %vm1903, %v1884, %v1886
  %v1910 = vsel %vm1903, %v1886, %v1888
  %v1911 = vsel %vm1903, %v1888, %v1890
  %v1912 = vsel %vm1903, %v1890, %v1892
  %v1913 = vsel %vm1903, %v1892, %v1894
  %v1914 = vsel %vm1903, %v1894, %v1896
  %v1915 = vsel %vm1903, %v1896, %v1898
  %v1916 = vsel %vm1903, %v1898, %v1900
  %v1917 = vsel %vm1903, %v1900, %v1902
  %1932 = vst [vmem:[#allocation3 + $0x150] sm:$0x7] %v1904
  %1933 = vst [vmem:[#allocation3 + $0x158] sm:$0x7] %v1905
  %1934 = vst [vmem:[#allocation3 + $0x160] sm:$0x7] %v1906
  %1935 = vst [vmem:[#allocation3 + $0x168] sm:$0x7] %v1907
  %1936 = vst [vmem:[#allocation3 + $0x170] sm:$0x7] %v1908
  %1937 = vst [vmem:[#allocation3 + $0x178] sm:$0x7] %v1909
  %1938 = vst [vmem:[#allocation3 + $0x180] sm:$0x7] %v1910
  %1939 = vst [vmem:[#allocation3 + $0x188] sm:$0x7] %v1911
  %1940 = vst [vmem:[#allocation3 + $0x190] sm:$0x7] %v1912
  %1941 = vst [vmem:[#allocation3 + $0x198] sm:$0x7] %v1913
  %1942 = vst [vmem:[#allocation3 + $0x1a0] sm:$0x7] %v1914
  %1943 = vst [vmem:[#allocation3 + $0x1a8] sm:$0x7] %v1915
  %1944 = vst [vmem:[#allocation3 + $0x1b0] sm:$0x7] %v1916
  %1945 = vst [vmem:[#allocation3 + $0x1b8] sm:$0x7] %v1917
  %v1946 = vld [vmem:[%s1] sm:$0xff]
  %v1947 = vld [vmem:[#allocation3] sm:$0xff]
  %v1948 = vld [vmem:[#allocation3 + $0x8] sm:$0xff]
  %v1949 = vld [vmem:[#allocation3 + $0x10] sm:$0xff]
  %v1950 = vld [vmem:[#allocation3 + $0x18] sm:$0xff]
  %v1951 = vld [vmem:[#allocation3 + $0x20] sm:$0xff]
  %v1952 = vld [vmem:[#allocation3 + $0x28] sm:$0xff]
  %v1953 = vld [vmem:[#allocation3 + $0x30] sm:$0xff]
  %v1954 = vld [vmem:[#allocation3 + $0x38] sm:$0xff]
  %v1955 = vld [vmem:[#allocation3 + $0x40] sm:$0xff]
  %v1956 = vld [vmem:[#allocation3 + $0x48] sm:$0xff]
  %v1957 = vld [vmem:[#allocation3 + $0x50] sm:$0xff]
  %v1958 = vld [vmem:[#allocation3 + $0x58] sm:$0xff]
  %v1959 = vld [vmem:[#allocation3 + $0x60] sm:$0xff]
  %v1960 = vld [vmem:[#allocation3 + $0x68] sm:$0xff]
  %v1961 = vld [vmem:[#allocation3 + $0x70] sm:$0xff]
  %v1962 = vld [vmem:[#allocation3 + $0x78] sm:$0xff]
  %v1963 = vld [vmem:[#allocation3 + $0x80] sm:$0xff]
  %v1964 = vld [vmem:[#allocation3 + $0x88] sm:$0xff]
  %v1965 = vld [vmem:[#allocation3 + $0x90] sm:$0xff]
  %v1966 = vld [vmem:[#allocation3 + $0x98] sm:$0xff]
  %v1967 = vld [vmem:[#allocation3 + $0xa0] sm:$0xff]
  %v1968 = vld [vmem:[#allocation3 + $0xa8] sm:$0xff]
  %v1969 = vld [vmem:[#allocation3 + $0xb0] sm:$0xff]
  %v1970 = vld [vmem:[#allocation3 + $0xb8] sm:$0xff]
  %v1971 = vld [vmem:[#allocation3 + $0xc0] sm:$0xff]
  %v1972 = vld [vmem:[#allocation3 + $0xc8] sm:$0xff]
  %v1973 = vld [vmem:[#allocation3 + $0xd0] sm:$0xff]
  %v1974 = vld [vmem:[#allocation3 + $0xd8] sm:$0xff]
  %v1975 = vld [vmem:[#allocation3 + $0xe0] sm:$0xff]
  %v1976 = vld [vmem:[#allocation3 + $0xe8] sm:$0xff]
  %v1977 = vld [vmem:[#allocation3 + $0xf0] sm:$0xff]
  %v1978 = vld [vmem:[#allocation3 + $0xf8] sm:$0xff]
  %v1979 = vld [vmem:[#allocation3 + $0x100] sm:$0xff]
  %v1980 = vld [vmem:[#allocation3 + $0x108] sm:$0xff]
  %v1981 = vld [vmem:[#allocation3 + $0x110] sm:$0xff]
  %v1982 = vld [vmem:[#allocation3 + $0x118] sm:$0xff]
  %v1983 = vld [vmem:[#allocation3 + $0x120] sm:$0xff]
  %v1984 = vld [vmem:[#allocation3 + $0x128] sm:$0xff]
  %v1985 = vld [vmem:[#allocation3 + $0x130] sm:$0xff]
  %v1986 = vld [vmem:[#allocation3 + $0x138] sm:$0xff]
  %v1987 = vld [vmem:[#allocation3 + $0x140] sm:$0xff]
  %v1988 = vld [vmem:[#allocation3 + $0x148] sm:$0xff]
  %v1989 = vld [vmem:[#allocation3 + $0x150] sm:$0x7]
  %v1990 = vld [vmem:[#allocation3 + $0x158] sm:$0x7]
  %v1991 = vld [vmem:[#allocation3 + $0x160] sm:$0x7]
  %v1992 = vld [vmem:[#allocation3 + $0x168] sm:$0x7]
  %v1993 = vld [vmem:[#allocation3 + $0x170] sm:$0x7]
  %v1994 = vld [vmem:[#allocation3 + $0x178] sm:$0x7]
  %v1995 = vld [vmem:[#allocation3 + $0x180] sm:$0x7]
  %v1996 = vld [vmem:[#allocation3 + $0x188] sm:$0x7]
  %v1997 = vld [vmem:[#allocation3 + $0x190] sm:$0x7]
  %v1998 = vld [vmem:[#allocation3 + $0x198] sm:$0x7]
  %v1999 = vld [vmem:[#allocation3 + $0x1a0] sm:$0x7]
  %v2000 = vld [vmem:[#allocation3 + $0x1a8] sm:$0x7]
  %v2001 = vld [vmem:[#allocation3 + $0x1b0] sm:$0x7]
  %v2002 = vld [vmem:[#allocation3 + $0x1b8] sm:$0x7]
  %vm2003 = vcmask 220160
  %v2005 = vsel %vm2003, %v1946, 0
  %vm2007 = vcmask 1042432
  %v2009 = vsel %vm2007, %v1989, 0
  %v2012 = vsel %vm2007, %v1990, 0
  %v2015 = vsel %vm2007, %v1991, 0
  %v2018 = vsel %vm2007, %v1992, 0
  %v2021 = vsel %vm2007, %v1993, 0
  %v2024 = vsel %vm2007, %v1994, 0
  %v2027 = vsel %vm2007, %v1995, 0
  %v2030 = vsel %vm2007, %v1996, 0
  %v2033 = vsel %vm2007, %v1997, 0
  %v2036 = vsel %vm2007, %v1998, 0
  %v2039 = vsel %vm2007, %v1999, 0
  %v2042 = vsel %vm2007, %v2000, 0
  %v2045 = vsel %vm2007, %v2001, 0
  %v2048 = vsel %vm2007, %v2002, 0
  %2050 = vmatprep.subr.mxu0 %v1948
  %2051 = vmatpush1.msra.mxu0 %v1947
  %2052 = vmatprep.subr.mxu0 %v1962
  %2053 = vmatpush1.msra.mxu0 %v1961
  %2054 = vmatprep.subr.mxu0 %v1976
  %2055 = vmatpush1.msra.mxu0 %v1975
  %2056 = vmatprep.subr.mxu0 %v2012
  %2057 = vmatpush1.msra.mxu0 %v2009
  %2058 = vmatprep.subr.mxu0 0.0
  %2059 = vmatpush1.msra.mxu0 0.0
  %2060 = vmatprep.subr.mxu0 0.0
  %2061 = vmatpush1.msra.mxu0 0.0
  %2062 = vmatprep.subr.mxu0 0.0
  %2063 = vmatpush1.msra.mxu0 0.0
  %2064 = vmatprep.subr.mxu0 0.0
  %2065 = vmatpush1.msra.mxu0 0.0
  %2066 = vmatprep.subr.mxu0 0.0
  %2067 = vmatpush1.msra.mxu0 0.0
  %2068 = vmatprep.subr.mxu0 0.0
  %2069 = vmatpush1.msra.mxu0 0.0
  %2070 = vmatprep.subr.mxu0 0.0
  %2071 = vmatpush1.msra.mxu0 0.0
  %2072 = vmatprep.subr.mxu0 0.0
  %2073 = vmatpush1.msra.mxu0 0.0
  %2074 = vmatprep.subr.mxu0 0.0
  %2075 = vmatpush1.msra.mxu0 0.0
  %2076 = vmatprep.subr.mxu0 0.0
  %2077 = vmatpush1.msra.mxu0 0.0
  %2078 = vmatprep.subr.mxu0 0.0
  %2079 = vmatpush1.msra.mxu0 0.0
  %2080 = vmatprep.subr.mxu0 0.0
  %2081 = vmatpush1.msra.mxu0 0.0
  %2082 = vmatprep.subr.mxu0 0.0
  %2083 = vmatpush1.msra.mxu0 0.0
  %2084 = vmatprep.subr.mxu0 0.0
  %2085 = vmatpush1.msra.mxu0 0.0
  %2086 = vmatprep.subr.mxu0 0.0
  %2087 = vmatpush1.msra.mxu0 0.0
  %2088 = vmatprep.subr.mxu0 0.0
  %2089 = vmatpush1.msra.mxu0 0.0
  %2090 = vmatprep.subr.mxu0 0.0
  %2091 = vmatpush1.msra.mxu0 0.0
  %2092 = vmatprep.subr.mxu0 0.0
  %2093 = vmatpush1.msra.mxu0 0.0
  %2094 = vmatprep.subr.mxu0 0.0
  %2095 = vmatpush1.msra.mxu0 0.0
  %2096 = vmatprep.subr.mxu0 0.0
  %2097 = vmatpush1.msra.mxu0 0.0
  %2098 = vmatprep.subr.mxu0 0.0
  %2099 = vmatpush1.msra.mxu0 0.0
  %2100 = vmatprep.subr.mxu0 0.0
  %2101 = vmatpush1.msra.mxu0 0.0
  %2102 = vmatprep.subr.mxu0 0.0
  %2103 = vmatpush1.msra.mxu0 0.0
  %2104 = vmatprep.subr.mxu0 0.0
  %2105 = vmatpush1.msra.mxu0 0.0
  %2106 = vmatprep.subr.mxu0 0.0
  %2107 = vmatpush1.msra.mxu0 0.0
  %2108 = vmatprep.subr.mxu0 0.0
  %2109 = vmatpush1.msra.mxu0 0.0
  %2110 = vmatprep.subr.mxu0 0.0
  %2111 = vmatpush1.msra.mxu0 0.0
  %2112 = vmatprep.subr.mxu0 0.0
  %2113 = vmatpush1.msra.mxu0 0.0
  %2114 = vmatprep.mubr.f32.mxu0 0.0
  %2115 = vmatmul.mubr.f32.gmra.mrb[0].mxu0 %v2005
  %v2116 = vpop.f32.mrb[0].mxu0
  %v2117 = vadd.f32 0.0, %v2116
  %v2118 = vpop.f32.mrb[0].mxu0
  %v2119 = vadd.f32 0.0, %v2118
  %2120 = vdwg.mxu0
  %2121 = vmatprep.subr.mxu0 %v1950
  %2122 = vmatpush1.msra.mxu0 %v1949
  %2123 = vmatprep.subr.mxu0 %v1964
  %2124 = vmatpush1.msra.mxu0 %v1963
  %2125 = vmatprep.subr.mxu0 %v1978
  %2126 = vmatpush1.msra.mxu0 %v1977
  %2127 = vmatprep.subr.mxu0 %v2018
  %2128 = vmatpush1.msra.mxu0 %v2015
  %2129 = vmatprep.subr.mxu0 0.0
  %2130 = vmatpush1.msra.mxu0 0.0
  %2131 = vmatprep.subr.mxu0 0.0
  %2132 = vmatpush1.msra.mxu0 0.0
  %2133 = vmatprep.subr.mxu0 0.0
  %2134 = vmatpush1.msra.mxu0 0.0
  %2135 = vmatprep.subr.mxu0 0.0
  %2136 = vmatpush1.msra.mxu0 0.0
  %2137 = vmatprep.subr.mxu0 0.0
  %2138 = vmatpush1.msra.mxu0 0.0
  %2139 = vmatprep.subr.mxu0 0.0
  %2140 = vmatpush1.msra.mxu0 0.0
  %2141 = vmatprep.subr.mxu0 0.0
  %2142 = vmatpush1.msra.mxu0 0.0
  %2143 = vmatprep.subr.mxu0 0.0
  %2144 = vmatpush1.msra.mxu0 0.0
  %2145 = vmatprep.subr.mxu0 0.0
  %2146 = vmatpush1.msra.mxu0 0.0
  %2147 = vmatprep.subr.mxu0 0.0
  %2148 = vmatpush1.msra.mxu0 0.0
  %2149 = vmatprep.subr.mxu0 0.0
  %2150 = vmatpush1.msra.mxu0 0.0
  %2151 = vmatprep.subr.mxu0 0.0
  %2152 = vmatpush1.msra.mxu0 0.0
  %2153 = vmatprep.subr.mxu0 0.0
  %2154 = vmatpush1.msra.mxu0 0.0
  %2155 = vmatprep.subr.mxu0 0.0
  %2156 = vmatpush1.msra.mxu0 0.0
  %2157 = vmatprep.subr.mxu0 0.0
  %2158 = vmatpush1.msra.mxu0 0.0
  %2159 = vmatprep.subr.mxu0 0.0
  %2160 = vmatpush1.msra.mxu0 0.0
  %2161 = vmatprep.subr.mxu0 0.0
  %2162 = vmatpush1.msra.mxu0 0.0
  %2163 = vmatprep.subr.mxu0 0.0
  %2164 = vmatpush1.msra.mxu0 0.0
  %2165 = vmatprep.subr.mxu0 0.0
  %2166 = vmatpush1.msra.mxu0 0.0
  %2167 = vmatprep.subr.mxu0 0.0
  %2168 = vmatpush1.msra.mxu0 0.0
  %2169 = vmatprep.subr.mxu0 0.0
  %2170 = vmatpush1.msra.mxu0 0.0
  %2171 = vmatprep.subr.mxu0 0.0
  %2172 = vmatpush1.msra.mxu0 0.0
  %2173 = vmatprep.subr.mxu0 0.0
  %2174 = vmatpush1.msra.mxu0 0.0
  %2175 = vmatprep.subr.mxu0 0.0
  %2176 = vmatpush1.msra.mxu0 0.0
  %2177 = vmatprep.subr.mxu0 0.0
  %2178 = vmatpush1.msra.mxu0 0.0
  %2179 = vmatprep.subr.mxu0 0.0
  %2180 = vmatpush1.msra.mxu0 0.0
  %2181 = vmatprep.subr.mxu0 0.0
  %2182 = vmatpush1.msra.mxu0 0.0
  %2183 = vmatprep.subr.mxu0 0.0
  %2184 = vmatpush1.msra.mxu0 0.0
  %2185 = vmatprep.mubr.f32.mxu0 0.0
  %2186 = vmatmul.mubr.f32.gmra.mrb[0].mxu0 %v2005
  %v2187 = vpop.f32.mrb[0].mxu0
  %v2188 = vadd.f32 0.0, %v2187
  %v2189 = vpop.f32.mrb[0].mxu0
  %v2190 = vadd.f32 0.0, %v2189
  %2191 = vdwg.mxu0
  %2192 = vmatprep.subr.mxu0 %v1952
  %2193 = vmatpush1.msra.mxu0 %v1951
  %2194 = vmatprep.subr.mxu0 %v1966
  %2195 = vmatpush1.msra.mxu0 %v1965
  %2196 = vmatprep.subr.mxu0 %v1980
  %2197 = vmatpush1.msra.mxu0 %v1979
  %2198 = vmatprep.subr.mxu0 %v2024
  %2199 = vmatpush1.msra.mxu0 %v2021
  %2200 = vmatprep.subr.mxu0 0.0
  %2201 = vmatpush1.msra.mxu0 0.0
  %2202 = vmatprep.subr.mxu0 0.0
  %2203 = vmatpush1.msra.mxu0 0.0
  %2204 = vmatprep.subr.mxu0 0.0
  %2205 = vmatpush1.msra.mxu0 0.0
  %2206 = vmatprep.subr.mxu0 0.0
  %2207 = vmatpush1.msra.mxu0 0.0
  %2208 = vmatprep.subr.mxu0 0.0
  %2209 = vmatpush1.msra.mxu0 0.0
  %2210 = vmatprep.subr.mxu0 0.0
  %2211 = vmatpush1.msra.mxu0 0.0
  %2212 = vmatprep.subr.mxu0 0.0
  %2213 = vmatpush1.msra.mxu0 0.0
  %2214 = vmatprep.subr.mxu0 0.0
  %2215 = vmatpush1.msra.mxu0 0.0
  %2216 = vmatprep.subr.mxu0 0.0
  %2217 = vmatpush1.msra.mxu0 0.0
  %2218 = vmatprep.subr.mxu0 0.0
  %2219 = vmatpush1.msra.mxu0 0.0
  %2220 = vmatprep.subr.mxu0 0.0
  %2221 = vmatpush1.msra.mxu0 0.0
  %2222 = vmatprep.subr.mxu0 0.0
  %2223 = vmatpush1.msra.mxu0 0.0
  %2224 = vmatprep.subr.mxu0 0.0
  %2225 = vmatpush1.msra.mxu0 0.0
  %2226 = vmatprep.subr.mxu0 0.0
  %2227 = vmatpush1.msra.mxu0 0.0
  %2228 = vmatprep.subr.mxu0 0.0
  %2229 = vmatpush1.msra.mxu0 0.0
  %2230 = vmatprep.subr.mxu0 0.0
  %2231 = vmatpush1.msra.mxu0 0.0
  %2232 = vmatprep.subr.mxu0 0.0
  %2233 = vmatpush1.msra.mxu0 0.0
  %2234 = vmatprep.subr.mxu0 0.0
  %2235 = vmatpush1.msra.mxu0 0.0
  %2236 = vmatprep.subr.mxu0 0.0
  %2237 = vmatpush1.msra.mxu0 0.0
  %2238 = vmatprep.subr.mxu0 0.0
  %2239 = vmatpush1.msra.mxu0 0.0
  %2240 = vmatprep.subr.mxu0 0.0
  %2241 = vmatpush1.msra.mxu0 0.0
  %2242 = vmatprep.subr.mxu0 0.0
  %2243 = vmatpush1.msra.mxu0 0.0
  %2244 = vmatprep.subr.mxu0 0.0
  %2245 = vmatpush1.msra.mxu0 0.0
  %2246 = vmatprep.subr.mxu0 0.0
  %2247 = vmatpush1.msra.mxu0 0.0
  %2248 = vmatprep.subr.mxu0 0.0
  %2249 = vmatpush1.msra.mxu0 0.0
  %2250 = vmatprep.subr.mxu0 0.0
  %2251 = vmatpush1.msra.mxu0 0.0
  %2252 = vmatprep.subr.mxu0 0.0
  %2253 = vmatpush1.msra.mxu0 0.0
  %2254 = vmatprep.subr.mxu0 0.0
  %2255 = vmatpush1.msra.mxu0 0.0
  %2256 = vmatprep.mubr.f32.mxu0 0.0
  %2257 = vmatmul.mubr.f32.gmra.mrb[0].mxu0 %v2005
  %v2258 = vpop.f32.mrb[0].mxu0
  %v2259 = vadd.f32 0.0, %v2258
  %v2260 = vpop.f32.mrb[0].mxu0
  %v2261 = vadd.f32 0.0, %v2260
  %2262 = vdwg.mxu0
  %2263 = vmatprep.subr.mxu0 %v1954
  %2264 = vmatpush1.msra.mxu0 %v1953
  %2265 = vmatprep.subr.mxu0 %v1968
  %2266 = vmatpush1.msra.mxu0 %v1967
  %2267 = vmatprep.subr.mxu0 %v1982
  %2268 = vmatpush1.msra.mxu0 %v1981
  %2269 = vmatprep.subr.mxu0 %v2030
  %2270 = vmatpush1.msra.mxu0 %v2027
  %2271 = vmatprep.subr.mxu0 0.0
  %2272 = vmatpush1.msra.mxu0 0.0
  %2273 = vmatprep.subr.mxu0 0.0
  %2274 = vmatpush1.msra.mxu0 0.0
  %2275 = vmatprep.subr.mxu0 0.0
  %2276 = vmatpush1.msra.mxu0 0.0
  %2277 = vmatprep.subr.mxu0 0.0
  %2278 = vmatpush1.msra.mxu0 0.0
  %2279 = vmatprep.subr.mxu0 0.0
  %2280 = vmatpush1.msra.mxu0 0.0
  %2281 = vmatprep.subr.mxu0 0.0
  %2282 = vmatpush1.msra.mxu0 0.0
  %2283 = vmatprep.subr.mxu0 0.0
  %2284 = vmatpush1.msra.mxu0 0.0
  %2285 = vmatprep.subr.mxu0 0.0
  %2286 = vmatpush1.msra.mxu0 0.0
  %2287 = vmatprep.subr.mxu0 0.0
  %2288 = vmatpush1.msra.mxu0 0.0
  %2289 = vmatprep.subr.mxu0 0.0
  %2290 = vmatpush1.msra.mxu0 0.0
  %2291 = vmatprep.subr.mxu0 0.0
  %2292 = vmatpush1.msra.mxu0 0.0
  %2293 = vmatprep.subr.mxu0 0.0
  %2294 = vmatpush1.msra.mxu0 0.0
  %2295 = vmatprep.subr.mxu0 0.0
  %2296 = vmatpush1.msra.mxu0 0.0
  %2297 = vmatprep.subr.mxu0 0.0
  %2298 = vmatpush1.msra.mxu0 0.0
  %2299 = vmatprep.subr.mxu0 0.0
  %2300 = vmatpush1.msra.mxu0 0.0
  %2301 = vmatprep.subr.mxu0 0.0
  %2302 = vmatpush1.msra.mxu0 0.0
  %2303 = vmatprep.subr.mxu0 0.0
  %2304 = vmatpush1.msra.mxu0 0.0
  %2305 = vmatprep.subr.mxu0 0.0
  %2306 = vmatpush1.msra.mxu0 0.0
  %2307 = vmatprep.subr.mxu0 0.0
  %2308 = vmatpush1.msra.mxu0 0.0
  %2309 = vmatprep.subr.mxu0 0.0
  %2310 = vmatpush1.msra.mxu0 0.0
  %2311 = vmatprep.subr.mxu0 0.0
  %2312 = vmatpush1.msra.mxu0 0.0
  %2313 = vmatprep.subr.mxu0 0.0
  %2314 = vmatpush1.msra.mxu0 0.0
  %2315 = vmatprep.subr.mxu0 0.0
  %2316 = vmatpush1.msra.mxu0 0.0
  %2317 = vmatprep.subr.mxu0 0.0
  %2318 = vmatpush1.msra.mxu0 0.0
  %2319 = vmatprep.subr.mxu0 0.0
  %2320 = vmatpush1.msra.mxu0 0.0
  %2321 = vmatprep.subr.mxu0 0.0
  %2322 = vmatpush1.msra.mxu0 0.0
  %2323 = vmatprep.subr.mxu0 0.0
  %2324 = vmatpush1.msra.mxu0 0.0
  %2325 = vmatprep.subr.mxu0 0.0
  %2326 = vmatpush1.msra.mxu0 0.0
  %2327 = vmatprep.mubr.f32.mxu0 0.0
  %2328 = vmatmul.mubr.f32.gmra.mrb[0].mxu0 %v2005
  %v2329 = vpop.f32.mrb[0].mxu0
  %v2330 = vadd.f32 0.0, %v2329
  %v2331 = vpop.f32.mrb[0].mxu0
  %v2332 = vadd.f32 0.0, %v2331
  %2333 = vdwg.mxu0
  %2334 = vmatprep.subr.mxu0 %v1956
  %2335 = vmatpush1.msra.mxu0 %v1955
  %2336 = vmatprep.subr.mxu0 %v1970
  %2337 = vmatpush1.msra.mxu0 %v1969
  %2338 = vmatprep.subr.mxu0 %v1984
  %2339 = vmatpush1.msra.mxu0 %v1983
  %2340 = vmatprep.subr.mxu0 %v2036
  %2341 = vmatpush1.msra.mxu0 %v2033
  %2342 = vmatprep.subr.mxu0 0.0
  %2343 = vmatpush1.msra.mxu0 0.0
  %2344 = vmatprep.subr.mxu0 0.0
  %2345 = vmatpush1.msra.mxu0 0.0
  %2346 = vmatprep.subr.mxu0 0.0
  %2347 = vmatpush1.msra.mxu0 0.0
  %2348 = vmatprep.subr.mxu0 0.0
  %2349 = vmatpush1.msra.mxu0 0.0
  %2350 = vmatprep.subr.mxu0 0.0
  %2351 = vmatpush1.msra.mxu0 0.0
  %2352 = vmatprep.subr.mxu0 0.0
  %2353 = vmatpush1.msra.mxu0 0.0
  %2354 = vmatprep.subr.mxu0 0.0
  %2355 = vmatpush1.msra.mxu0 0.0
  %2356 = vmatprep.subr.mxu0 0.0
  %2357 = vmatpush1.msra.mxu0 0.0
  %2358 = vmatprep.subr.mxu0 0.0
  %2359 = vmatpush1.msra.mxu0 0.0
  %2360 = vmatprep.subr.mxu0 0.0
  %2361 = vmatpush1.msra.mxu0 0.0
  %2362 = vmatprep.subr.mxu0 0.0
  %2363 = vmatpush1.msra.mxu0 0.0
  %2364 = vmatprep.subr.mxu0 0.0
  %2365 = vmatpush1.msra.mxu0 0.0
  %2366 = vmatprep.subr.mxu0 0.0
  %2367 = vmatpush1.msra.mxu0 0.0
  %2368 = vmatprep.subr.mxu0 0.0
  %2369 = vmatpush1.msra.mxu0 0.0
  %2370 = vmatprep.subr.mxu0 0.0
  %2371 = vmatpush1.msra.mxu0 0.0
  %2372 = vmatprep.subr.mxu0 0.0
  %2373 = vmatpush1.msra.mxu0 0.0
  %2374 = vmatprep.subr.mxu0 0.0
  %2375 = vmatpush1.msra.mxu0 0.0
  %2376 = vmatprep.subr.mxu0 0.0
  %2377 = vmatpush1.msra.mxu0 0.0
  %2378 = vmatprep.subr.mxu0 0.0
  %2379 = vmatpush1.msra.mxu0 0.0
  %2380 = vmatprep.subr.mxu0 0.0
  %2381 = vmatpush1.msra.mxu0 0.0
  %2382 = vmatprep.subr.mxu0 0.0
  %2383 = vmatpush1.msra.mxu0 0.0
  %2384 = vmatprep.subr.mxu0 0.0
  %2385 = vmatpush1.msra.mxu0 0.0
  %2386 = vmatprep.subr.mxu0 0.0
  %2387 = vmatpush1.msra.mxu0 0.0
  %2388 = vmatprep.subr.mxu0 0.0
  %2389 = vmatpush1.msra.mxu0 0.0
  %2390 = vmatprep.subr.mxu0 0.0
  %2391 = vmatpush1.msra.mxu0 0.0
  %2392 = vmatprep.subr.mxu0 0.0
  %2393 = vmatpush1.msra.mxu0 0.0
  %2394 = vmatprep.subr.mxu0 0.0
  %2395 = vmatpush1.msra.mxu0 0.0
  %2396 = vmatprep.subr.mxu0 0.0
  %2397 = vmatpush1.msra.mxu0 0.0
  %2398 = vmatprep.mubr.f32.mxu0 0.0
  %2399 = vmatmul.mubr.f32.gmra.mrb[0].mxu0 %v2005
  %v2400 = vpop.f32.mrb[0].mxu0
  %v2401 = vadd.f32 0.0, %v2400
  %v2402 = vpop.f32.mrb[0].mxu0
  %v2403 = vadd.f32 0.0, %v2402
  %2404 = vdwg.mxu0
  %2405 = vmatprep.subr.mxu0 %v1958
  %2406 = vmatpush1.msra.mxu0 %v1957
  %2407 = vmatprep.subr.mxu0 %v1972
  %2408 = vmatpush1.msra.mxu0 %v1971
  %2409 = vmatprep.subr.mxu0 %v1986
  %2410 = vmatpush1.msra.mxu0 %v1985
  %2411 = vmatprep.subr.mxu0 %v2042
  %2412 = vmatpush1.msra.mxu0 %v2039
  %2413 = vmatprep.subr.mxu0 0.0
  %2414 = vmatpush1.msra.mxu0 0.0
  %2415 = vmatprep.subr.mxu0 0.0
  %2416 = vmatpush1.msra.mxu0 0.0
  %2417 = vmatprep.subr.mxu0 0.0
  %2418 = vmatpush1.msra.mxu0 0.0
  %2419 = vmatprep.subr.mxu0 0.0
  %2420 = vmatpush1.msra.mxu0 0.0
  %2421 = vmatprep.subr.mxu0 0.0
  %2422 = vmatpush1.msra.mxu0 0.0
  %2423 = vmatprep.subr.mxu0 0.0
  %2424 = vmatpush1.msra.mxu0 0.0
  %2425 = vmatprep.subr.mxu0 0.0
  %2426 = vmatpush1.msra.mxu0 0.0
  %2427 = vmatprep.subr.mxu0 0.0
  %2428 = vmatpush1.msra.mxu0 0.0
  %2429 = vmatprep.subr.mxu0 0.0
  %2430 = vmatpush1.msra.mxu0 0.0
  %2431 = vmatprep.subr.mxu0 0.0
  %2432 = vmatpush1.msra.mxu0 0.0
  %2433 = vmatprep.subr.mxu0 0.0
  %2434 = vmatpush1.msra.mxu0 0.0
  %2435 = vmatprep.subr.mxu0 0.0
  %2436 = vmatpush1.msra.mxu0 0.0
  %2437 = vmatprep.subr.mxu0 0.0
  %2438 = vmatpush1.msra.mxu0 0.0
  %2439 = vmatprep.subr.mxu0 0.0
  %2440 = vmatpush1.msra.mxu0 0.0
  %2441 = vmatprep.subr.mxu0 0.0
  %2442 = vmatpush1.msra.mxu0 0.0
  %2443 = vmatprep.subr.mxu0 0.0
  %2444 = vmatpush1.msra.mxu0 0.0
  %2445 = vmatprep.subr.mxu0 0.0
  %2446 = vmatpush1.msra.mxu0 0.0
  %2447 = vmatprep.subr.mxu0 0.0
  %2448 = vmatpush1.msra.mxu0 0.0
  %2449 = vmatprep.subr.mxu0 0.0
  %2450 = vmatpush1.msra.mxu0 0.0
  %2451 = vmatprep.subr.mxu0 0.0
  %2452 = vmatpush1.msra.mxu0 0.0
  %2453 = vmatprep.subr.mxu0 0.0
  %2454 = vmatpush1.msra.mxu0 0.0
  %2455 = vmatprep.subr.mxu0 0.0
  %2456 = vmatpush1.msra.mxu0 0.0
  %2457 = vmatprep.subr.mxu0 0.0
  %2458 = vmatpush1.msra.mxu0 0.0
  %2459 = vmatprep.subr.mxu0 0.0
  %2460 = vmatpush1.msra.mxu0 0.0
  %2461 = vmatprep.subr.mxu0 0.0
  %2462 = vmatpush1.msra.mxu0 0.0
  %2463 = vmatprep.subr.mxu0 0.0
  %2464 = vmatpush1.msra.mxu0 0.0
  %2465 = vmatprep.subr.mxu0 0.0
  %2466 = vmatpush1.msra.mxu0 0.0
  %2467 = vmatprep.subr.mxu0 0.0
  %2468 = vmatpush1.msra.mxu0 0.0
  %2469 = vmatprep.mubr.f32.mxu0 0.0
  %2470 = vmatmul.mubr.f32.gmra.mrb[0].mxu0 %v2005
  %v2471 = vpop.f32.mrb[0].mxu0
  %v2472 = vadd.f32 0.0, %v2471
  %v2473 = vpop.f32.mrb[0].mxu0
  %v2474 = vadd.f32 0.0, %v2473
  %2475 = vdwg.mxu0
  %2476 = vmatprep.subr.mxu0 %v1960
  %2477 = vmatpush1.msra.mxu0 %v1959
  %2478 = vmatprep.subr.mxu0 %v1974
  %2479 = vmatpush1.msra.mxu0 %v1973
  %2480 = vmatprep.subr.mxu0 %v1988
  %2481 = vmatpush1.msra.mxu0 %v1987
  %2482 = vmatprep.subr.mxu0 %v2048
  %2483 = vmatpush1.msra.mxu0 %v2045
  %2484 = vmatprep.subr.mxu0 0.0
  %2485 = vmatpush1.msra.mxu0 0.0
  %2486 = vmatprep.subr.mxu0 0.0
  %2487 = vmatpush1.msra.mxu0 0.0
  %2488 = vmatprep.subr.mxu0 0.0
  %2489 = vmatpush1.msra.mxu0 0.0
  %2490 = vmatprep.subr.mxu0 0.0
  %2491 = vmatpush1.msra.mxu0 0.0
  %2492 = vmatprep.subr.mxu0 0.0
  %2493 = vmatpush1.msra.mxu0 0.0
  %2494 = vmatprep.subr.mxu0 0.0
  %2495 = vmatpush1.msra.mxu0 0.0
  %2496 = vmatprep.subr.mxu0 0.0
  %2497 = vmatpush1.msra.mxu0 0.0
  %2498 = vmatprep.subr.mxu0 0.0
  %2499 = vmatpush1.msra.mxu0 0.0
  %2500 = vmatprep.subr.mxu0 0.0
  %2501 = vmatpush1.msra.mxu0 0.0
  %2502 = vmatprep.subr.mxu0 0.0
  %2503 = vmatpush1.msra.mxu0 0.0
  %2504 = vmatprep.subr.mxu0 0.0
  %2505 = vmatpush1.msra.mxu0 0.0
  %2506 = vmatprep.subr.mxu0 0.0
  %2507 = vmatpush1.msra.mxu0 0.0
  %2508 = vmatprep.subr.mxu0 0.0
  %2509 = vmatpush1.msra.mxu0 0.0
  %2510 = vmatprep.subr.mxu0 0.0
  %2511 = vmatpush1.msra.mxu0 0.0
  %2512 = vmatprep.subr.mxu0 0.0
  %2513 = vmatpush1.msra.mxu0 0.0
  %2514 = vmatprep.subr.mxu0 0.0
  %2515 = vmatpush1.msra.mxu0 0.0
  %2516 = vmatprep.subr.mxu0 0.0
  %2517 = vmatpush1.msra.mxu0 0.0
  %2518 = vmatprep.subr.mxu0 0.0
  %2519 = vmatpush1.msra.mxu0 0.0
  %2520 = vmatprep.subr.mxu0 0.0
  %2521 = vmatpush1.msra.mxu0 0.0
  %2522 = vmatprep.subr.mxu0 0.0
  %2523 = vmatpush1.msra.mxu0 0.0
  %2524 = vmatprep.subr.mxu0 0.0
  %2525 = vmatpush1.msra.mxu0 0.0
  %2526 = vmatprep.subr.mxu0 0.0
  %2527 = vmatpush1.msra.mxu0 0.0
  %2528 = vmatprep.subr.mxu0 0.0
  %2529 = vmatpush1.msra.mxu0 0.0
  %2530 = vmatprep.subr.mxu0 0.0
  %2531 = vmatpush1.msra.mxu0 0.0
  %2532 = vmatprep.subr.mxu0 0.0
  %2533 = vmatpush1.msra.mxu0 0.0
  %2534 = vmatprep.subr.mxu0 0.0
  %2535 = vmatpush1.msra.mxu0 0.0
  %2536 = vmatprep.subr.mxu0 0.0
  %2537 = vmatpush1.msra.mxu0 0.0
  %2538 = vmatprep.subr.mxu0 0.0
  %2539 = vmatpush1.msra.mxu0 0.0
  %2540 = vmatprep.mubr.f32.mxu0 0.0
  %2541 = vmatmul.mubr.f32.gmra.mrb[0].mxu0 %v2005
  %v2542 = vpop.f32.mrb[0].mxu0
  %v2543 = vadd.f32 0.0, %v2542
  %v2544 = vpop.f32.mrb[0].mxu0
  %v2545 = vadd.f32 0.0, %v2544
  %2546 = vdwg.mxu0
  %v2547 = vadd.f32 %v2117, %v2119
  %v2548 = vadd.f32 %v2547, %v2188
  %v2549 = vadd.f32 %v2548, %v2190
  %v2550 = vadd.f32 %v2549, %v2259
  %v2551 = vadd.f32 %v2550, %v2261
  %v2552 = vadd.f32 %v2551, %v2330
  %v2553 = vadd.f32 %v2552, %v2332
  %v2554 = vadd.f32 %v2553, %v2401
  %v2555 = vadd.f32 %v2554, %v2403
  %v2556 = vadd.f32 %v2555, %v2472
  %v2557 = vadd.f32 %v2556, %v2474
  %v2558 = vadd.f32 %v2557, %v2543
  %v2559 = vadd.f32 %v2558, %v2545
  %2560 = vadd.xlane.f32.xlu0 %v2559
  %v2561 = vpop.xlane.xlu0 %2560
  %v2562 = vmul.f32 %v2561, 0.00055803574
  %v2563 = vsub.f32 %v2117, %v2562
  %v2564 = vsub.f32 %v2119, %v2562
  %v2565 = vsub.f32 %v2188, %v2562
  %v2566 = vsub.f32 %v2190, %v2562
  %v2567 = vsub.f32 %v2259, %v2562
  %v2568 = vsub.f32 %v2261, %v2562
  %v2569 = vsub.f32 %v2330, %v2562
  %v2570 = vsub.f32 %v2332, %v2562
  %v2571 = vsub.f32 %v2401, %v2562
  %v2572 = vsub.f32 %v2403, %v2562
  %v2573 = vsub.f32 %v2472, %v2562
  %v2574 = vsub.f32 %v2474, %v2562
  %v2575 = vsub.f32 %v2543, %v2562
  %v2576 = vsub.f32 %v2545, %v2562
  %v2577 = vmul.f32 %v2563, %v2563
  %v2578 = vmul.f32 %v2564, %v2564
  %v2579 = vmul.f32 %v2565, %v2565
  %v2580 = vmul.f32 %v2566, %v2566
  %v2581 = vmul.f32 %v2567, %v2567
  %v2582 = vmul.f32 %v2568, %v2568
  %v2583 = vmul.f32 %v2569, %v2569
  %v2584 = vmul.f32 %v2570, %v2570
  %v2585 = vmul.f32 %v2571, %v2571
  %v2586 = vmul.f32 %v2572, %v2572
  %v2587 = vmul.f32 %v2573, %v2573
  %v2588 = vmul.f32 %v2574, %v2574
  %v2589 = vmul.f32 %v2575, %v2575
  %v2590 = vmul.f32 %v2576, %v2576
  %v2591 = vadd.f32 %v2577, %v2578
  %v2592 = vadd.f32 %v2591, %v2579
  %v2593 = vadd.f32 %v2592, %v2580
  %v2594 = vadd.f32 %v2593, %v2581
  %v2595 = vadd.f32 %v2594, %v2582
  %v2596 = vadd.f32 %v2595, %v2583
  %v2597 = vadd.f32 %v2596, %v2584
  %v2598 = vadd.f32 %v2597, %v2585
  %v2599 = vadd.f32 %v2598, %v2586
  %v2600 = vadd.f32 %v2599, %v2587
  %v2601 = vadd.f32 %v2600, %v2588
  %v2602 = vadd.f32 %v2601, %v2589
  %v2603 = vadd.f32 %v2602, %v2590
  %2604 = vadd.xlane.f32.xlu0 %v2603
  %v2605 = vpop.xlane.xlu0 %2604
  %v2606 = vmul.f32 %v2605, 0.00055803574
  %v2607 = vld [vmem:[%s4] sm:$0xff]
  %v2608 = vadd.f32 %v2606, 1e-05
  %v2609 = vrsqrt.pop %v2608
  %v2610 = vmul.f32 %v2607, %v2609
  %2612 = vset.pattern.permute.xlu0 0
  %2613 = vperm.xlu0 %2612, %v2610
  %v2614 = vpop.permute.xlu0 %2613
  %v2616 = vmul.f32 %v2563, %v2614
  %v2617 = vmul.f32 %v2564, %v2614
  %v2618 = vmul.f32 %v2565, %v2614
  %v2619 = vmul.f32 %v2566, %v2614
  %v2620 = vmul.f32 %v2567, %v2614
  %v2621 = vmul.f32 %v2568, %v2614
  %v2622 = vmul.f32 %v2569, %v2614
  %v2623 = vmul.f32 %v2570, %v2614
  %v2624 = vmul.f32 %v2571, %v2614
  %v2625 = vmul.f32 %v2572, %v2614
  %v2626 = vmul.f32 %v2573, %v2614
  %v2627 = vmul.f32 %v2574, %v2614
  %v2628 = vmul.f32 %v2575, %v2614
  %v2629 = vmul.f32 %v2576, %v2614
  %v2630 = vld [vmem:[%s7] sm:$0xff]
  %2632 = vset.pattern.permute.xlu0 0
  %2633 = vperm.xlu0 %2632, %v2630
  %v2634 = vpop.permute.xlu0 %2633
  %v2636 = vadd.f32 %v2616, %v2634
  %v2637 = vadd.f32 %v2617, %v2634
  %v2638 = vadd.f32 %v2618, %v2634
  %v2639 = vadd.f32 %v2619, %v2634
  %v2640 = vadd.f32 %v2620, %v2634
  %v2641 = vadd.f32 %v2621, %v2634
  %v2642 = vadd.f32 %v2622, %v2634
  %v2643 = vadd.f32 %v2623, %v2634
  %v2644 = vadd.f32 %v2624, %v2634
  %v2645 = vadd.f32 %v2625, %v2634
  %v2646 = vadd.f32 %v2626, %v2634
  %v2647 = vadd.f32 %v2627, %v2634
  %v2648 = vadd.f32 %v2628, %v2634
  %v2649 = vadd.f32 %v2629, %v2634
  %v2650 = vmax.f32 %v2636, 0.0
  %v2651 = vmax.f32 %v2637, 0.0
  %v2652 = vmax.f32 %v2638, 0.0
  %v2653 = vmax.f32 %v2639, 0.0
  %v2654 = vmax.f32 %v2640, 0.0
  %v2655 = vmax.f32 %v2641, 0.0
  %v2656 = vmax.f32 %v2642, 0.0
  %v2657 = vmax.f32 %v2643, 0.0
  %v2658 = vmax.f32 %v2644, 0.0
  %v2659 = vmax.f32 %v2645, 0.0
  %v2660 = vmax.f32 %v2646, 0.0
  %v2661 = vmax.f32 %v2647, 0.0
  %v2662 = vmax.f32 %v2648, 0.0
  %v2663 = vmax.f32 %v2649, 0.0
  %2664 = vst [vmem:[#allocation4] sm:$0xff] %v2650
  %2665 = vst [vmem:[#allocation4 + $0x8] sm:$0xff] %v2651
  %2666 = vst [vmem:[#allocation4 + $0x10] sm:$0xff] %v2652
  %2667 = vst [vmem:[#allocation4 + $0x18] sm:$0xff] %v2653
  %2668 = vst [vmem:[#allocation4 + $0x20] sm:$0xff] %v2654
  %2669 = vst [vmem:[#allocation4 + $0x28] sm:$0xff] %v2655
  %2670 = vst [vmem:[#allocation4 + $0x30] sm:$0xff] %v2656
  %2671 = vst [vmem:[#allocation4 + $0x38] sm:$0xff] %v2657
  %2672 = vst [vmem:[#allocation4 + $0x40] sm:$0xff] %v2658
  %2673 = vst [vmem:[#allocation4 + $0x48] sm:$0xff] %v2659
  %2674 = vst [vmem:[#allocation4 + $0x50] sm:$0xff] %v2660
  %2675 = vst [vmem:[#allocation4 + $0x58] sm:$0xff] %v2661
  %2676 = vst [vmem:[#allocation4 + $0x60] sm:$0xff] %v2662
  %2677 = vst [vmem:[#allocation4 + $0x68] sm:$0xff] %v2663
  %2678 = vst.msk [vmem:[#allocation4 + $0x70] sm:$0xff] %vm96, 0.0
  %v2679 = vld [vmem:[#allocation4] sm:$0xff]
  %v2680 = vld [vmem:[#allocation4 + $0x8] sm:$0xff]
  %v2681 = vld [vmem:[#allocation4 + $0x10] sm:$0xff]
  %v2682 = vld [vmem:[#allocation4 + $0x18] sm:$0xff]
  %v2683 = vld [vmem:[#allocation4 + $0x20] sm:$0xff]
  %v2684 = vld [vmem:[#allocation4 + $0x28] sm:$0xff]
  %v2685 = vld [vmem:[#allocation4 + $0x30] sm:$0xff]
  %v2686 = vld [vmem:[#allocation4 + $0x38] sm:$0xff]
  %v2687 = vld [vmem:[#allocation4 + $0x40] sm:$0xff]
  %v2688 = vld [vmem:[#allocation4 + $0x48] sm:$0xff]
  %v2689 = vld [vmem:[#allocation4 + $0x50] sm:$0xff]
  %v2690 = vld [vmem:[#allocation4 + $0x58] sm:$0xff]
  %v2691 = vld [vmem:[#allocation4 + $0x60] sm:$0xff]
  %v2692 = vld [vmem:[#allocation4 + $0x68] sm:$0xff]
  %v2693 = vld [vmem:[#allocation4 + $0x70] sm:$0xff]
  %2709 = vrot.lane.b32.xlu0 %v2679, 127
  %v2710 = vpop.permute.xlu0 %2709
  %2711 = vrot.lane.b32.xlu0 %v2680, 127
  %v2712 = vpop.permute.xlu0 %2711
  %2713 = vrot.lane.b32.xlu0 %v2681, 127
  %v2714 = vpop.permute.xlu0 %2713
  %2715 = vrot.lane.b32.xlu0 %v2682, 127
  %v2716 = vpop.permute.xlu0 %2715
  %2717 = vrot.lane.b32.xlu0 %v2683, 127
  %v2718 = vpop.permute.xlu0 %2717
  %2719 = vrot.lane.b32.xlu0 %v2684, 127
  %v2720 = vpop.permute.xlu0 %2719
  %2721 = vrot.lane.b32.xlu0 %v2685, 127
  %v2722 = vpop.permute.xlu0 %2721
  %2723 = vrot.lane.b32.xlu0 %v2686, 127
  %v2724 = vpop.permute.xlu0 %2723
  %2725 = vrot.lane.b32.xlu0 %v2687, 127
  %v2726 = vpop.permute.xlu0 %2725
  %2727 = vrot.lane.b32.xlu0 %v2688, 127
  %v2728 = vpop.permute.xlu0 %2727
  %2729 = vrot.lane.b32.xlu0 %v2689, 127
  %v2730 = vpop.permute.xlu0 %2729
  %2731 = vrot.lane.b32.xlu0 %v2690, 127
  %v2732 = vpop.permute.xlu0 %2731
  %2733 = vrot.lane.b32.xlu0 %v2691, 127
  %v2734 = vpop.permute.xlu0 %2733
  %2735 = vrot.lane.b32.xlu0 %v2692, 127
  %v2736 = vpop.permute.xlu0 %2735
  %2737 = vrot.lane.b32.xlu0 %v2693, 127
  %v2738 = vpop.permute.xlu0 %2737
  %v2739 = vsel %vm452, %v2710, %v2712
  %v2740 = vsel %vm452, %v2712, %v2714
  %v2741 = vsel %vm452, %v2714, %v2716
  %v2742 = vsel %vm452, %v2716, %v2718
  %v2743 = vsel %vm452, %v2718, %v2720
  %v2744 = vsel %vm452, %v2720, %v2722
  %v2745 = vsel %vm452, %v2722, %v2724
  %v2746 = vsel %vm452, %v2724, %v2726
  %v2747 = vsel %vm452, %v2726, %v2728
  %v2748 = vsel %vm452, %v2728, %v2730
  %v2749 = vsel %vm452, %v2730, %v2732
  %v2750 = vsel %vm452, %v2732, %v2734
  %v2751 = vsel %vm452, %v2734, %v2736
  %v2752 = vsel %vm452, %v2736, %v2738
  %v2767 = vmax.f32 %v2650, %v2739
  %v2768 = vmax.f32 %v2651, %v2740
  %v2769 = vmax.f32 %v2652, %v2741
  %v2770 = vmax.f32 %v2653, %v2742
  %v2771 = vmax.f32 %v2654, %v2743
  %v2772 = vmax.f32 %v2655, %v2744
  %v2773 = vmax.f32 %v2656, %v2745
  %v2774 = vmax.f32 %v2657, %v2746
  %v2775 = vmax.f32 %v2658, %v2747
  %v2776 = vmax.f32 %v2659, %v2748
  %v2777 = vmax.f32 %v2660, %v2749
  %v2778 = vmax.f32 %v2661, %v2750
  %v2779 = vmax.f32 %v2662, %v2751
  %v2780 = vmax.f32 %v2663, %v2752
  %v2782 = vmax.f32 %v2679, %v2739
  %v2783 = vmax.f32 %v2680, %v2740
  %v2784 = vmax.f32 %v2681, %v2741
  %v2785 = vmax.f32 %v2682, %v2742
  %v2786 = vmax.f32 %v2683, %v2743
  %v2787 = vmax.f32 %v2684, %v2744
  %v2788 = vmax.f32 %v2685, %v2745
  %v2789 = vmax.f32 %v2686, %v2746
  %v2790 = vmax.f32 %v2687, %v2747
  %v2791 = vmax.f32 %v2688, %v2748
  %v2792 = vmax.f32 %v2689, %v2749
  %v2793 = vmax.f32 %v2690, %v2750
  %v2794 = vmax.f32 %v2691, %v2751
  %v2795 = vmax.f32 %v2692, %v2752
  %v2796 = vmax.f32 %v2693, %v2738
  %2812 = vrot.lane.b32.xlu0 %v2782, 112
  %v2813 = vpop.permute.xlu0 %2812
  %2814 = vrot.lane.b32.xlu0 %v2783, 112
  %v2815 = vpop.permute.xlu0 %2814
  %2816 = vrot.lane.b32.xlu0 %v2784, 112
  %v2817 = vpop.permute.xlu0 %2816
  %2818 = vrot.lane.b32.xlu0 %v2785, 112
  %v2819 = vpop.permute.xlu0 %2818
  %2820 = vrot.lane.b32.xlu0 %v2786, 112
  %v2821 = vpop.permute.xlu0 %2820
  %2822 = vrot.lane.b32.xlu0 %v2787, 112
  %v2823 = vpop.permute.xlu0 %2822
  %2824 = vrot.lane.b32.xlu0 %v2788, 112
  %v2825 = vpop.permute.xlu0 %2824
  %2826 = vrot.lane.b32.xlu0 %v2789, 112
  %v2827 = vpop.permute.xlu0 %2826
  %2828 = vrot.lane.b32.xlu0 %v2790, 112
  %v2829 = vpop.permute.xlu0 %2828
  %2830 = vrot.lane.b32.xlu0 %v2791, 112
  %v2831 = vpop.permute.xlu0 %2830
  %2832 = vrot.lane.b32.xlu0 %v2792, 112
  %v2833 = vpop.permute.xlu0 %2832
  %2834 = vrot.lane.b32.xlu0 %v2793, 112
  %v2835 = vpop.permute.xlu0 %2834
  %2836 = vrot.lane.b32.xlu0 %v2794, 112
  %v2837 = vpop.permute.xlu0 %2836
  %2838 = vrot.lane.b32.xlu0 %v2795, 112
  %v2839 = vpop.permute.xlu0 %2838
  %2840 = vrot.lane.b32.xlu0 %v2796, 112
  %v2841 = vpop.permute.xlu0 %2840
  %v2842 = vsel %vm936, %v2813, %v2815
  %v2843 = vsel %vm936, %v2815, %v2817
  %v2844 = vsel %vm936, %v2817, %v2819
  %v2845 = vsel %vm936, %v2819, %v2821
  %v2846 = vsel %vm936, %v2821, %v2823
  %v2847 = vsel %vm936, %v2823, %v2825
  %v2848 = vsel %vm936, %v2825, %v2827
  %v2849 = vsel %vm936, %v2827, %v2829
  %v2850 = vsel %vm936, %v2829, %v2831
  %v2851 = vsel %vm936, %v2831, %v2833
  %v2852 = vsel %vm936, %v2833, %v2835
  %v2853 = vsel %vm936, %v2835, %v2837
  %v2854 = vsel %vm936, %v2837, %v2839
  %v2855 = vsel %vm936, %v2839, %v2841
  %v2870 = vmax.f32 %v2767, %v2842
  %v2871 = vmax.f32 %v2768, %v2843
  %v2872 = vmax.f32 %v2769, %v2844
  %v2873 = vmax.f32 %v2770, %v2845
  %v2874 = vmax.f32 %v2771, %v2846
  %v2875 = vmax.f32 %v2772, %v2847
  %v2876 = vmax.f32 %v2773, %v2848
  %v2877 = vmax.f32 %v2774, %v2849
  %v2878 = vmax.f32 %v2775, %v2850
  %v2879 = vmax.f32 %v2776, %v2851
  %v2880 = vmax.f32 %v2777, %v2852
  %v2881 = vmax.f32 %v2778, %v2853
  %v2882 = vmax.f32 %v2779, %v2854
  %v2883 = vmax.f32 %v2780, %v2855
  %2884 = vst [vmem:[#allocation11] sm:$0xff] %v2870
  %2885 = vst [vmem:[#allocation11 + $0x8] sm:$0xff] %v2871
  %2886 = vst [vmem:[#allocation11 + $0x10] sm:$0xff] %v2872
  %2887 = vst [vmem:[#allocation11 + $0x18] sm:$0xff] %v2873
  %2888 = vst [vmem:[#allocation11 + $0x20] sm:$0xff] %v2874
  %2889 = vst [vmem:[#allocation11 + $0x28] sm:$0xff] %v2875
  %2890 = vst [vmem:[#allocation11 + $0x30] sm:$0xff] %v2876
  %2891 = vst [vmem:[#allocation11 + $0x38] sm:$0xff] %v2877
  %2892 = vst [vmem:[#allocation11 + $0x40] sm:$0xff] %v2878
  %2893 = vst [vmem:[#allocation11 + $0x48] sm:$0xff] %v2879
  %2894 = vst [vmem:[#allocation11 + $0x50] sm:$0xff] %v2880
  %2895 = vst [vmem:[#allocation11 + $0x58] sm:$0xff] %v2881
  %2896 = vst [vmem:[#allocation11 + $0x60] sm:$0xff] %v2882
  %2897 = vst [vmem:[#allocation11 + $0x68] sm:$0xff] %v2883
  %v2898 = vld [vmem:[#allocation11] sm:$0xff]
  %v2899 = vld [vmem:[#allocation11 + $0x8] sm:$0xff]
  %v2900 = vld [vmem:[#allocation11 + $0x10] sm:$0xff]
  %v2901 = vld [vmem:[#allocation11 + $0x18] sm:$0xff]
  %v2902 = vld [vmem:[#allocation11 + $0x20] sm:$0xff]
  %v2903 = vld [vmem:[#allocation11 + $0x28] sm:$0xff]
  %v2904 = vld [vmem:[#allocation11 + $0x30] sm:$0xff]
  %v2905 = vld [vmem:[#allocation11 + $0x38] sm:$0xff]
  %v2906 = vld [vmem:[#allocation11 + $0x40] sm:$0xff]
  %v2907 = vld [vmem:[#allocation11 + $0x48] sm:$0xff]
  %v2908 = vld [vmem:[#allocation11 + $0x50] sm:$0xff]
  %v2909 = vld [vmem:[#allocation11 + $0x58] sm:$0xff]
  %v2910 = vld [vmem:[#allocation11 + $0x60] sm:$0xff]
  %v2911 = vld [vmem:[#allocation11 + $0x68] sm:$0xff]
  %v2912 = vld [vmem:[%s13] sm:$0xff]
  %v2913 = vld [vmem:[%s13 + $0x8] sm:$0xff]
  %v2914 = vld [vmem:[%s13 + $0x10] sm:$0xff]
  %v2915 = vld [vmem:[%s13 + $0x18] sm:$0xff]
  %v2916 = vld [vmem:[%s13 + $0x20] sm:$0xff]
  %v2917 = vld [vmem:[%s13 + $0x28] sm:$0xff]
  %v2918 = vld [vmem:[%s13 + $0x30] sm:$0xff]
  %v2919 = vld [vmem:[%s13 + $0x38] sm:$0xff]
  %v2920 = vld [vmem:[%s13 + $0x40] sm:$0xff]
  %v2921 = vld [vmem:[%s13 + $0x48] sm:$0xff]
  %v2922 = vld [vmem:[%s13 + $0x50] sm:$0xff]
  %v2923 = vld [vmem:[%s13 + $0x58] sm:$0xff]
  %v2924 = vld [vmem:[%s13 + $0x60] sm:$0xff]
  %v2925 = vld [vmem:[%s13 + $0x68] sm:$0xff]
  %v2926 = vld [vmem:[%s13 + $0x70] sm:$0xff]
  %v2927 = vld [vmem:[%s13 + $0x78] sm:$0xff]
  %v2928 = vld [vmem:[%s13 + $0x80] sm:$0xff]
  %v2929 = vld [vmem:[%s13 + $0x88] sm:$0xff]
  %v2930 = vld [vmem:[%s13 + $0x90] sm:$0xff]
  %v2931 = vld [vmem:[%s13 + $0x98] sm:$0xff]
  %v2932 = vld [vmem:[%s13 + $0xa0] sm:$0xff]
  %v2933 = vld [vmem:[%s13 + $0xa8] sm:$0xff]
  %v2934 = vld [vmem:[%s13 + $0xb0] sm:$0xff]
  %v2935 = vld [vmem:[%s13 + $0xb8] sm:$0xff]
  %v2936 = vld [vmem:[%s13 + $0xc0] sm:$0xff]
  %v2937 = vld [vmem:[%s13 + $0xc8] sm:$0xff]
  %v2938 = vld [vmem:[%s13 + $0xd0] sm:$0xff]
  %v2939 = vld [vmem:[%s13 + $0xd8] sm:$0xff]
  %v2940 = vld [vmem:[%s13 + $0xe0] sm:$0xff]
  %v2941 = vld [vmem:[%s13 + $0xe8] sm:$0xff]
  %v2942 = vld [vmem:[%s13 + $0xf0] sm:$0xff]
  %v2943 = vld [vmem:[%s13 + $0xf8] sm:$0xff]
  %2944 = vmatprep.subr.mxu0 0.0
  %2945 = vmatpush1.msra.mxu0 %v2912
  %2946 = vmatprep.subr.mxu0 0.0
  %2947 = vmatpush1.msra.mxu0 %v2913
  %2948 = vmatprep.subr.mxu0 0.0
  %2949 = vmatpush1.msra.mxu0 %v2914
  %2950 = vmatprep.subr.mxu0 0.0
  %2951 = vmatpush1.msra.mxu0 %v2915
  %2952 = vmatprep.subr.mxu0 0.0
  %2953 = vmatpush1.msra.mxu0 %v2916
  %2954 = vmatprep.subr.mxu0 0.0
  %2955 = vmatpush1.msra.mxu0 %v2917
  %2956 = vmatprep.subr.mxu0 0.0
  %2957 = vmatpush1.msra.mxu0 %v2918
  %2958 = vmatprep.subr.mxu0 0.0
  %2959 = vmatpush1.msra.mxu0 %v2919
  %2960 = vmatprep.subr.mxu0 0.0
  %2961 = vmatpush1.msra.mxu0 %v2920
  %2962 = vmatprep.subr.mxu0 0.0
  %2963 = vmatpush1.msra.mxu0 %v2921
  %2964 = vmatprep.subr.mxu0 0.0
  %2965 = vmatpush1.msra.mxu0 %v2922
  %2966 = vmatprep.subr.mxu0 0.0
  %2967 = vmatpush1.msra.mxu0 %v2923
  %2968 = vmatprep.subr.mxu0 0.0
  %2969 = vmatpush1.msra.mxu0 %v2924
  %2970 = vmatprep.subr.mxu0 0.0
  %2971 = vmatpush1.msra.mxu0 %v2925
  %2972 = vmatprep.subr.mxu0 0.0
  %2973 = vmatpush1.msra.mxu0 %v2926
  %2974 = vmatprep.subr.mxu0 0.0
  %2975 = vmatpush1.msra.mxu0 %v2927
  %2976 = vmatprep.subr.mxu0 0.0
  %2977 = vmatpush1.msra.mxu0 %v2928
  %2978 = vmatprep.subr.mxu0 0.0
  %2979 = vmatpush1.msra.mxu0 %v2929
  %2980 = vmatprep.subr.mxu0 0.0
  %2981 = vmatpush1.msra.mxu0 %v2930
  %2982 = vmatprep.subr.mxu0 0.0
  %2983 = vmatpush1.msra.mxu0 %v2931
  %2984 = vmatprep.subr.mxu0 0.0
  %2985 = vmatpush1.msra.mxu0 %v2932
  %2986 = vmatprep.subr.mxu0 0.0
  %2987 = vmatpush1.msra.mxu0 %v2933
  %2988 = vmatprep.subr.mxu0 0.0
  %2989 = vmatpush1.msra.mxu0 %v2934
  %2990 = vmatprep.subr.mxu0 0.0
  %2991 = vmatpush1.msra.mxu0 %v2935
  %2992 = vmatprep.subr.mxu0 0.0
  %2993 = vmatpush1.msra.mxu0 %v2936
  %2994 = vmatprep.subr.mxu0 0.0
  %2995 = vmatpush1.msra.mxu0 %v2937
  %2996 = vmatprep.subr.mxu0 0.0
  %2997 = vmatpush1.msra.mxu0 %v2938
  %2998 = vmatprep.subr.mxu0 0.0
  %2999 = vmatpush1.msra.mxu0 %v2939
  %3000 = vmatprep.subr.mxu0 0.0
  %3001 = vmatpush1.msra.mxu0 %v2940
  %3002 = vmatprep.subr.mxu0 0.0
  %3003 = vmatpush1.msra.mxu0 %v2941
  %3004 = vmatprep.subr.mxu0 0.0
  %3005 = vmatpush1.msra.mxu0 %v2942
  %3006 = vmatprep.subr.mxu0 0.0
  %3007 = vmatpush1.msra.mxu0 %v2943
  %3008 = vmatprep.mubr.f32.mxu0 %v2899
  %3009 = vmatmul.mubr.f32.gmra.mrb[0].mxu0 %v2898
  %v3010 = vpop.f32.mrb[0].mxu0
  %v3011 = vadd.f32 0.0, %v3010
  %v3012 = vpop.f32.mrb[0].mxu0
  %3013 = vmatprep.mubr.f32.mxu0 %v2901
  %3014 = vmatmul.mubr.f32.gmra.mrb[0].mxu0 %v2900
  %v3015 = vpop.f32.mrb[0].mxu0
  %v3016 = vadd.f32 0.0, %v3015
  %v3017 = vpop.f32.mrb[0].mxu0
  %3018 = vmatprep.mubr.f32.mxu0 %v2903
  %3019 = vmatmul.mubr.f32.gmra.mrb[0].mxu0 %v2902
  %v3020 = vpop.f32.mrb[0].mxu0
  %v3021 = vadd.f32 0.0, %v3020
  %v3022 = vpop.f32.mrb[0].mxu0
  %3023 = vmatprep.mubr.f32.mxu0 %v2905
  %3024 = vmatmul.mubr.f32.gmra.mrb[0].mxu0 %v2904
  %v3025 = vpop.f32.mrb[0].mxu0
  %v3026 = vadd.f32 0.0, %v3025
  %v3027 = vpop.f32.mrb[0].mxu0
  %3028 = vmatprep.mubr.f32.mxu0 %v2907
  %3029 = vmatmul.mubr.f32.gmra.mrb[0].mxu0 %v2906
  %v3030 = vpop.f32.mrb[0].mxu0
  %v3031 = vadd.f32 0.0, %v3030
  %v3032 = vpop.f32.mrb[0].mxu0
  %3033 = vmatprep.mubr.f32.mxu0 %v2909
  %3034 = vmatmul.mubr.f32.gmra.mrb[0].mxu0 %v2908
  %v3035 = vpop.f32.mrb[0].mxu0
  %v3036 = vadd.f32 0.0, %v3035
  %v3037 = vpop.f32.mrb[0].mxu0
  %3038 = vmatprep.mubr.f32.mxu0 %v2911
  %3039 = vmatmul.mubr.f32.gmra.mrb[0].mxu0 %v2910
  %v3040 = vpop.f32.mrb[0].mxu0
  %v3041 = vadd.f32 0.0, %v3040
  %v3042 = vpop.f32.mrb[0].mxu0
  %3043 = vdwg.mxu0
  %vm3044 = vcmask 523264
  %3045 = vst.msk [vmem:[#allocation12] sm:$0xff] %vm3044, %v3011
  %3047 = vrot.lane.b32.xlu0 %v3016, 64
  %v3048 = vpop.permute.xlu0 %3047
  %vm3050 = vcmask 1048064
  %3051 = vst.msk [vmem:[#allocation12] sm:$0xff] %vm3050, %v3048
  %3052 = vst.msk [vmem:[#allocation12 + $0x8] sm:$0xff] %vm3044, %v3021
  %3054 = vrot.lane.b32.xlu0 %v3026, 64
  %v3055 = vpop.permute.xlu0 %3054
  %3057 = vst.msk [vmem:[#allocation12 + $0x8] sm:$0xff] %vm3050, %v3055
  %3058 = vst.msk [vmem:[#allocation12 + $0x10] sm:$0xff] %vm3044, %v3031
  %3060 = vrot.lane.b32.xlu0 %v3036, 64
  %v3061 = vpop.permute.xlu0 %3060
  %3063 = vst.msk [vmem:[#allocation12 + $0x10] sm:$0xff] %vm3050, %v3061
  %3064 = vst.msk [vmem:[#allocation12 + $0x18] sm:$0xff] %vm3044, %v3041
  %v3065 = vld [vmem:[#allocation12] sm:$0xff]
  %v3066 = vld [vmem:[#allocation12 + $0x8] sm:$0xff]
  %v3067 = vld [vmem:[#allocation12 + $0x10] sm:$0xff]
  %v3068 = vld [vmem:[#allocation12 + $0x18] sm:$0xff]
  %vm3069 = vcmask 72704
  %3070 = vst.msk [vmem:[#allocation5] sm:$0xff] %vm3069, 0.0
  %3075 = vrot.lane.b32.xlu0 %v3065, 9
  %v3076 = vpop.permute.xlu0 %3075
  %3077 = vrot.lane.b32.xlu0 %v3066, 9
  %v3078 = vpop.permute.xlu0 %3077
  %3079 = vrot.lane.b32.xlu0 %v3067, 9
  %v3080 = vpop.permute.xlu0 %3079
  %3081 = vrot.lane.b32.xlu0 %v3068, 9
  %v3082 = vpop.permute.xlu0 %3081
  %v3083 = vsel %vm3069, %v3076, %v3078
  %v3084 = vsel %vm3069, %v3078, %v3080
  %v3085 = vsel %vm3069, %v3080, %v3082
  %vm3090 = vcmask 1047624
  %3091 = vst.msk [vmem:[#allocation5] sm:$0xff] %vm3090, %v3076
  %3092 = vst [vmem:[#allocation5 + $0x8] sm:$0xff] %v3083
  %3093 = vst [vmem:[#allocation5 + $0x10] sm:$0xff] %v3084
  %vm3094 = vcmask 596992
  %3095 = vst.msk [vmem:[#allocation5 + $0x18] sm:$0xff] %vm3094, %v3085
  %vm3096 = vcmask 671304
  %3097 = vst.msk [vmem:[#allocation5 + $0x18] sm:$0xff] %vm3096, 0.0
  %v3098 = vld [vmem:[#allocation5] sm:$0xff]
  %v3099 = vld [vmem:[#allocation5 + $0x8] sm:$0xff]
  %v3100 = vld [vmem:[#allocation5 + $0x10] sm:$0xff]
  %v3101 = vld [vmem:[#allocation5 + $0x18] sm:$0xff]
  %v3102 = vld [vmem:[%s11] ss:$8 sm:$0xf]
  %v3104 = vlaneseq
  %v3105 = vshrl.u32 %v3104, 7
  %v3106 = vsub.s32 0, %v3105
  %v3107 = vrot.slane %v3102, %v3106
  %v3108 = vlaneseq
  %v3109 = vshrl.u32 %v3108, 7
  %v3110 = vsub.s32 1, %v3109
  %v3111 = vrot.slane %v3102, %v3110
  %v3112 = vlaneseq
  %v3113 = vshrl.u32 %v3112, 7
  %v3114 = vsub.s32 2, %v3113
  %v3115 = vrot.slane %v3102, %v3114
  %v3116 = vlaneseq
  %v3117 = vshrl.u32 %v3116, 7
  %v3118 = vsub.s32 3, %v3117
  %v3119 = vrot.slane %v3102, %v3118
  %v3124 = vmul.f32 %v3098, %v3107
  %v3125 = vmul.f32 %v3099, %v3111
  %v3126 = vmul.f32 %v3100, %v3115
  %v3127 = vmul.f32 %v3101, %v3119
  %3128 = vst [vmem:[#allocation6] sm:$0xff] %v3124
  %3129 = vst [vmem:[#allocation6 + $0x8] sm:$0xff] %v3125
  %3130 = vst [vmem:[#allocation6 + $0x10] sm:$0xff] %v3126
  %3131 = vst.msk [vmem:[#allocation6 + $0x18] sm:$0xff] %vm3044, %v3127
  %v3132 = vld [vmem:[#allocation5] sm:$0xff]
  %v3133 = vld [vmem:[#allocation5 + $0x8] sm:$0xff]
  %v3134 = vld [vmem:[#allocation5 + $0x10] sm:$0xff]
  %v3135 = vld [vmem:[#allocation5 + $0x18] sm:$0xff]
  %s3136 = scalar_lea.vmem %s11, 1
  %v3137 = vld [vmem:[%s3136] ss:$8 sm:$0xf]
  %v3139 = vlaneseq
  %v3140 = vshrl.u32 %v3139, 7
  %v3141 = vsub.s32 0, %v3140
  %v3142 = vrot.slane %v3137, %v3141
  %v3143 = vlaneseq
  %v3144 = vshrl.u32 %v3143, 7
  %v3145 = vsub.s32 1, %v3144
  %v3146 = vrot.slane %v3137, %v3145
  %v3147 = vlaneseq
  %v3148 = vshrl.u32 %v3147, 7
  %v3149 = vsub.s32 2, %v3148
  %v3150 = vrot.slane %v3137, %v3149
  %v3151 = vlaneseq
  %v3152 = vshrl.u32 %v3151, 7
  %v3153 = vsub.s32 3, %v3152
  %v3154 = vrot.slane %v3137, %v3153
  %3155 = vrot.lane.b32.xlu0 %v3142, 1
  %v3156 = vpop.permute.xlu0 %3155
  %3157 = vrot.lane.b32.xlu0 %v3146, 1
  %v3158 = vpop.permute.xlu0 %3157
  %3159 = vrot.lane.b32.xlu0 %v3150, 1
  %v3160 = vpop.permute.xlu0 %3159
  %3161 = vrot.lane.b32.xlu0 %v3154, 1
  %v3162 = vpop.permute.xlu0 %3161
  %v3163 = vsel %vm362, %v3156, %v3158
  %v3164 = vsel %vm362, %v3158, %v3160
  %v3165 = vsel %vm362, %v3160, %v3162
  %v3170 = vmul.f32 %v3132, %v3156
  %v3171 = vmul.f32 %v3133, %v3163
  %v3172 = vmul.f32 %v3134, %v3164
  %v3173 = vmul.f32 %v3135, %v3165
  %3178 = vrot.lane.b32.xlu0 %v3170, 127
  %v3179 = vpop.permute.xlu0 %3178
  %3180 = vrot.lane.b32.xlu0 %v3171, 127
  %v3181 = vpop.permute.xlu0 %3180
  %3182 = vrot.lane.b32.xlu0 %v3172, 127
  %v3183 = vpop.permute.xlu0 %3182
  %3184 = vrot.lane.b32.xlu0 %v3173, 127
  %v3185 = vpop.permute.xlu0 %3184
  %v3186 = vsel %vm452, %v3179, %v3181
  %v3187 = vsel %vm452, %v3181, %v3183
  %v3188 = vsel %vm452, %v3183, %v3185
  %3193 = vst [vmem:[#allocation6 + $0x20] sm:$0xff] %v3186
  %3194 = vst [vmem:[#allocation6 + $0x28] sm:$0xff] %v3187
  %3195 = vst [vmem:[#allocation6 + $0x30] sm:$0xff] %v3188
  %3196 = vst.msk [vmem:[#allocation6 + $0x38] sm:$0xff] %vm3044, %v3185
  %v3197 = vld [vmem:[#allocation5] sm:$0xff]
  %v3198 = vld [vmem:[#allocation5 + $0x8] sm:$0xff]
  %v3199 = vld [vmem:[#allocation5 + $0x10] sm:$0xff]
  %v3200 = vld [vmem:[#allocation5 + $0x18] sm:$0xff]
  %s3201 = scalar_lea.vmem %s11, 2
  %v3202 = vld [vmem:[%s3201] ss:$8 sm:$0xf]
  %v3204 = vlaneseq
  %v3205 = vshrl.u32 %v3204, 7
  %v3206 = vsub.s32 0, %v3205
  %v3207 = vrot.slane %v3202, %v3206
  %v3208 = vlaneseq
  %v3209 = vshrl.u32 %v3208, 7
  %v3210 = vsub.s32 1, %v3209
  %v3211 = vrot.slane %v3202, %v3210
  %v3212 = vlaneseq
  %v3213 = vshrl.u32 %v3212, 7
  %v3214 = vsub.s32 2, %v3213
  %v3215 = vrot.slane %v3202, %v3214
  %v3216 = vlaneseq
  %v3217 = vshrl.u32 %v3216, 7
  %v3218 = vsub.s32 3, %v3217
  %v3219 = vrot.slane %v3202, %v3218
  %3220 = vrot.lane.b32.xlu0 %v3207, 2
  %v3221 = vpop.permute.xlu0 %3220
  %3222 = vrot.lane.b32.xlu0 %v3211, 2
  %v3223 = vpop.permute.xlu0 %3222
  %3224 = vrot.lane.b32.xlu0 %v3215, 2
  %v3225 = vpop.permute.xlu0 %3224
  %3226 = vrot.lane.b32.xlu0 %v3219, 2
  %v3227 = vpop.permute.xlu0 %3226
  %v3228 = vsel %vm597, %v3221, %v3223
  %v3229 = vsel %vm597, %v3223, %v3225
  %v3230 = vsel %vm597, %v3225, %v3227
  %v3235 = vmul.f32 %v3197, %v3221
  %v3236 = vmul.f32 %v3198, %v3228
  %v3237 = vmul.f32 %v3199, %v3229
  %v3238 = vmul.f32 %v3200, %v3230
  %3243 = vrot.lane.b32.xlu0 %v3235, 126
  %v3244 = vpop.permute.xlu0 %3243
  %3245 = vrot.lane.b32.xlu0 %v3236, 126
  %v3246 = vpop.permute.xlu0 %3245
  %3247 = vrot.lane.b32.xlu0 %v3237, 126
  %v3248 = vpop.permute.xlu0 %3247
  %3249 = vrot.lane.b32.xlu0 %v3238, 126
  %v3250 = vpop.permute.xlu0 %3249
  %v3251 = vsel %vm687, %v3244, %v3246
  %v3252 = vsel %vm687, %v3246, %v3248
  %v3253 = vsel %vm687, %v3248, %v3250
  %3258 = vst [vmem:[#allocation6 + $0x40] sm:$0xff] %v3251
  %3259 = vst [vmem:[#allocation6 + $0x48] sm:$0xff] %v3252
  %3260 = vst [vmem:[#allocation6 + $0x50] sm:$0xff] %v3253
  %3261 = vst.msk [vmem:[#allocation6 + $0x58] sm:$0xff] %vm3044, %v3250
  %v3262 = vld [vmem:[#allocation5] sm:$0xff]
  %v3263 = vld [vmem:[#allocation5 + $0x8] sm:$0xff]
  %v3264 = vld [vmem:[#allocation5 + $0x10] sm:$0xff]
  %v3265 = vld [vmem:[#allocation5 + $0x18] sm:$0xff]
  %s3266 = scalar_lea.vmem %s11, 3
  %v3267 = vld [vmem:[%s3266] ss:$8 sm:$0xf]
  %v3269 = vlaneseq
  %v3270 = vshrl.u32 %v3269, 7
  %v3271 = vsub.s32 0, %v3270
  %v3272 = vrot.slane %v3267, %v3271
  %v3273 = vlaneseq
  %v3274 = vshrl.u32 %v3273, 7
  %v3275 = vsub.s32 1, %v3274
  %v3276 = vrot.slane %v3267, %v3275
  %v3277 = vlaneseq
  %v3278 = vshrl.u32 %v3277, 7
  %v3279 = vsub.s32 2, %v3278
  %v3280 = vrot.slane %v3267, %v3279
  %v3281 = vlaneseq
  %v3282 = vshrl.u32 %v3281, 7
  %v3283 = vsub.s32 3, %v3282
  %v3284 = vrot.slane %v3267, %v3283
  %3285 = vrot.lane.b32.xlu0 %v3272, 8
  %v3286 = vpop.permute.xlu0 %3285
  %3287 = vrot.lane.b32.xlu0 %v3276, 8
  %v3288 = vpop.permute.xlu0 %3287
  %3289 = vrot.lane.b32.xlu0 %v3280, 8
  %v3290 = vpop.permute.xlu0 %3289
  %3291 = vrot.lane.b32.xlu0 %v3284, 8
  %v3292 = vpop.permute.xlu0 %3291
  %vm3293 = vcmask 64512
  %v3294 = vsel %vm3293, %v3286, %v3288
  %v3295 = vsel %vm3293, %v3288, %v3290
  %v3296 = vsel %vm3293, %v3290, %v3292
  %v3301 = vmul.f32 %v3262, %v3286
  %v3302 = vmul.f32 %v3263, %v3294
  %v3303 = vmul.f32 %v3264, %v3295
  %v3304 = vmul.f32 %v3265, %v3296
  %3309 = vrot.lane.b32.xlu0 %v3301, 120
  %v3310 = vpop.permute.xlu0 %3309
  %3311 = vrot.lane.b32.xlu0 %v3302, 120
  %v3312 = vpop.permute.xlu0 %3311
  %3313 = vrot.lane.b32.xlu0 %v3303, 120
  %v3314 = vpop.permute.xlu0 %3313
  %3315 = vrot.lane.b32.xlu0 %v3304, 120
  %v3316 = vpop.permute.xlu0 %3315
  %vm3317 = vcmask 982016
  %v3318 = vsel %vm3317, %v3310, %v3312
  %v3319 = vsel %vm3317, %v3312, %v3314
  %v3320 = vsel %vm3317, %v3314, %v3316
  %3325 = vst [vmem:[#allocation6 + $0x60] sm:$0xff] %v3318
  %3326 = vst [vmem:[#allocation6 + $0x68] sm:$0xff] %v3319
  %3327 = vst [vmem:[#allocation6 + $0x70] sm:$0xff] %v3320
  %3328 = vst.msk [vmem:[#allocation6 + $0x78] sm:$0xff] %vm3044, %v3316
  %3329 = vst [vmem:[#allocation6 + $0x80] sm:$0xff] %v3065
  %3330 = vst [vmem:[#allocation6 + $0x88] sm:$0xff] %v3066
  %3331 = vst [vmem:[#allocation6 + $0x90] sm:$0xff] %v3067
  %3332 = vst.msk [vmem:[#allocation6 + $0x98] sm:$0xff] %vm3044, %v3068
  %v3333 = vld [vmem:[#allocation5] sm:$0xff]
  %v3334 = vld [vmem:[#allocation5 + $0x8] sm:$0xff]
  %v3335 = vld [vmem:[#allocation5 + $0x10] sm:$0xff]
  %v3336 = vld [vmem:[#allocation5 + $0x18] sm:$0xff]
  %s3337 = scalar_lea.vmem %s11, 5
  %v3338 = vld [vmem:[%s3337] ss:$8 sm:$0xf]
  %v3340 = vlaneseq
  %v3341 = vshrl.u32 %v3340, 7
  %v3342 = vsub.s32 0, %v3341
  %v3343 = vrot.slane %v3338, %v3342
  %v3344 = vlaneseq
  %v3345 = vshrl.u32 %v3344, 7
  %v3346 = vsub.s32 1, %v3345
  %v3347 = vrot.slane %v3338, %v3346
  %v3348 = vlaneseq
  %v3349 = vshrl.u32 %v3348, 7
  %v3350 = vsub.s32 2, %v3349
  %v3351 = vrot.slane %v3338, %v3350
  %v3352 = vlaneseq
  %v3353 = vshrl.u32 %v3352, 7
  %v3354 = vsub.s32 3, %v3353
  %v3355 = vrot.slane %v3338, %v3354
  %3356 = vrot.lane.b32.xlu0 %v3343, 10
  %v3357 = vpop.permute.xlu0 %3356
  %3358 = vrot.lane.b32.xlu0 %v3347, 10
  %v3359 = vpop.permute.xlu0 %3358
  %3360 = vrot.lane.b32.xlu0 %v3351, 10
  %v3361 = vpop.permute.xlu0 %3360
  %3362 = vrot.lane.b32.xlu0 %v3355, 10
  %v3363 = vpop.permute.xlu0 %3362
  %vm3364 = vcmask 80896
  %v3365 = vsel %vm3364, %v3357, %v3359
  %v3366 = vsel %vm3364, %v3359, %v3361
  %v3367 = vsel %vm3364, %v3361, %v3363
  %v3372 = vmul.f32 %v3333, %v3357
  %v3373 = vmul.f32 %v3334, %v3365
  %v3374 = vmul.f32 %v3335, %v3366
  %v3375 = vmul.f32 %v3336, %v3367
  %3380 = vrot.lane.b32.xlu0 %v3372, 118
  %v3381 = vpop.permute.xlu0 %3380
  %3382 = vrot.lane.b32.xlu0 %v3373, 118
  %v3383 = vpop.permute.xlu0 %3382
  %3384 = vrot.lane.b32.xlu0 %v3374, 118
  %v3385 = vpop.permute.xlu0 %3384
  %3386 = vrot.lane.b32.xlu0 %v3375, 118
  %v3387 = vpop.permute.xlu0 %3386
  %vm3388 = vcmask 965632
  %v3389 = vsel %vm3388, %v3381, %v3383
  %v3390 = vsel %vm3388, %v3383, %v3385
  %v3391 = vsel %vm3388, %v3385, %v3387
  %3396 = vst [vmem:[#allocation6 + $0xa0] sm:$0xff] %v3389
  %3397 = vst [vmem:[#allocation6 + $0xa8] sm:$0xff] %v3390
  %3398 = vst [vmem:[#allocation6 + $0xb0] sm:$0xff] %v3391
  %3399 = vst.msk [vmem:[#allocation6 + $0xb8] sm:$0xff] %vm3044, %v3387
  %v3400 = vld [vmem:[#allocation5] sm:$0xff]
  %v3401 = vld [vmem:[#allocation5 + $0x8] sm:$0xff]
  %v3402 = vld [vmem:[#allocation5 + $0x10] sm:$0xff]
  %v3403 = vld [vmem:[#allocation5 + $0x18] sm:$0xff]
  %s3404 = scalar_lea.vmem %s11, 6
  %v3405 = vld [vmem:[%s3404] ss:$8 sm:$0xf]
  %v3407 = vlaneseq
  %v3408 = vshrl.u32 %v3407, 7
  %v3409 = vsub.s32 0, %v3408
  %v3410 = vrot.slane %v3405, %v3409
  %v3411 = vlaneseq
  %v3412 = vshrl.u32 %v3411, 7
  %v3413 = vsub.s32 1, %v3412
  %v3414 = vrot.slane %v3405, %v3413
  %v3415 = vlaneseq
  %v3416 = vshrl.u32 %v3415, 7
  %v3417 = vsub.s32 2, %v3416
  %v3418 = vrot.slane %v3405, %v3417
  %v3419 = vlaneseq
  %v3420 = vshrl.u32 %v3419, 7
  %v3421 = vsub.s32 3, %v3420
  %v3422 = vrot.slane %v3405, %v3421
  %3423 = vrot.lane.b32.xlu0 %v3410, 16
  %v3424 = vpop.permute.xlu0 %3423
  %3425 = vrot.lane.b32.xlu0 %v3414, 16
  %v3426 = vpop.permute.xlu0 %3425
  %3427 = vrot.lane.b32.xlu0 %v3418, 16
  %v3428 = vpop.permute.xlu0 %3427
  %3429 = vrot.lane.b32.xlu0 %v3422, 16
  %v3430 = vpop.permute.xlu0 %3429
  %v3431 = vsel %vm846, %v3424, %v3426
  %v3432 = vsel %vm846, %v3426, %v3428
  %v3433 = vsel %vm846, %v3428, %v3430
  %v3438 = vmul.f32 %v3400, %v3424
  %v3439 = vmul.f32 %v3401, %v3431
  %v3440 = vmul.f32 %v3402, %v3432
  %v3441 = vmul.f32 %v3403, %v3433
  %3446 = vrot.lane.b32.xlu0 %v3438, 112
  %v3447 = vpop.permute.xlu0 %3446
  %3448 = vrot.lane.b32.xlu0 %v3439, 112
  %v3449 = vpop.permute.xlu0 %3448
  %3450 = vrot.lane.b32.xlu0 %v3440, 112
  %v3451 = vpop.permute.xlu0 %3450
  %3452 = vrot.lane.b32.xlu0 %v3441, 112
  %v3453 = vpop.permute.xlu0 %3452
  %v3454 = vsel %vm936, %v3447, %v3449
  %v3455 = vsel %vm936, %v3449, %v3451
  %v3456 = vsel %vm936, %v3451, %v3453
  %3461 = vst [vmem:[#allocation6 + $0xc0] sm:$0xff] %v3454
  %3462 = vst [vmem:[#allocation6 + $0xc8] sm:$0xff] %v3455
  %3463 = vst [vmem:[#allocation6 + $0xd0] sm:$0xff] %v3456
  %3464 = vst.msk [vmem:[#allocation6 + $0xd8] sm:$0xff] %vm3044, %v3453
  %v3465 = vld [vmem:[#allocation5] sm:$0xff]
  %v3466 = vld [vmem:[#allocation5 + $0x8] sm:$0xff]
  %v3467 = vld [vmem:[#allocation5 + $0x10] sm:$0xff]
  %v3468 = vld [vmem:[#allocation5 + $0x18] sm:$0xff]
  %s3469 = scalar_lea.vmem %s11, 7
  %v3470 = vld [vmem:[%s3469] ss:$8 sm:$0xf]
  %v3472 = vlaneseq
  %v3473 = vshrl.u32 %v3472, 7
  %v3474 = vsub.s32 0, %v3473
  %v3475 = vrot.slane %v3470, %v3474
  %v3476 = vlaneseq
  %v3477 = vshrl.u32 %v3476, 7
  %v3478 = vsub.s32 1, %v3477
  %v3479 = vrot.slane %v3470, %v3478
  %v3480 = vlaneseq
  %v3481 = vshrl.u32 %v3480, 7
  %v3482 = vsub.s32 2, %v3481
  %v3483 = vrot.slane %v3470, %v3482
  %v3484 = vlaneseq
  %v3485 = vshrl.u32 %v3484, 7
  %v3486 = vsub.s32 3, %v3485
  %v3487 = vrot.slane %v3470, %v3486
  %3488 = vrot.lane.b32.xlu0 %v3475, 17
  %v3489 = vpop.permute.xlu0 %3488
  %3490 = vrot.lane.b32.xlu0 %v3479, 17
  %v3491 = vpop.permute.xlu0 %3490
  %3492 = vrot.lane.b32.xlu0 %v3483, 17
  %v3493 = vpop.permute.xlu0 %3492
  %3494 = vrot.lane.b32.xlu0 %v3487, 17
  %v3495 = vpop.permute.xlu0 %3494
  %v3496 = vsel %vm96, %v3489, %v3491
  %v3497 = vsel %vm96, %v3491, %v3493
  %v3498 = vsel %vm96, %v3493, %v3495
  %v3503 = vmul.f32 %v3465, %v3489
  %v3504 = vmul.f32 %v3466, %v3496
  %v3505 = vmul.f32 %v3467, %v3497
  %v3506 = vmul.f32 %v3468, %v3498
  %3511 = vrot.lane.b32.xlu0 %v3503, 111
  %v3512 = vpop.permute.xlu0 %3511
  %3513 = vrot.lane.b32.xlu0 %v3504, 111
  %v3514 = vpop.permute.xlu0 %3513
  %3515 = vrot.lane.b32.xlu0 %v3505, 111
  %v3516 = vpop.permute.xlu0 %3515
  %3517 = vrot.lane.b32.xlu0 %v3506, 111
  %v3518 = vpop.permute.xlu0 %3517
  %vm3519 = vcmask 908288
  %v3520 = vsel %vm3519, %v3512, %v3514
  %v3521 = vsel %vm3519, %v3514, %v3516
  %v3522 = vsel %vm3519, %v3516, %v3518
  %3527 = vst [vmem:[#allocation6 + $0xe0] sm:$0xff] %v3520
  %3528 = vst [vmem:[#allocation6 + $0xe8] sm:$0xff] %v3521
  %3529 = vst [vmem:[#allocation6 + $0xf0] sm:$0xff] %v3522
  %3530 = vst.msk [vmem:[#allocation6 + $0xf8] sm:$0xff] %vm3044, %v3518
  %v3531 = vld [vmem:[#allocation5] sm:$0xff]
  %v3532 = vld [vmem:[#allocation5 + $0x8] sm:$0xff]
  %v3533 = vld [vmem:[#allocation5 + $0x10] sm:$0xff]
  %v3534 = vld [vmem:[#allocation5 + $0x18] sm:$0xff]
  %s3535 = scalar_lea.vmem %s11, 32
  %v3536 = vld [vmem:[%s3535] ss:$8 sm:$0xf]
  %v3538 = vlaneseq
  %v3539 = vshrl.u32 %v3538, 7
  %v3540 = vsub.s32 0, %v3539
  %v3541 = vrot.slane %v3536, %v3540
  %v3542 = vlaneseq
  %v3543 = vshrl.u32 %v3542, 7
  %v3544 = vsub.s32 1, %v3543
  %v3545 = vrot.slane %v3536, %v3544
  %v3546 = vlaneseq
  %v3547 = vshrl.u32 %v3546, 7
  %v3548 = vsub.s32 2, %v3547
  %v3549 = vrot.slane %v3536, %v3548
  %v3550 = vlaneseq
  %v3551 = vshrl.u32 %v3550, 7
  %v3552 = vsub.s32 3, %v3551
  %v3553 = vrot.slane %v3536, %v3552
  %3554 = vrot.lane.b32.xlu0 %v3541, 18
  %v3555 = vpop.permute.xlu0 %3554
  %3556 = vrot.lane.b32.xlu0 %v3545, 18
  %v3557 = vpop.permute.xlu0 %3556
  %3558 = vrot.lane.b32.xlu0 %v3549, 18
  %v3559 = vpop.permute.xlu0 %3558
  %3560 = vrot.lane.b32.xlu0 %v3553, 18
  %v3561 = vpop.permute.xlu0 %3560
  %v3562 = vsel %vm1109, %v3555, %v3557
  %v3563 = vsel %vm1109, %v3557, %v3559
  %v3564 = vsel %vm1109, %v3559, %v3561
  %v3569 = vmul.f32 %v3531, %v3555
  %v3570 = vmul.f32 %v3532, %v3562
  %v3571 = vmul.f32 %v3533, %v3563
  %v3572 = vmul.f32 %v3534, %v3564
  %3577 = vrot.lane.b32.xlu0 %v3569, 110
  %v3578 = vpop.permute.xlu0 %3577
  %3579 = vrot.lane.b32.xlu0 %v3570, 110
  %v3580 = vpop.permute.xlu0 %3579
  %3581 = vrot.lane.b32.xlu0 %v3571, 110
  %v3582 = vpop.permute.xlu0 %3581
  %3583 = vrot.lane.b32.xlu0 %v3572, 110
  %v3584 = vpop.permute.xlu0 %3583
  %v3585 = vsel %vm1199, %v3578, %v3580
  %v3586 = vsel %vm1199, %v3580, %v3582
  %v3587 = vsel %vm1199, %v3582, %v3584
  %3592 = vst [vmem:[#allocation6 + $0x100] sm:$0xff] %v3585
  %3593 = vst [vmem:[#allocation6 + $0x108] sm:$0xff] %v3586
  %3594 = vst [vmem:[#allocation6 + $0x110] sm:$0xff] %v3587
  %3595 = vst.msk [vmem:[#allocation6 + $0x118] sm:$0xff] %vm3044, %v3584
  %v3596 = vld [vmem:[%s2] sm:$0xff]
  %v3597 = vld [vmem:[#allocation6] sm:$0xff]
  %v3598 = vld [vmem:[#allocation6 + $0x8] sm:$0xff]
  %v3599 = vld [vmem:[#allocation6 + $0x10] sm:$0xff]
  %v3600 = vld [vmem:[#allocation6 + $0x18] sm:$0xff]
  %v3601 = vld [vmem:[#allocation6 + $0x20] sm:$0xff]
  %v3602 = vld [vmem:[#allocation6 + $0x28] sm:$0xff]
  %v3603 = vld [vmem:[#allocation6 + $0x30] sm:$0xff]
  %v3604 = vld [vmem:[#allocation6 + $0x38] sm:$0xff]
  %v3605 = vld [vmem:[#allocation6 + $0x40] sm:$0xff]
  %v3606 = vld [vmem:[#allocation6 + $0x48] sm:$0xff]
  %v3607 = vld [vmem:[#allocation6 + $0x50] sm:$0xff]
  %v3608 = vld [vmem:[#allocation6 + $0x58] sm:$0xff]
  %v3609 = vld [vmem:[#allocation6 + $0x60] sm:$0xff]
  %v3610 = vld [vmem:[#allocation6 + $0x68] sm:$0xff]
  %v3611 = vld [vmem:[#allocation6 + $0x70] sm:$0xff]
  %v3612 = vld [vmem:[#allocation6 + $0x78] sm:$0xff]
  %v3613 = vld [vmem:[#allocation6 + $0x80] sm:$0xff]
  %v3614 = vld [vmem:[#allocation6 + $0x88] sm:$0xff]
  %v3615 = vld [vmem:[#allocation6 + $0x90] sm:$0xff]
  %v3616 = vld [vmem:[#allocation6 + $0x98] sm:$0xff]
  %v3617 = vld [vmem:[#allocation6 + $0xa0] sm:$0xff]
  %v3618 = vld [vmem:[#allocation6 + $0xa8] sm:$0xff]
  %v3619 = vld [vmem:[#allocation6 + $0xb0] sm:$0xff]
  %v3620 = vld [vmem:[#allocation6 + $0xb8] sm:$0xff]
  %v3621 = vld [vmem:[#allocation6 + $0xc0] sm:$0xff]
  %v3622 = vld [vmem:[#allocation6 + $0xc8] sm:$0xff]
  %v3623 = vld [vmem:[#allocation6 + $0xd0] sm:$0xff]
  %v3624 = vld [vmem:[#allocation6 + $0xd8] sm:$0xff]
  %v3625 = vld [vmem:[#allocation6 + $0xe0] sm:$0xff]
  %v3626 = vld [vmem:[#allocation6 + $0xe8] sm:$0xff]
  %v3627 = vld [vmem:[#allocation6 + $0xf0] sm:$0xff]
  %v3628 = vld [vmem:[#allocation6 + $0xf8] sm:$0xff]
  %v3629 = vld [vmem:[#allocation6 + $0x100] sm:$0xff]
  %v3630 = vld [vmem:[#allocation6 + $0x108] sm:$0xff]
  %v3631 = vld [vmem:[#allocation6 + $0x110] sm:$0xff]
  %v3632 = vld [vmem:[#allocation6 + $0x118] sm:$0xff]
  %vm3633 = vcmask 588800
  %v3635 = vsel %vm3633, %v3596, 0
  %3637 = vmatprep.subr.mxu0 %v3598
  %3638 = vmatpush1.msra.mxu0 %v3597
  %3639 = vmatprep.subr.mxu0 %v3602
  %3640 = vmatpush1.msra.mxu0 %v3601
  %3641 = vmatprep.subr.mxu0 %v3606
  %3642 = vmatpush1.msra.mxu0 %v3605
  %3643 = vmatprep.subr.mxu0 %v3610
  %3644 = vmatpush1.msra.mxu0 %v3609
  %3645 = vmatprep.subr.mxu0 %v3614
  %3646 = vmatpush1.msra.mxu0 %v3613
  %3647 = vmatprep.subr.mxu0 %v3618
  %3648 = vmatpush1.msra.mxu0 %v3617
  %3649 = vmatprep.subr.mxu0 %v3622
  %3650 = vmatpush1.msra.mxu0 %v3621
  %3651 = vmatprep.subr.mxu0 %v3626
  %3652 = vmatpush1.msra.mxu0 %v3625
  %3653 = vmatprep.subr.mxu0 %v3630
  %3654 = vmatpush1.msra.mxu0 %v3629
  %3655 = vmatprep.subr.mxu0 0.0
  %3656 = vmatpush1.msra.mxu0 0.0
  %3657 = vmatprep.subr.mxu0 0.0
  %3658 = vmatpush1.msra.mxu0 0.0
  %3659 = vmatprep.subr.mxu0 0.0
  %3660 = vmatpush1.msra.mxu0 0.0
  %3661 = vmatprep.subr.mxu0 0.0
  %3662 = vmatpush1.msra.mxu0 0.0
  %3663 = vmatprep.subr.mxu0 0.0
  %3664 = vmatpush1.msra.mxu0 0.0
  %3665 = vmatprep.subr.mxu0 0.0
  %3666 = vmatpush1.msra.mxu0 0.0
  %3667 = vmatprep.subr.mxu0 0.0
  %3668 = vmatpush1.msra.mxu0 0.0
  %3669 = vmatprep.subr.mxu0 0.0
  %3670 = vmatpush1.msra.mxu0 0.0
  %3671 = vmatprep.subr.mxu0 0.0
  %3672 = vmatpush1.msra.mxu0 0.0
  %3673 = vmatprep.subr.mxu0 0.0
  %3674 = vmatpush1.msra.mxu0 0.0
  %3675 = vmatprep.subr.mxu0 0.0
  %3676 = vmatpush1.msra.mxu0 0.0
  %3677 = vmatprep.subr.mxu0 0.0
  %3678 = vmatpush1.msra.mxu0 0.0
  %3679 = vmatprep.subr.mxu0 0.0
  %3680 = vmatpush1.msra.mxu0 0.0
  %3681 = vmatprep.subr.mxu0 0.0
  %3682 = vmatpush1.msra.mxu0 0.0
  %3683 = vmatprep.subr.mxu0 0.0
  %3684 = vmatpush1.msra.mxu0 0.0
  %3685 = vmatprep.subr.mxu0 0.0
  %3686 = vmatpush1.msra.mxu0 0.0
  %3687 = vmatprep.subr.mxu0 0.0
  %3688 = vmatpush1.msra.mxu0 0.0
  %3689 = vmatprep.subr.mxu0 0.0
  %3690 = vmatpush1.msra.mxu0 0.0
  %3691 = vmatprep.subr.mxu0 0.0
  %3692 = vmatpush1.msra.mxu0 0.0
  %3693 = vmatprep.subr.mxu0 0.0
  %3694 = vmatpush1.msra.mxu0 0.0
  %3695 = vmatprep.subr.mxu0 0.0
  %3696 = vmatpush1.msra.mxu0 0.0
  %3697 = vmatprep.subr.mxu0 0.0
  %3698 = vmatpush1.msra.mxu0 0.0
  %3699 = vmatprep.subr.mxu0 0.0
  %3700 = vmatpush1.msra.mxu0 0.0
  %3701 = vmatprep.mubr.f32.mxu0 0.0
  %3702 = vmatmul.mubr.f32.gmra.mrb[0].mxu0 %v3635
  %v3703 = vpop.f32.mrb[0].mxu0
  %v3704 = vadd.f32 0.0, %v3703
  %v3705 = vpop.f32.mrb[0].mxu0
  %v3706 = vadd.f32 0.0, %v3705
  %3707 = vdwg.mxu0
  %3708 = vmatprep.subr.mxu0 %v3600
  %3709 = vmatpush1.msra.mxu0 %v3599
  %3710 = vmatprep.subr.mxu0 %v3604
  %3711 = vmatpush1.msra.mxu0 %v3603
  %3712 = vmatprep.subr.mxu0 %v3608
  %3713 = vmatpush1.msra.mxu0 %v3607
  %3714 = vmatprep.subr.mxu0 %v3612
  %3715 = vmatpush1.msra.mxu0 %v3611
  %3716 = vmatprep.subr.mxu0 %v3616
  %3717 = vmatpush1.msra.mxu0 %v3615
  %3718 = vmatprep.subr.mxu0 %v3620
  %3719 = vmatpush1.msra.mxu0 %v3619
  %3720 = vmatprep.subr.mxu0 %v3624
  %3721 = vmatpush1.msra.mxu0 %v3623
  %3722 = vmatprep.subr.mxu0 %v3628
  %3723 = vmatpush1.msra.mxu0 %v3627
  %3724 = vmatprep.subr.mxu0 %v3632
  %3725 = vmatpush1.msra.mxu0 %v3631
  %3726 = vmatprep.subr.mxu0 0.0
  %3727 = vmatpush1.msra.mxu0 0.0
  %3728 = vmatprep.subr.mxu0 0.0
  %3729 = vmatpush1.msra.mxu0 0.0
  %3730 = vmatprep.subr.mxu0 0.0
  %3731 = vmatpush1.msra.mxu0 0.0
  %3732 = vmatprep.subr.mxu0 0.0
  %3733 = vmatpush1.msra.mxu0 0.0
  %3734 = vmatprep.subr.mxu0 0.0
  %3735 = vmatpush1.msra.mxu0 0.0
  %3736 = vmatprep.subr.mxu0 0.0
  %3737 = vmatpush1.msra.mxu0 0.0
  %3738 = vmatprep.subr.mxu0 0.0
  %3739 = vmatpush1.msra.mxu0 0.0
  %3740 = vmatprep.subr.mxu0 0.0
  %3741 = vmatpush1.msra.mxu0 0.0
  %3742 = vmatprep.subr.mxu0 0.0
  %3743 = vmatpush1.msra.mxu0 0.0
  %3744 = vmatprep.subr.mxu0 0.0
  %3745 = vmatpush1.msra.mxu0 0.0
  %3746 = vmatprep.subr.mxu0 0.0
  %3747 = vmatpush1.msra.mxu0 0.0
  %3748 = vmatprep.subr.mxu0 0.0
  %3749 = vmatpush1.msra.mxu0 0.0
  %3750 = vmatprep.subr.mxu0 0.0
  %3751 = vmatpush1.msra.mxu0 0.0
  %3752 = vmatprep.subr.mxu0 0.0
  %3753 = vmatpush1.msra.mxu0 0.0
  %3754 = vmatprep.subr.mxu0 0.0
  %3755 = vmatpush1.msra.mxu0 0.0
  %3756 = vmatprep.subr.mxu0 0.0
  %3757 = vmatpush1.msra.mxu0 0.0
  %3758 = vmatprep.subr.mxu0 0.0
  %3759 = vmatpush1.msra.mxu0 0.0
  %3760 = vmatprep.subr.mxu0 0.0
  %3761 = vmatpush1.msra.mxu0 0.0
  %3762 = vmatprep.subr.mxu0 0.0
  %3763 = vmatpush1.msra.mxu0 0.0
  %3764 = vmatprep.subr.mxu0 0.0
  %3765 = vmatpush1.msra.mxu0 0.0
  %3766 = vmatprep.subr.mxu0 0.0
  %3767 = vmatpush1.msra.mxu0 0.0
  %3768 = vmatprep.subr.mxu0 0.0
  %3769 = vmatpush1.msra.mxu0 0.0
  %3770 = vmatprep.subr.mxu0 0.0
  %3771 = vmatpush1.msra.mxu0 0.0
  %3772 = vmatprep.mubr.f32.mxu0 0.0
  %3773 = vmatmul.mubr.f32.gmra.mrb[0].mxu0 %v3635
  %v3774 = vpop.f32.mrb[0].mxu0
  %v3775 = vadd.f32 0.0, %v3774
  %v3776 = vpop.f32.mrb[0].mxu0
  %v3777 = vadd.f32 0.0, %v3776
  %3778 = vdwg.mxu0
  %v3779 = vadd.f32 %v3704, %v3706
  %v3780 = vadd.f32 %v3779, %v3775
  %v3781 = vsel %vm3044, %v3777, 0.0
  %v3782 = vadd.f32 %v3780, %v3781
  %3783 = vadd.xlane.f32.xlu0 %v3782
  %v3784 = vpop.xlane.xlu0 %3783
  %v3785 = vmul.f32 %v3784, 0.002232143
  %v3786 = vsub.f32 %v3704, %v3785
  %v3787 = vsub.f32 %v3706, %v3785
  %v3788 = vsub.f32 %v3775, %v3785
  %v3789 = vsub.f32 %v3777, %v3785
  %v3790 = vmul.f32 %v3786, %v3786
  %v3791 = vmul.f32 %v3787, %v3787
  %v3792 = vmul.f32 %v3788, %v3788
  %v3793 = vmul.f32 %v3789, %v3789
  %v3794 = vadd.f32 %v3790, %v3791
  %v3795 = vadd.f32 %v3794, %v3792
  %v3796 = vsel %vm3044, %v3793, 0.0
  %v3797 = vadd.f32 %v3795, %v3796
  %3798 = vadd.xlane.f32.xlu0 %v3797
  %v3799 = vpop.xlane.xlu0 %3798
  %v3800 = vmul.f32 %v3799, 0.002232143
  %v3801 = vld [vmem:[%s5] sm:$0xff]
  %v3802 = vadd.f32 %v3800, 1e-05
  %v3803 = vrsqrt.pop %v3802
  %v3804 = vmul.f32 %v3801, %v3803
  %3806 = vset.pattern.permute.xlu0 0
  %3807 = vperm.xlu0 %3806, %v3804
  %v3808 = vpop.permute.xlu0 %3807
  %v3810 = vmul.f32 %v3786, %v3808
  %v3811 = vmul.f32 %v3787, %v3808
  %v3812 = vmul.f32 %v3788, %v3808
  %v3813 = vmul.f32 %v3789, %v3808
  %v3814 = vld [vmem:[%s8] sm:$0xff]
  %3816 = vset.pattern.permute.xlu0 0
  %3817 = vperm.xlu0 %3816, %v3814
  %v3818 = vpop.permute.xlu0 %3817
  %v3820 = vadd.f32 %v3810, %v3818
  %v3821 = vadd.f32 %v3811, %v3818
  %v3822 = vadd.f32 %v3812, %v3818
  %v3823 = vadd.f32 %v3813, %v3818
  %v3824 = vmax.f32 %v3820, 0.0
  %v3825 = vmax.f32 %v3821, 0.0
  %v3826 = vmax.f32 %v3822, 0.0
  %v3827 = vmax.f32 %v3823, 0.0
  %3828 = vst [vmem:[#allocation7] sm:$0xff] %v3824
  %3829 = vst [vmem:[#allocation7 + $0x8] sm:$0xff] %v3825
  %3830 = vst [vmem:[#allocation7 + $0x10] sm:$0xff] %v3826
  %3831 = vst.msk [vmem:[#allocation7 + $0x18] sm:$0xff] %vm3044, %v3827
  %vm3832 = vcmask 597504
  %3833 = vst.msk [vmem:[#allocation7 + $0x18] sm:$0xff] %vm3832, 0.0
  %v3834 = vld [vmem:[#allocation7] sm:$0xff]
  %v3835 = vld [vmem:[#allocation7 + $0x8] sm:$0xff]
  %v3836 = vld [vmem:[#allocation7 + $0x10] sm:$0xff]
  %v3837 = vld [vmem:[#allocation7 + $0x18] sm:$0xff]
  %3842 = vrot.lane.b32.xlu0 %v3834, 127
  %v3843 = vpop.permute.xlu0 %3842
  %3844 = vrot.lane.b32.xlu0 %v3835, 127
  %v3845 = vpop.permute.xlu0 %3844
  %3846 = vrot.lane.b32.xlu0 %v3836, 127
  %v3847 = vpop.permute.xlu0 %3846
  %3848 = vrot.lane.b32.xlu0 %v3837, 127
  %v3849 = vpop.permute.xlu0 %3848
  %v3850 = vsel %vm452, %v3843, %v3845
  %v3851 = vsel %vm452, %v3845, %v3847
  %v3852 = vsel %vm452, %v3847, %v3849
  %v3857 = vmax.f32 %v3824, %v3850
  %v3858 = vmax.f32 %v3825, %v3851
  %v3859 = vmax.f32 %v3826, %v3852
  %v3860 = vmax.f32 %v3827, %v3849
  %v3861 = vmax.f32 %v3834, %v3850
  %v3862 = vmax.f32 %v3835, %v3851
  %v3863 = vmax.f32 %v3836, %v3852
  %v3864 = vmax.f32 %v3837, %v3849
  %3869 = vrot.lane.b32.xlu0 %v3861, 120
  %v3870 = vpop.permute.xlu0 %3869
  %3871 = vrot.lane.b32.xlu0 %v3862, 120
  %v3872 = vpop.permute.xlu0 %3871
  %3873 = vrot.lane.b32.xlu0 %v3863, 120
  %v3874 = vpop.permute.xlu0 %3873
  %3875 = vrot.lane.b32.xlu0 %v3864, 120
  %v3876 = vpop.permute.xlu0 %3875
  %v3877 = vsel %vm3317, %v3870, %v3872
  %v3878 = vsel %vm3317, %v3872, %v3874
  %v3879 = vsel %vm3317, %v3874, %v3876
  %v3884 = vmax.f32 %v3857, %v3877
  %v3885 = vmax.f32 %v3858, %v3878
  %v3886 = vmax.f32 %v3859, %v3879
  %v3887 = vmax.f32 %v3860, %v3876
  %v3888 = vld [vmem:[%s14] sm:$0xff]
  %v3889 = vld [vmem:[%s14 + $0x8] sm:$0xff]
  %v3890 = vld [vmem:[%s14 + $0x10] sm:$0xff]
  %v3891 = vld [vmem:[%s14 + $0x18] sm:$0xff]
  %v3892 = vld [vmem:[%s14 + $0x20] sm:$0xff]
  %v3893 = vld [vmem:[%s14 + $0x28] sm:$0xff]
  %v3894 = vld [vmem:[%s14 + $0x30] sm:$0xff]
  %v3895 = vld [vmem:[%s14 + $0x38] sm:$0xff]
  %v3896 = vld [vmem:[%s14 + $0x40] sm:$0xff]
  %v3897 = vld [vmem:[%s14 + $0x48] sm:$0xff]
  %v3898 = vld [vmem:[%s14 + $0x50] sm:$0xff]
  %v3899 = vld [vmem:[%s14 + $0x58] sm:$0xff]
  %v3900 = vld [vmem:[%s14 + $0x60] sm:$0xff]
  %v3901 = vld [vmem:[%s14 + $0x68] sm:$0xff]
  %v3902 = vld [vmem:[%s14 + $0x70] sm:$0xff]
  %v3903 = vld [vmem:[%s14 + $0x78] sm:$0xff]
  %v3904 = vld [vmem:[%s14 + $0x80] sm:$0xff]
  %v3905 = vld [vmem:[%s14 + $0x88] sm:$0xff]
  %v3906 = vld [vmem:[%s14 + $0x90] sm:$0xff]
  %v3907 = vld [vmem:[%s14 + $0x98] sm:$0xff]
  %v3908 = vld [vmem:[%s14 + $0xa0] sm:$0xff]
  %v3909 = vld [vmem:[%s14 + $0xa8] sm:$0xff]
  %v3910 = vld [vmem:[%s14 + $0xb0] sm:$0xff]
  %v3911 = vld [vmem:[%s14 + $0xb8] sm:$0xff]
  %v3912 = vld [vmem:[%s14 + $0xc0] sm:$0xff]
  %v3913 = vld [vmem:[%s14 + $0xc8] sm:$0xff]
  %v3914 = vld [vmem:[%s14 + $0xd0] sm:$0xff]
  %v3915 = vld [vmem:[%s14 + $0xd8] sm:$0xff]
  %v3916 = vld [vmem:[%s14 + $0xe0] sm:$0xff]
  %v3917 = vld [vmem:[%s14 + $0xe8] sm:$0xff]
  %v3918 = vld [vmem:[%s14 + $0xf0] sm:$0xff]
  %v3919 = vld [vmem:[%s14 + $0xf8] sm:$0xff]
  %v3920 = vld [vmem:[%s14 + $0x100] sm:$0xff]
  %v3921 = vld [vmem:[%s14 + $0x108] sm:$0xff]
  %v3922 = vld [vmem:[%s14 + $0x110] sm:$0xff]
  %v3923 = vld [vmem:[%s14 + $0x118] sm:$0xff]
  %v3924 = vld [vmem:[%s14 + $0x120] sm:$0xff]
  %v3925 = vld [vmem:[%s14 + $0x128] sm:$0xff]
  %v3926 = vld [vmem:[%s14 + $0x130] sm:$0xff]
  %v3927 = vld [vmem:[%s14 + $0x138] sm:$0xff]
  %v3928 = vld [vmem:[%s14 + $0x140] sm:$0xff]
  %v3929 = vld [vmem:[%s14 + $0x148] sm:$0xff]
  %v3930 = vld [vmem:[%s14 + $0x150] sm:$0xff]
  %v3931 = vld [vmem:[%s14 + $0x158] sm:$0xff]
  %v3932 = vld [vmem:[%s14 + $0x160] sm:$0xff]
  %v3933 = vld [vmem:[%s14 + $0x168] sm:$0xff]
  %v3934 = vld [vmem:[%s14 + $0x170] sm:$0xff]
  %v3935 = vld [vmem:[%s14 + $0x178] sm:$0xff]
  %v3936 = vld [vmem:[%s14 + $0x180] sm:$0xff]
  %v3937 = vld [vmem:[%s14 + $0x188] sm:$0xff]
  %v3938 = vld [vmem:[%s14 + $0x190] sm:$0xff]
  %v3939 = vld [vmem:[%s14 + $0x198] sm:$0xff]
  %v3940 = vld [vmem:[%s14 + $0x1a0] sm:$0xff]
  %v3941 = vld [vmem:[%s14 + $0x1a8] sm:$0xff]
  %v3942 = vld [vmem:[%s14 + $0x1b0] sm:$0xff]
  %v3943 = vld [vmem:[%s14 + $0x1b8] sm:$0xff]
  %v3945 = vsel %vm3044, %v3887, 0
  %3947 = vmatprep.subr.mxu0 0.0
  %3948 = vmatpush1.msra.mxu0 %v3888
  %3949 = vmatprep.subr.mxu0 0.0
  %3950 = vmatpush1.msra.mxu0 %v3889
  %3951 = vmatprep.subr.mxu0 0.0
  %3952 = vmatpush1.msra.mxu0 %v3890
  %3953 = vmatprep.subr.mxu0 0.0
  %3954 = vmatpush1.msra.mxu0 %v3891
  %3955 = vmatprep.subr.mxu0 0.0
  %3956 = vmatpush1.msra.mxu0 %v3892
  %3957 = vmatprep.subr.mxu0 0.0
  %3958 = vmatpush1.msra.mxu0 %v3893
  %3959 = vmatprep.subr.mxu0 0.0
  %3960 = vmatpush1.msra.mxu0 %v3894
  %3961 = vmatprep.subr.mxu0 0.0
  %3962 = vmatpush1.msra.mxu0 %v3895
  %3963 = vmatprep.subr.mxu0 0.0
  %3964 = vmatpush1.msra.mxu0 %v3896
  %3965 = vmatprep.subr.mxu0 0.0
  %3966 = vmatpush1.msra.mxu0 %v3897
  %3967 = vmatprep.subr.mxu0 0.0
  %3968 = vmatpush1.msra.mxu0 %v3898
  %3969 = vmatprep.subr.mxu0 0.0
  %3970 = vmatpush1.msra.mxu0 %v3899
  %3971 = vmatprep.subr.mxu0 0.0
  %3972 = vmatpush1.msra.mxu0 %v3900
  %3973 = vmatprep.subr.mxu0 0.0
  %3974 = vmatpush1.msra.mxu0 %v3901
  %3975 = vmatprep.subr.mxu0 0.0
  %3976 = vmatpush1.msra.mxu0 %v3902
  %3977 = vmatprep.subr.mxu0 0.0
  %3978 = vmatpush1.msra.mxu0 %v3903
  %3979 = vmatprep.subr.mxu0 0.0
  %3980 = vmatpush1.msra.mxu0 %v3904
  %3981 = vmatprep.subr.mxu0 0.0
  %3982 = vmatpush1.msra.mxu0 %v3905
  %3983 = vmatprep.subr.mxu0 0.0
  %3984 = vmatpush1.msra.mxu0 %v3906
  %3985 = vmatprep.subr.mxu0 0.0
  %3986 = vmatpush1.msra.mxu0 %v3907
  %3987 = vmatprep.subr.mxu0 0.0
  %3988 = vmatpush1.msra.mxu0 %v3908
  %3989 = vmatprep.subr.mxu0 0.0
  %3990 = vmatpush1.msra.mxu0 %v3909
  %3991 = vmatprep.subr.mxu0 0.0
  %3992 = vmatpush1.msra.mxu0 %v3910
  %3993 = vmatprep.subr.mxu0 0.0
  %3994 = vmatpush1.msra.mxu0 %v3911
  %3995 = vmatprep.subr.mxu0 0.0
  %3996 = vmatpush1.msra.mxu0 %v3912
  %3997 = vmatprep.subr.mxu0 0.0
  %3998 = vmatpush1.msra.mxu0 %v3913
  %3999 = vmatprep.subr.mxu0 0.0
  %4000 = vmatpush1.msra.mxu0 %v3914
  %4001 = vmatprep.subr.mxu0 0.0
  %4002 = vmatpush1.msra.mxu0 %v3915
  %4003 = vmatprep.subr.mxu0 0.0
  %4004 = vmatpush1.msra.mxu0 %v3916
  %4005 = vmatprep.subr.mxu0 0.0
  %4006 = vmatpush1.msra.mxu0 %v3917
  %4007 = vmatprep.subr.mxu0 0.0
  %4008 = vmatpush1.msra.mxu0 %v3918
  %4009 = vmatprep.subr.mxu0 0.0
  %4010 = vmatpush1.msra.mxu0 %v3919
  %4011 = vmatprep.mubr.f32.mxu0 %v3885
  %4012 = vmatmul.mubr.f32.gmra.mrb[0].mxu0 %v3884
  %v4013 = vpop.f32.mrb[0].mxu0
  %v4014 = vadd.f32 0.0, %v4013
  %v4015 = vpop.f32.mrb[0].mxu0
  %4016 = vdwg.mxu0
  %4017 = vmatprep.subr.mxu0 0.0
  %4018 = vmatpush1.msra.mxu0 %v3920
  %4019 = vmatprep.subr.mxu0 0.0
  %4020 = vmatpush1.msra.mxu0 %v3921
  %4021 = vmatprep.subr.mxu0 0.0
  %4022 = vmatpush1.msra.mxu0 %v3922
  %4023 = vmatprep.subr.mxu0 0.0
  %4024 = vmatpush1.msra.mxu0 %v3923
  %4025 = vmatprep.subr.mxu0 0.0
  %4026 = vmatpush1.msra.mxu0 %v3924
  %4027 = vmatprep.subr.mxu0 0.0
  %4028 = vmatpush1.msra.mxu0 %v3925
  %4029 = vmatprep.subr.mxu0 0.0
  %4030 = vmatpush1.msra.mxu0 %v3926
  %4031 = vmatprep.subr.mxu0 0.0
  %4032 = vmatpush1.msra.mxu0 %v3927
  %4033 = vmatprep.subr.mxu0 0.0
  %4034 = vmatpush1.msra.mxu0 %v3928
  %4035 = vmatprep.subr.mxu0 0.0
  %4036 = vmatpush1.msra.mxu0 %v3929
  %4037 = vmatprep.subr.mxu0 0.0
  %4038 = vmatpush1.msra.mxu0 %v3930
  %4039 = vmatprep.subr.mxu0 0.0
  %4040 = vmatpush1.msra.mxu0 %v3931
  %4041 = vmatprep.subr.mxu0 0.0
  %4042 = vmatpush1.msra.mxu0 %v3932
  %4043 = vmatprep.subr.mxu0 0.0
  %4044 = vmatpush1.msra.mxu0 %v3933
  %4045 = vmatprep.subr.mxu0 0.0
  %4046 = vmatpush1.msra.mxu0 %v3934
  %4047 = vmatprep.subr.mxu0 0.0
  %4048 = vmatpush1.msra.mxu0 %v3935
  %4049 = vmatprep.subr.mxu0 0.0
  %4050 = vmatpush1.msra.mxu0 %v3936
  %4051 = vmatprep.subr.mxu0 0.0
  %4052 = vmatpush1.msra.mxu0 %v3937
  %4053 = vmatprep.subr.mxu0 0.0
  %4054 = vmatpush1.msra.mxu0 %v3938
  %4055 = vmatprep.subr.mxu0 0.0
  %4056 = vmatpush1.msra.mxu0 %v3939
  %4057 = vmatprep.subr.mxu0 0.0
  %4058 = vmatpush1.msra.mxu0 %v3940
  %4059 = vmatprep.subr.mxu0 0.0
  %4060 = vmatpush1.msra.mxu0 %v3941
  %4061 = vmatprep.subr.mxu0 0.0
  %4062 = vmatpush1.msra.mxu0 %v3942
  %4063 = vmatprep.subr.mxu0 0.0
  %4064 = vmatpush1.msra.mxu0 %v3943
  %4065 = vmatprep.subr.mxu0 0.0
  %4066 = vmatpush1.msra.mxu0 0.0
  %4067 = vmatprep.subr.mxu0 0.0
  %4068 = vmatpush1.msra.mxu0 0.0
  %4069 = vmatprep.subr.mxu0 0.0
  %4070 = vmatpush1.msra.mxu0 0.0
  %4071 = vmatprep.subr.mxu0 0.0
  %4072 = vmatpush1.msra.mxu0 0.0
  %4073 = vmatprep.subr.mxu0 0.0
  %4074 = vmatpush1.msra.mxu0 0.0
  %4075 = vmatprep.subr.mxu0 0.0
  %4076 = vmatpush1.msra.mxu0 0.0
  %4077 = vmatprep.subr.mxu0 0.0
  %4078 = vmatpush1.msra.mxu0 0.0
  %4079 = vmatprep.subr.mxu0 0.0
  %4080 = vmatpush1.msra.mxu0 0.0
  %4081 = vmatprep.mubr.f32.mxu0 %v3945
  %4082 = vmatmul.mubr.f32.gmra.mrb[0].mxu0 %v3886
  %v4083 = vpop.f32.mrb[0].mxu0
  %v4084 = vadd.f32 %v4014, %v4083
  %v4085 = vpop.f32.mrb[0].mxu0
  %4086 = vdwg.mxu0
  %vm4087 = vcmask 39936
  %4088 = vst.msk [vmem:[#allocation8] sm:$0xff] %vm4087, 0.0
  %4090 = vrot.lane.b32.xlu0 %v4084, 5
  %v4091 = vpop.permute.xlu0 %4090
  %vm4093 = vcmask 957480
  %4094 = vst.msk [vmem:[#allocation8] sm:$0xff] %vm4093, %v4091
  %vm4095 = vcmask 999336
  %4096 = vst.msk [vmem:[#allocation8] sm:$0xff] %vm4095, 0.0
  %v4097 = vld [vmem:[#allocation8] sm:$0xff]
  %v4098 = vld [vmem:[%s12] sm:$0x1]
  %v4099 = vlaneseq
  %v4100 = vshrl.u32 %v4099, 7
  %v4101 = vsub.s32 0, %v4100
  %v4102 = vrot.slane %v4098, %v4101
  %v4103 = vmul.f32 %v4097, %v4102
  %4104 = vst.msk [vmem:[#allocation9] sm:$0xff] %vm936, %v4103
  %v4105 = vld [vmem:[#allocation8] sm:$0xff]
  %v4106 = vld [vmem:[%s12 + $0x1] sm:$0x1]
  %v4107 = vlaneseq
  %v4108 = vshrl.u32 %v4107, 7
  %v4109 = vsub.s32 0, %v4108
  %v4110 = vrot.slane %v4106, %v4109
  %4112 = vrot.lane.b32.xlu0 %v4110, 1
  %v4113 = vpop.permute.xlu0 %4112
  %v4115 = vmul.f32 %v4105, %v4113
  %4117 = vrot.lane.b32.xlu0 %v4115, 127
  %v4118 = vpop.permute.xlu0 %4117
  %4120 = vst.msk [vmem:[#allocation9 + $0x8] sm:$0xff] %vm936, %v4118
  %v4121 = vld [vmem:[#allocation8] sm:$0xff]
  %v4122 = vld [vmem:[%s12 + $0x2] sm:$0x1]
  %v4123 = vlaneseq
  %v4124 = vshrl.u32 %v4123, 7
  %v4125 = vsub.s32 0, %v4124
  %v4126 = vrot.slane %v4122, %v4125
  %4128 = vrot.lane.b32.xlu0 %v4126, 2
  %v4129 = vpop.permute.xlu0 %4128
  %v4131 = vmul.f32 %v4121, %v4129
  %4133 = vrot.lane.b32.xlu0 %v4131, 126
  %v4134 = vpop.permute.xlu0 %4133
  %4136 = vst.msk [vmem:[#allocation9 + $0x10] sm:$0xff] %vm936, %v4134
  %v4137 = vld [vmem:[#allocation8] sm:$0xff]
  %v4138 = vld [vmem:[%s12 + $0x3] sm:$0x1]
  %v4139 = vlaneseq
  %v4140 = vshrl.u32 %v4139, 7
  %v4141 = vsub.s32 0, %v4140
  %v4142 = vrot.slane %v4138, %v4141
  %4144 = vrot.lane.b32.xlu0 %v4142, 4
  %v4145 = vpop.permute.xlu0 %4144
  %v4147 = vmul.f32 %v4137, %v4145
  %4149 = vrot.lane.b32.xlu0 %v4147, 124
  %v4150 = vpop.permute.xlu0 %4149
  %4152 = vst.msk [vmem:[#allocation9 + $0x18] sm:$0xff] %vm936, %v4150
  %4153 = vst.msk [vmem:[#allocation9 + $0x20] sm:$0xff] %vm936, %v4084
  %v4154 = vld [vmem:[#allocation8] sm:$0xff]
  %v4155 = vld [vmem:[%s12 + $0x5] sm:$0x1]
  %v4156 = vlaneseq
  %v4157 = vshrl.u32 %v4156, 7
  %v4158 = vsub.s32 0, %v4157
  %v4159 = vrot.slane %v4155, %v4158
  %4161 = vrot.lane.b32.xlu0 %v4159, 6
  %v4162 = vpop.permute.xlu0 %4161
  %v4164 = vmul.f32 %v4154, %v4162
  %4166 = vrot.lane.b32.xlu0 %v4164, 122
  %v4167 = vpop.permute.xlu0 %4166
  %4169 = vst.msk [vmem:[#allocation9 + $0x28] sm:$0xff] %vm936, %v4167
  %v4170 = vld [vmem:[#allocation8] sm:$0xff]
  %v4171 = vld [vmem:[%s12 + $0x6] sm:$0x1]
  %v4172 = vlaneseq
  %v4173 = vshrl.u32 %v4172, 7
  %v4174 = vsub.s32 0, %v4173
  %v4175 = vrot.slane %v4171, %v4174
  %4177 = vrot.lane.b32.xlu0 %v4175, 8
  %v4178 = vpop.permute.xlu0 %4177
  %v4180 = vmul.f32 %v4170, %v4178
  %4182 = vrot.lane.b32.xlu0 %v4180, 120
  %v4183 = vpop.permute.xlu0 %4182
  %4185 = vst.msk [vmem:[#allocation9 + $0x30] sm:$0xff] %vm936, %v4183
  %v4186 = vld [vmem:[#allocation8] sm:$0xff]
  %v4187 = vld [vmem:[%s12 + $0x7] sm:$0x1]
  %v4188 = vlaneseq
  %v4189 = vshrl.u32 %v4188, 7
  %v4190 = vsub.s32 0, %v4189
  %v4191 = vrot.slane %v4187, %v4190
  %4193 = vrot.lane.b32.xlu0 %v4191, 9
  %v4194 = vpop.permute.xlu0 %4193
  %v4196 = vmul.f32 %v4186, %v4194
  %4198 = vrot.lane.b32.xlu0 %v4196, 119
  %v4199 = vpop.permute.xlu0 %4198
  %4201 = vst.msk [vmem:[#allocation9 + $0x38] sm:$0xff] %vm936, %v4199
  %v4202 = vld [vmem:[#allocation8] sm:$0xff]
  %v4203 = vld [vmem:[%s12 + $0x8] sm:$0x1]
  %v4204 = vlaneseq
  %v4205 = vshrl.u32 %v4204, 7
  %v4206 = vsub.s32 0, %v4205
  %v4207 = vrot.slane %v4203, %v4206
  %4209 = vrot.lane.b32.xlu0 %v4207, 10
  %v4210 = vpop.permute.xlu0 %4209
  %v4212 = vmul.f32 %v4202, %v4210
  %4214 = vrot.lane.b32.xlu0 %v4212, 118
  %v4215 = vpop.permute.xlu0 %4214
  %4217 = vst.msk [vmem:[#allocation9 + $0x40] sm:$0xff] %vm936, %v4215
  %v4218 = vld [vmem:[%s3] sm:$0xff]
  %v4219 = vld [vmem:[#allocation9] sm:$0xff]
  %v4220 = vld [vmem:[#allocation9 + $0x8] sm:$0xff]
  %v4221 = vld [vmem:[#allocation9 + $0x10] sm:$0xff]
  %v4222 = vld [vmem:[#allocation9 + $0x18] sm:$0xff]
  %v4223 = vld [vmem:[#allocation9 + $0x20] sm:$0xff]
  %v4224 = vld [vmem:[#allocation9 + $0x28] sm:$0xff]
  %v4225 = vld [vmem:[#allocation9 + $0x30] sm:$0xff]
  %v4226 = vld [vmem:[#allocation9 + $0x38] sm:$0xff]
  %v4227 = vld [vmem:[#allocation9 + $0x40] sm:$0xff]
  %v4229 = vsel %vm3633, %v4218, 0
  %4231 = vmatprep.subr.mxu0 0.0
  %4232 = vmatpush1.msra.mxu0 %v4219
  %4233 = vmatprep.subr.mxu0 0.0
  %4234 = vmatpush1.msra.mxu0 %v4220
  %4235 = vmatprep.subr.mxu0 0.0
  %4236 = vmatpush1.msra.mxu0 %v4221
  %4237 = vmatprep.subr.mxu0 0.0
  %4238 = vmatpush1.msra.mxu0 %v4222
  %4239 = vmatprep.subr.mxu0 0.0
  %4240 = vmatpush1.msra.mxu0 %v4223
  %4241 = vmatprep.subr.mxu0 0.0
  %4242 = vmatpush1.msra.mxu0 %v4224
  %4243 = vmatprep.subr.mxu0 0.0
  %4244 = vmatpush1.msra.mxu0 %v4225
  %4245 = vmatprep.subr.mxu0 0.0
  %4246 = vmatpush1.msra.mxu0 %v4226
  %4247 = vmatprep.subr.mxu0 0.0
  %4248 = vmatpush1.msra.mxu0 %v4227
  %4249 = vmatprep.subr.mxu0 0.0
  %4250 = vmatpush1.msra.mxu0 0.0
  %4251 = vmatprep.subr.mxu0 0.0
  %4252 = vmatpush1.msra.mxu0 0.0
  %4253 = vmatprep.subr.mxu0 0.0
  %4254 = vmatpush1.msra.mxu0 0.0
  %4255 = vmatprep.subr.mxu0 0.0
  %4256 = vmatpush1.msra.mxu0 0.0
  %4257 = vmatprep.subr.mxu0 0.0
  %4258 = vmatpush1.msra.mxu0 0.0
  %4259 = vmatprep.subr.mxu0 0.0
  %4260 = vmatpush1.msra.mxu0 0.0
  %4261 = vmatprep.subr.mxu0 0.0
  %4262 = vmatpush1.msra.mxu0 0.0
  %4263 = vmatprep.subr.mxu0 0.0
  %4264 = vmatpush1.msra.mxu0 0.0
  %4265 = vmatprep.subr.mxu0 0.0
  %4266 = vmatpush1.msra.mxu0 0.0
  %4267 = vmatprep.subr.mxu0 0.0
  %4268 = vmatpush1.msra.mxu0 0.0
  %4269 = vmatprep.subr.mxu0 0.0
  %4270 = vmatpush1.msra.mxu0 0.0
  %4271 = vmatprep.subr.mxu0 0.0
  %4272 = vmatpush1.msra.mxu0 0.0
  %4273 = vmatprep.subr.mxu0 0.0
  %4274 = vmatpush1.msra.mxu0 0.0
  %4275 = vmatprep.subr.mxu0 0.0
  %4276 = vmatpush1.msra.mxu0 0.0
  %4277 = vmatprep.subr.mxu0 0.0
  %4278 = vmatpush1.msra.mxu0 0.0
  %4279 = vmatprep.subr.mxu0 0.0
  %4280 = vmatpush1.msra.mxu0 0.0
  %4281 = vmatprep.subr.mxu0 0.0
  %4282 = vmatpush1.msra.mxu0 0.0
  %4283 = vmatprep.subr.mxu0 0.0
  %4284 = vmatpush1.msra.mxu0 0.0
  %4285 = vmatprep.subr.mxu0 0.0
  %4286 = vmatpush1.msra.mxu0 0.0
  %4287 = vmatprep.subr.mxu0 0.0
  %4288 = vmatpush1.msra.mxu0 0.0
  %4289 = vmatprep.subr.mxu0 0.0
  %4290 = vmatpush1.msra.mxu0 0.0
  %4291 = vmatprep.subr.mxu0 0.0
  %4292 = vmatpush1.msra.mxu0 0.0
  %4293 = vmatprep.subr.mxu0 0.0
  %4294 = vmatpush1.msra.mxu0 0.0
  %4295 = vmatprep.mubr.f32.mxu0 0.0
  %4296 = vmatmul.mubr.f32.gmra.mrb[0].mxu0 %v4229
  %v4297 = vpop.f32.mrb[0].mxu0
  %v4298 = vadd.f32 0.0, %v4297
  %v4299 = vpop.f32.mrb[0].mxu0
  %4300 = vdwg.mxu0
  %v4301 = vsel %vm936, %v4298, 0.0
  %4302 = vadd.xlane.f32.xlu0 %v4301
  %v4303 = vpop.xlane.xlu0 %4302
  %v4304 = vmul.f32 %v4303, 0.008928572
  %v4305 = vsub.f32 %v4298, %v4304
  %v4306 = vmul.f32 %v4305, %v4305
  %v4307 = vsel %vm936, %v4306, 0.0
  %4308 = vadd.xlane.f32.xlu0 %v4307
  %v4309 = vpop.xlane.xlu0 %4308
  %v4310 = vmul.f32 %v4309, 0.008928572
  %v4311 = vld [vmem:[%s6] sm:$0xff]
  %v4312 = vadd.f32 %v4310, 1e-05
  %v4313 = vrsqrt.pop %v4312
  %v4314 = vmul.f32 %v4311, %v4313
  %4316 = vset.pattern.permute.xlu0 0
  %4317 = vperm.xlu0 %4316, %v4314
  %v4318 = vpop.permute.xlu0 %4317
  %v4320 = vmul.f32 %v4305, %v4318
  %v4321 = vld [vmem:[%s9] sm:$0xff]
  %4323 = vset.pattern.permute.xlu0 0
  %4324 = vperm.xlu0 %4323, %v4321
  %v4325 = vpop.permute.xlu0 %4324
  %v4327 = vadd.f32 %v4320, %v4325
  %v4328 = vmax.f32 %v4327, 0.0
  %4329 = vst.msk [vmem:[#allocation10] sm:$0xff] %vm936, %v4328
  %vm4330 = vcmask 958336
  %4331 = vst.msk [vmem:[#allocation10] sm:$0xff] %vm4330, 0.0
  %v4332 = vld [vmem:[#allocation10] sm:$0xff]
  %4334 = vrot.lane.b32.xlu0 %v4332, 127
  %v4335 = vpop.permute.xlu0 %4334
  %v4337 = vmax.f32 %v4328, %v4335
  %v4338 = vmax.f32 %v4332, %v4335
  %4340 = vrot.lane.b32.xlu0 %v4338, 124
  %v4341 = vpop.permute.xlu0 %4340
  %v4343 = vmax.f32 %v4337, %v4341
  %v4344 = vld [vmem:[%s15] sm:$0xff]
  %v4345 = vld [vmem:[%s15 + $0x8] sm:$0xff]
  %v4346 = vld [vmem:[%s15 + $0x10] sm:$0xff]
  %v4347 = vld [vmem:[%s15 + $0x18] sm:$0xff]
  %v4348 = vld [vmem:[%s15 + $0x20] sm:$0xff]
  %v4349 = vld [vmem:[%s15 + $0x28] sm:$0xff]
  %v4350 = vld [vmem:[%s15 + $0x30] sm:$0xff]
  %v4351 = vld [vmem:[%s15 + $0x38] sm:$0xff]
  %v4352 = vld [vmem:[%s15 + $0x40] sm:$0xff]
  %v4353 = vld [vmem:[%s15 + $0x48] sm:$0xff]
  %v4354 = vld [vmem:[%s15 + $0x50] sm:$0xff]
  %v4355 = vld [vmem:[%s15 + $0x58] sm:$0xff]
  %v4356 = vld [vmem:[%s15 + $0x60] sm:$0xff]
  %v4357 = vld [vmem:[%s15 + $0x68] sm:$0xff]
  %v4359 = vsel %vm936, %v4343, 0
  %4361 = vmatprep.subr.mxu0 0.0
  %4362 = vmatpush1.msra.mxu0 %v4344
  %4363 = vmatprep.subr.mxu0 0.0
  %4364 = vmatpush1.msra.mxu0 %v4345
  %4365 = vmatprep.subr.mxu0 0.0
  %4366 = vmatpush1.msra.mxu0 %v4346
  %4367 = vmatprep.subr.mxu0 0.0
  %4368 = vmatpush1.msra.mxu0 %v4347
  %4369 = vmatprep.subr.mxu0 0.0
  %4370 = vmatpush1.msra.mxu0 %v4348
  %4371 = vmatprep.subr.mxu0 0.0
  %4372 = vmatpush1.msra.mxu0 %v4349
  %4373 = vmatprep.subr.mxu0 0.0
  %4374 = vmatpush1.msra.mxu0 %v4350
  %4375 = vmatprep.subr.mxu0 0.0
  %4376 = vmatpush1.msra.mxu0 %v4351
  %4377 = vmatprep.subr.mxu0 0.0
  %4378 = vmatpush1.msra.mxu0 %v4352
  %4379 = vmatprep.subr.mxu0 0.0
  %4380 = vmatpush1.msra.mxu0 %v4353
  %4381 = vmatprep.subr.mxu0 0.0
  %4382 = vmatpush1.msra.mxu0 %v4354
  %4383 = vmatprep.subr.mxu0 0.0
  %4384 = vmatpush1.msra.mxu0 %v4355
  %4385 = vmatprep.subr.mxu0 0.0
  %4386 = vmatpush1.msra.mxu0 %v4356
  %4387 = vmatprep.subr.mxu0 0.0
  %4388 = vmatpush1.msra.mxu0 %v4357
  %4389 = vmatprep.subr.mxu0 0.0
  %4390 = vmatpush1.msra.mxu0 0.0
  %4391 = vmatprep.subr.mxu0 0.0
  %4392 = vmatpush1.msra.mxu0 0.0
  %4393 = vmatprep.subr.mxu0 0.0
  %4394 = vmatpush1.msra.mxu0 0.0
  %4395 = vmatprep.subr.mxu0 0.0
  %4396 = vmatpush1.msra.mxu0 0.0
  %4397 = vmatprep.subr.mxu0 0.0
  %4398 = vmatpush1.msra.mxu0 0.0
  %4399 = vmatprep.subr.mxu0 0.0
  %4400 = vmatpush1.msra.mxu0 0.0
  %4401 = vmatprep.subr.mxu0 0.0
  %4402 = vmatpush1.msra.mxu0 0.0
  %4403 = vmatprep.subr.mxu0 0.0
  %4404 = vmatpush1.msra.mxu0 0.0
  %4405 = vmatprep.subr.mxu0 0.0
  %4406 = vmatpush1.msra.mxu0 0.0
  %4407 = vmatprep.subr.mxu0 0.0
  %4408 = vmatpush1.msra.mxu0 0.0
  %4409 = vmatprep.subr.mxu0 0.0
  %4410 = vmatpush1.msra.mxu0 0.0
  %4411 = vmatprep.subr.mxu0 0.0
  %4412 = vmatpush1.msra.mxu0 0.0
  %4413 = vmatprep.subr.mxu0 0.0
  %4414 = vmatpush1.msra.mxu0 0.0
  %4415 = vmatprep.subr.mxu0 0.0
  %4416 = vmatpush1.msra.mxu0 0.0
  %4417 = vmatprep.subr.mxu0 0.0
  %4418 = vmatpush1.msra.mxu0 0.0
  %4419 = vmatprep.subr.mxu0 0.0
  %4420 = vmatpush1.msra.mxu0 0.0
  %4421 = vmatprep.subr.mxu0 0.0
  %4422 = vmatpush1.msra.mxu0 0.0
  %4423 = vmatprep.subr.mxu0 0.0
  %4424 = vmatpush1.msra.mxu0 0.0
  %4425 = vmatprep.mubr.f32.mxu0 0.0
  %4426 = vmatmul.mubr.f32.gmra.mrb[0].mxu0 %v4359
  %v4427 = vpop.f32.mrb[0].mxu0
  %v4428 = vadd.f32 0.0, %v4427
  %v4429 = vpop.f32.mrb[0].mxu0
  %4430 = vdwg.mxu0
  %v4431 = vld [vmem:[%s16] sm:$0xff]
  %v4432 = vld [vmem:[%s16 + $0x8] sm:$0xff]
  %v4433 = vld [vmem:[%s16 + $0x10] sm:$0xff]
  %v4434 = vld [vmem:[%s16 + $0x18] sm:$0xf]
  %vm4435 = vcmask 228352
  %v4437 = vsel %vm4435, %v4428, 0
  %v4440 = vsel %vm98, %v4434, 0
  %4442 = vmatprep.subr.mxu0 0.0
  %4443 = vmatpush1.msra.mxu0 %v4431
  %4444 = vmatprep.subr.mxu0 0.0
  %4445 = vmatpush1.msra.mxu0 %v4432
  %4446 = vmatprep.subr.mxu0 0.0
  %4447 = vmatpush1.msra.mxu0 %v4433
  %4448 = vmatprep.subr.mxu0 0.0
  %4449 = vmatpush1.msra.mxu0 %v4440
  %4450 = vmatprep.subr.mxu0 0.0
  %4451 = vmatpush1.msra.mxu0 0.0
  %4452 = vmatprep.subr.mxu0 0.0
  %4453 = vmatpush1.msra.mxu0 0.0
  %4454 = vmatprep.subr.mxu0 0.0
  %4455 = vmatpush1.msra.mxu0 0.0
  %4456 = vmatprep.subr.mxu0 0.0
  %4457 = vmatpush1.msra.mxu0 0.0
  %4458 = vmatprep.subr.mxu0 0.0
  %4459 = vmatpush1.msra.mxu0 0.0
  %4460 = vmatprep.subr.mxu0 0.0
  %4461 = vmatpush1.msra.mxu0 0.0
  %4462 = vmatprep.subr.mxu0 0.0
  %4463 = vmatpush1.msra.mxu0 0.0
  %4464 = vmatprep.subr.mxu0 0.0
  %4465 = vmatpush1.msra.mxu0 0.0
  %4466 = vmatprep.subr.mxu0 0.0
  %4467 = vmatpush1.msra.mxu0 0.0
  %4468 = vmatprep.subr.mxu0 0.0
  %4469 = vmatpush1.msra.mxu0 0.0
  %4470 = vmatprep.subr.mxu0 0.0
  %4471 = vmatpush1.msra.mxu0 0.0
  %4472 = vmatprep.subr.mxu0 0.0
  %4473 = vmatpush1.msra.mxu0 0.0
  %4474 = vmatprep.subr.mxu0 0.0
  %4475 = vmatpush1.msra.mxu0 0.0
  %4476 = vmatprep.subr.mxu0 0.0
  %4477 = vmatpush1.msra.mxu0 0.0
  %4478 = vmatprep.subr.mxu0 0.0
  %4479 = vmatpush1.msra.mxu0 0.0
  %4480 = vmatprep.subr.mxu0 0.0
  %4481 = vmatpush1.msra.mxu0 0.0
  %4482 = vmatprep.subr.mxu0 0.0
  %4483 = vmatpush1.msra.mxu0 0.0
  %4484 = vmatprep.subr.mxu0 0.0
  %4485 = vmatpush1.msra.mxu0 0.0
  %4486 = vmatprep.subr.mxu0 0.0
  %4487 = vmatpush1.msra.mxu0 0.0
  %4488 = vmatprep.subr.mxu0 0.0
  %4489 = vmatpush1.msra.mxu0 0.0
  %4490 = vmatprep.subr.mxu0 0.0
  %4491 = vmatpush1.msra.mxu0 0.0
  %4492 = vmatprep.subr.mxu0 0.0
  %4493 = vmatpush1.msra.mxu0 0.0
  %4494 = vmatprep.subr.mxu0 0.0
  %4495 = vmatpush1.msra.mxu0 0.0
  %4496 = vmatprep.subr.mxu0 0.0
  %4497 = vmatpush1.msra.mxu0 0.0
  %4498 = vmatprep.subr.mxu0 0.0
  %4499 = vmatpush1.msra.mxu0 0.0
  %4500 = vmatprep.subr.mxu0 0.0
  %4501 = vmatpush1.msra.mxu0 0.0
  %4502 = vmatprep.subr.mxu0 0.0
  %4503 = vmatpush1.msra.mxu0 0.0
  %4504 = vmatprep.subr.mxu0 0.0
  %4505 = vmatpush1.msra.mxu0 0.0
  %4506 = vmatprep.mubr.f32.mxu0 0.0
  %4507 = vmatmul.mubr.f32.gmra.mrb[0].mxu0 %v4437
  %v4508 = vpop.f32.mrb[0].mxu0
  %v4509 = vadd.f32 0.0, %v4508
  %v4510 = vpop.f32.mrb[0].mxu0
  %4511 = vdwg.mxu0
  %v4512 = vmul.f32 %v4509, %v4509
  %v4513 = vld [vmem:[%s17] sm:$0xff]
  %v4514 = vld [vmem:[%s17 + $0x8] sm:$0xff]
  %v4515 = vld [vmem:[%s17 + $0x10] sm:$0xff]
  %vm4516 = vcmask 195584
  %v4518 = vsel %vm4516, %v4512, 0
  %4520 = vmatprep.subr.mxu0 0.0
  %4521 = vmatpush1.msra.mxu0 %v4513
  %4522 = vmatprep.subr.mxu0 0.0
  %4523 = vmatpush1.msra.mxu0 %v4514
  %4524 = vmatprep.subr.mxu0 0.0
  %4525 = vmatpush1.msra.mxu0 %v4515
  %4526 = vmatprep.subr.mxu0 0.0
  %4527 = vmatpush1.msra.mxu0 0.0
  %4528 = vmatprep.subr.mxu0 0.0
  %4529 = vmatpush1.msra.mxu0 0.0
  %4530 = vmatprep.subr.mxu0 0.0
  %4531 = vmatpush1.msra.mxu0 0.0
  %4532 = vmatprep.subr.mxu0 0.0
  %4533 = vmatpush1.msra.mxu0 0.0
  %4534 = vmatprep.subr.mxu0 0.0
  %4535 = vmatpush1.msra.mxu0 0.0
  %4536 = vmatprep.subr.mxu0 0.0
  %4537 = vmatpush1.msra.mxu0 0.0
  %4538 = vmatprep.subr.mxu0 0.0
  %4539 = vmatpush1.msra.mxu0 0.0
  %4540 = vmatprep.subr.mxu0 0.0
  %4541 = vmatpush1.msra.mxu0 0.0
  %4542 = vmatprep.subr.mxu0 0.0
  %4543 = vmatpush1.msra.mxu0 0.0
  %4544 = vmatprep.subr.mxu0 0.0
  %4545 = vmatpush1.msra.mxu0 0.0
  %4546 = vmatprep.subr.mxu0 0.0
  %4547 = vmatpush1.msra.mxu0 0.0
  %4548 = vmatprep.subr.mxu0 0.0
  %4549 = vmatpush1.msra.mxu0 0.0
  %4550 = vmatprep.subr.mxu0 0.0
  %4551 = vmatpush1.msra.mxu0 0.0
  %4552 = vmatprep.subr.mxu0 0.0
  %4553 = vmatpush1.msra.mxu0 0.0
  %4554 = vmatprep.subr.mxu0 0.0
  %4555 = vmatpush1.msra.mxu0 0.0
  %4556 = vmatprep.subr.mxu0 0.0
  %4557 = vmatpush1.msra.mxu0 0.0
  %4558 = vmatprep.subr.mxu0 0.0
  %4559 = vmatpush1.msra.mxu0 0.0
  %4560 = vmatprep.subr.mxu0 0.0
  %4561 = vmatpush1.msra.mxu0 0.0
  %4562 = vmatprep.subr.mxu0 0.0
  %4563 = vmatpush1.msra.mxu0 0.0
  %4564 = vmatprep.subr.mxu0 0.0
  %4565 = vmatpush1.msra.mxu0 0.0
  %4566 = vmatprep.subr.mxu0 0.0
  %4567 = vmatpush1.msra.mxu0 0.0
  %4568 = vmatprep.subr.mxu0 0.0
  %4569 = vmatpush1.msra.mxu0 0.0
  %4570 = vmatprep.subr.mxu0 0.0
  %4571 = vmatpush1.msra.mxu0 0.0
  %4572 = vmatprep.subr.mxu0 0.0
  %4573 = vmatpush1.msra.mxu0 0.0
  %4574 = vmatprep.subr.mxu0 0.0
  %4575 = vmatpush1.msra.mxu0 0.0
  %4576 = vmatprep.subr.mxu0 0.0
  %4577 = vmatpush1.msra.mxu0 0.0
  %4578 = vmatprep.subr.mxu0 0.0
  %4579 = vmatpush1.msra.mxu0 0.0
  %4580 = vmatprep.subr.mxu0 0.0
  %4581 = vmatpush1.msra.mxu0 0.0
  %4582 = vmatprep.subr.mxu0 0.0
  %4583 = vmatpush1.msra.mxu0 0.0
  %4584 = vmatprep.mubr.f32.mxu0 0.0
  %4585 = vmatmul.mubr.f32.gmra.mrb[0].mxu0 %v4518
  %v4586 = vpop.f32.mrb[0].mxu0
  %v4587 = vadd.f32 0.0, %v4586
  %v4588 = vpop.f32.mrb[0].mxu0
  %4589 = vdwg.mxu0
  %vm4590 = vcmask 48128
  %v4591 = vsel %vm4590, %v4587, 0.0
  %v4592 = vrot.slane %v4591, 4
  %v4593 = vadd.f32 %v4591, %v4592
  %v4594 = vrot.slane %v4593, 2
  %v4595 = vadd.f32 %v4593, %v4594
  %v4596 = vrot.slane %v4595, 1
  %v4597 = vadd.f32 %v4595, %v4596
  %v4598 = vrsqrt.pop %v4597
  %v4599 = vmul.f32 %v4597, %v4598
  %vm4600 = vcmp.eq.f32.partialorder %v4597, inf
  %v4601 = vsel %vm4600, %v4597, %v4599
  %vm4602 = vcmp.eq.f32.partialorder %v4597, 0.0
  %v4603 = vand.u32 %v4597, 2147483648
  %v4604 = vsel %vm4602, %v4603, %v4601
  %vm4605 = vcmask 40960
  %4606 = vst.msk [vmem:[%s18] sm:$0x1] %vm4605, %v4604
  // Predicated region
  $region74: #{prototypical_forward.1} parent=0 // pred_check
    _
  $region75: #{prototypical_forward.1} parent=0 // pred_check_branch
    %4608 = sbr.rel (0) target = $region77
  $region76: #{prototypical_forward.1} parent=0 // pred_region
    _
  $region77: #{prototypical_forward.1} parent=0 // pred_fallthru
    _
  // Predicated region
  $region78: #{prototypical_forward.1} parent=0 // pred_check
    _
  $region79: #{prototypical_forward.1} parent=0 // pred_check_branch
    %4610 = sbr.rel (0) target = $region81
  $region80: #{prototypical_forward.1} parent=0 // pred_region
    _
  $region81: #{prototypical_forward.1} parent=0 // pred_fallthru
    _

</llo_original>
